<compile_context>
chip_gen: v7x
topology: tpu7x:2x2x1
jax: 0.10.0
libtpu: 0.0.40
codegen_flags: <defaults>
</compile_context>

<pallas_src>
import functools

import jax
import jax.numpy as jnp
from jax import lax
from jax.experimental import pallas as pl
from jax.experimental.pallas import tpu as pltpu


# ----------------------------- small helpers -----------------------------

@functools.lru_cache(maxsize=None)
def _vmem_limit():
    """Generation-aware scoped-VMEM limit (leave headroom below physical capacity)."""
    try:
        cap = int(pltpu.get_tpu_info().vmem_capacity_bytes)
        return max(32 * 2**20, min(cap - 16 * 2**20, 100 * 2**20))
    except Exception:
        return 64 * 2**20


def _compiler_params(dim_sem):
    return pltpu.CompilerParams(
        dimension_semantics=dim_sem,
        vmem_limit_bytes=_vmem_limit(),
    )


def _pick_tile(m, max_tile=512):
    """Largest sublane-aligned tile (<= max_tile) that divides m; else full extent."""
    for t in (512, 256, 128, 64, 32, 16, 8):
        if t <= max_tile and t <= m and m % t == 0:
            return t
    return m


def _pick_f_tile(f, max_tile=2048):
    """F (hidden) tile for the FFN reduction axis: multiple of 128 or full extent."""
    if f <= max_tile:
        return f
    for t in (2048, 1024, 512, 256, 128):
        if t <= max_tile and f % t == 0:
            return t
    return f


# -------------------- fused attention sub-layer (one kernel) --------------------
#   out = LayerNorm( x_q + (softmax(mask(Q K^T / sqrt(dk))) V) W_o + b_o )
#   with Q = x_q Wq + bq ; K/V = x_kv Wk/Wv + bk/bv   (all projections in-kernel)

def _attn_body(xq_ref, kv_ref, mask_ref, wq_ref, bq_ref, wk_ref, bk_ref,
               wv_ref, bv_ref, wo_ref, bo_ref, g_ref, bt_ref, o_ref, n_heads):
    xq = xq_ref[0]                       # (tq, D) f32 — query rows, also the residual
    kv = kv_ref[0]                       # (Tk, D) f32 — K/V source (x or encoder out)
    tq, D = xq.shape
    dk = D // n_heads
    scale = 1.0 / float(dk) ** 0.5

    xq_b = xq.astype(jnp.bfloat16)       # bf16 MXU inputs, f32 accumulation
    kv_b = kv.astype(jnp.bfloat16)

    q = jnp.dot(xq_b, wq_ref[...], preferred_element_type=jnp.float32) + bq_ref[...]
    k = jnp.dot(kv_b, wk_ref[...], preferred_element_type=jnp.float32) + bk_ref[...]
    v = jnp.dot(kv_b, wv_ref[...], preferred_element_type=jnp.float32) + bv_ref[...]

    q_b = (q * scale).astype(jnp.bfloat16)   # pre-scale q once
    k_b = k.astype(jnp.bfloat16)
    v_b = v.astype(jnp.bfloat16)
    wo = wo_ref[...]                     # (D, D) bf16

    if mask_ref is not None:
        # hoisted out of the head loop; 0 -> masked (additive -1e9 bias)
        bias = jnp.where(mask_ref[0] == 0, jnp.float32(-1e9), jnp.float32(0.0))
    else:
        bias = None

    # accumulate each head's contribution through its W_o slice -> lane-dense (tq, D)
    acc = jnp.zeros((tq, D), jnp.float32)
    for h in range(n_heads):             # short static loop over heads
        lo = h * dk
        # contract last axes: MXU consumes K untransposed (no in-kernel transpose)
        s = lax.dot_general(q_b[:, lo:lo + dk], k_b[:, lo:lo + dk],
                            (((1,), (1,)), ((), ())),
                            preferred_element_type=jnp.float32)      # (tq, Tk) f32
        if bias is not None:
            s = s + bias
        s = s - jnp.max(s, axis=-1, keepdims=True)
        p = jnp.exp(s)
        inv = pl.reciprocal(jnp.sum(p, axis=-1, keepdims=True), approx=False)
        pv = jnp.dot(p.astype(jnp.bfloat16), v_b[:, lo:lo + dk],
                     preferred_element_type=jnp.float32) * inv       # (tq, dk)
        acc = acc + jnp.dot(pv.astype(jnp.bfloat16), wo[lo:lo + dk, :],
                            preferred_element_type=jnp.float32)      # (tq, D)

    # residual add + LayerNorm, all in f32
    y = xq + acc + bo_ref[...]
    mean = jnp.mean(y, axis=-1, keepdims=True)
    var = jnp.mean((y - mean) ** 2, axis=-1, keepdims=True)
    norm = (y - mean) * lax.rsqrt(var + 1e-5)
    o_ref[0] = (norm * g_ref[...] + bt_ref[...]).astype(o_ref.dtype)


def _attn_mask_kernel(xq_ref, kv_ref, m_ref, wq_ref, bq_ref, wk_ref, bk_ref,
                      wv_ref, bv_ref, wo_ref, bo_ref, g_ref, bt_ref, o_ref, *,
                      n_heads):
    _attn_body(xq_ref, kv_ref, m_ref, wq_ref, bq_ref, wk_ref, bk_ref,
               wv_ref, bv_ref, wo_ref, bo_ref, g_ref, bt_ref, o_ref, n_heads)


def _attn_nomask_kernel(xq_ref, kv_ref, wq_ref, bq_ref, wk_ref, bk_ref,
                        wv_ref, bv_ref, wo_ref, bo_ref, g_ref, bt_ref, o_ref, *,
                        n_heads):
    _attn_body(xq_ref, kv_ref, None, wq_ref, bq_ref, wk_ref, bk_ref,
               wv_ref, bv_ref, wo_ref, bo_ref, g_ref, bt_ref, o_ref, n_heads)


def fused_attention_block(x, kv_src, mask, ap, gamma, beta, n_heads):
    """x: (B, Tq, D) queries+residual; kv_src: (B, Tk, D); mask: (B, Tq, Tk) or None.
    Computes the full (multi-head attention -> add -> LayerNorm) sub-layer."""
    B, Tq, D = x.shape
    Tk = kv_src.shape[1]
    tq = _pick_tile(Tq, max_tile=256)
    grid = (B, Tq // tq)

    def wspec(shape):
        # weight/bias/LN params: constant block index -> stay VMEM-resident
        return pl.BlockSpec(shape, lambda b, qi: (0, 0))

    in_specs = [
        pl.BlockSpec((1, tq, D), lambda b, qi: (b, qi, 0)),   # q rows + residual
        pl.BlockSpec((1, Tk, D), lambda b, qi: (b, 0, 0)),    # K/V source (whole)
    ]
    args = [x, kv_src]
    if mask is not None:
        in_specs.append(pl.BlockSpec((1, tq, Tk), lambda b, qi: (b, qi, 0)))
        args.append(mask)
        kernel = functools.partial(_attn_mask_kernel, n_heads=n_heads)
    else:
        kernel = functools.partial(_attn_nomask_kernel, n_heads=n_heads)

    in_specs += [
        wspec((D, D)), wspec((1, D)),     # wq, bq
        wspec((D, D)), wspec((1, D)),     # wk, bk
        wspec((D, D)), wspec((1, D)),     # wv, bv
        wspec((D, D)), wspec((1, D)),     # wo, bo
        wspec((1, D)), wspec((1, D)),     # gamma, beta
    ]
    args += [
        ap["wq"].astype(jnp.bfloat16), ap["bq"].reshape(1, D),
        ap["wk"].astype(jnp.bfloat16), ap["bk"].reshape(1, D),
        ap["wv"].astype(jnp.bfloat16), ap["bv"].reshape(1, D),
        ap["wo"].astype(jnp.bfloat16), ap["bo"].reshape(1, D),
        gamma.reshape(1, D), beta.reshape(1, D),
    ]

    return pl.pallas_call(
        kernel,
        out_shape=jax.ShapeDtypeStruct((B, Tq, D), x.dtype),
        grid=grid,
        in_specs=in_specs,
        out_specs=pl.BlockSpec((1, tq, D), lambda b, qi: (b, qi, 0)),
        compiler_params=_compiler_params(("parallel", "parallel")),
    )(*args)


# ------------------- Fused FFN + residual-add + LayerNorm -------------------
# grid = (M_tiles, F_tiles): F is the reduction axis of the 2nd matmul; the
# f32 accumulator lives in scratch so neither (D,F) nor (F,D) has to be fully
# VMEM-resident at production sizes.

def _ffn_add_ln_kernel(x_ref, w1_ref, b1_ref, w2_ref, b2_ref, g_ref, bt_ref,
                       o_ref, acc_ref):
    f = pl.program_id(1)

    @pl.when(f == 0)
    def _():
        acc_ref[...] = jnp.zeros_like(acc_ref)

    x = x_ref[...]                                               # (tm, D) f32
    h = jnp.dot(x.astype(jnp.bfloat16), w1_ref[...],
                preferred_element_type=jnp.float32)              # (tm, tf)
    h = jnp.maximum(h + b1_ref[...], 0.0)
    acc_ref[...] += jnp.dot(h.astype(jnp.bfloat16), w2_ref[...],
                            preferred_element_type=jnp.float32)  # (tm, D)

    @pl.when(f == pl.num_programs(1) - 1)
    def _():
        y = x + acc_ref[...] + b2_ref[...]
        mean = jnp.mean(y, axis=-1, keepdims=True)
        var = jnp.mean((y - mean) ** 2, axis=-1, keepdims=True)
        norm = (y - mean) * lax.rsqrt(var + 1e-5)
        o_ref[...] = (norm * g_ref[...] + bt_ref[...]).astype(o_ref.dtype)


def ffn_add_layernorm(x, w1, b1, w2, b2, gamma, beta):
    orig_shape = x.shape
    D = orig_shape[-1]
    F = w1.shape[1]
    x2 = x.reshape(-1, D)
    M = x2.shape[0]
    tm = _pick_tile(M, max_tile=512)
    tf = _pick_f_tile(F)
    out = pl.pallas_call(
        _ffn_add_ln_kernel,
        out_shape=jax.ShapeDtypeStruct((M, D), x.dtype),
        grid=(M // tm, F // tf),
        in_specs=[
            pl.BlockSpec((tm, D), lambda i, f: (i, 0)),   # x (resident across f)
            pl.BlockSpec((D, tf), lambda i, f: (0, f)),   # w1 tile
            pl.BlockSpec((1, tf), lambda i, f: (0, f)),   # b1 tile
            pl.BlockSpec((tf, D), lambda i, f: (f, 0)),   # w2 tile
            pl.BlockSpec((1, D), lambda i, f: (0, 0)),    # b2
            pl.BlockSpec((1, D), lambda i, f: (0, 0)),    # gamma
            pl.BlockSpec((1, D), lambda i, f: (0, 0)),    # beta
        ],
        out_specs=pl.BlockSpec((tm, D), lambda i, f: (i, 0)),
        scratch_shapes=[pltpu.VMEM((tm, D), jnp.float32)],
        compiler_params=_compiler_params(("parallel", "arbitrary")),
    )(x2, w1.astype(jnp.bfloat16), b1.reshape(1, F), w2.astype(jnp.bfloat16),
      b2.reshape(1, D), gamma.reshape(1, D), beta.reshape(1, D))
    return out.reshape(orig_shape)


# -------------------------- Decoder (glue in JAX) --------------------------

def decoder_layer_forward(x, encoder_output, src_mask, tgt_mask, p, n_heads):
    # self-attention sub-layer (fully fused: QKV proj + attn + out proj + add + LN)
    x = fused_attention_block(x, x, tgt_mask, p["self_attn"],
                              p["ln1_g"], p["ln1_b"], n_heads)
    # cross-attention sub-layer (Q from x, K/V from encoder output, fully fused)
    x = fused_attention_block(x, encoder_output, src_mask, p["cross_attn"],
                              p["ln2_g"], p["ln2_b"], n_heads)
    # position-wise feed-forward fused with residual add + LN
    x = ffn_add_layernorm(x, p["ffn_w1"], p["ffn_b1"], p["ffn_w2"], p["ffn_b2"],
                          p["ln3_g"], p["ln3_b"])
    return x


def transformer_decoder_forward(x, encoder_output, src_mask, tgt_mask, params,
                                n_heads):
    # Per the reference module: mask=None means "no masking is applied".
    for p in params:
        x = decoder_layer_forward(x, encoder_output, src_mask, tgt_mask, p, n_heads)
    return x


# ----------------------------- Param init -----------------------------

def init_attn_params(key, d_model):
    ks = jax.random.split(key, 4)
    lin = lambda k: 0.02 * jax.random.normal(k, (d_model, d_model), jnp.float32)
    z = jnp.zeros((d_model,), jnp.float32)
    return {"wq": lin(ks[0]), "bq": z, "wk": lin(ks[1]), "bk": z,
            "wv": lin(ks[2]), "bv": z, "wo": lin(ks[3]), "bo": z}


def init_layer_params(key, d_model, d_ff):
    k_sa, k_ca, k_f1, k_f2 = jax.random.split(key, 4)
    return {
        "self_attn": init_attn_params(k_sa, d_model),
        "cross_attn": init_attn_params(k_ca, d_model),
        "ffn_w1": 0.02 * jax.random.normal(k_f1, (d_model, d_ff), jnp.float32),
        "ffn_b1": jnp.zeros((d_ff,), jnp.float32),
        "ffn_w2": 0.02 * jax.random.normal(k_f2, (d_ff, d_model), jnp.float32),
        "ffn_b2": jnp.zeros((d_model,), jnp.float32),
        "ln1_g": jnp.ones((d_model,), jnp.float32),
        "ln1_b": jnp.zeros((d_model,), jnp.float32),
        "ln2_g": jnp.ones((d_model,), jnp.float32),
        "ln2_b": jnp.zeros((d_model,), jnp.float32),
        "ln3_g": jnp.ones((d_model,), jnp.float32),
        "ln3_b": jnp.zeros((d_model,), jnp.float32),
    }


# ----------------------------- Main -----------------------------

if __name__ == "__main__":
    B, TGT, SRC = 2, 8, 16
    D_MODEL, N_HEADS, D_FF, N_LAYERS = 32, 4, 64, 2

    root = jax.random.PRNGKey(0)
    k_x, k_enc, k_params = jax.random.split(root, 3)

    x = jax.random.normal(k_x, (B, TGT, D_MODEL), jnp.float32)
    encoder_output = jax.random.normal(k_enc, (B, SRC, D_MODEL), jnp.float32)

    # causal target mask (1 = attend, 0 = masked); src_mask=None -> no masking
    # (an all-ones src_mask is semantically identical, and None skips the mask DMA).
    tgt_mask = jnp.tril(jnp.ones((TGT, TGT), jnp.float32))[None].repeat(B, axis=0)
    src_mask = None

    layer_keys = jax.random.split(k_params, N_LAYERS)
    params = [init_layer_params(k, D_MODEL, D_FF) for k in layer_keys]

    fwd = jax.jit(functools.partial(transformer_decoder_forward, n_heads=N_HEADS))
    out = fwd(x, encoder_output, src_mask, tgt_mask, params)
    out = jax.block_until_ready(out)

    assert out.shape == (B, TGT, D_MODEL), out.shape
    assert jnp.all(jnp.isfinite(out))
    print("KERNEL_OK")
</pallas_src>

<mosaic_0001>
module attributes {stable_mosaic.version = 11 : i64} {
  func.func @_attn_nomask_kernel(%arg0: i32, %arg1: i32, %arg2: memref<1x8x32xf32, #tpu.memory_space<vmem>>, %arg3: memref<1x16x32xf32, #tpu.memory_space<vmem>>, %arg4: memref<32x32xbf16, #tpu.memory_space<vmem>>, %arg5: memref<1x32xf32, #tpu.memory_space<vmem>>, %arg6: memref<32x32xbf16, #tpu.memory_space<vmem>>, %arg7: memref<1x32xf32, #tpu.memory_space<vmem>>, %arg8: memref<32x32xbf16, #tpu.memory_space<vmem>>, %arg9: memref<1x32xf32, #tpu.memory_space<vmem>>, %arg10: memref<32x32xbf16, #tpu.memory_space<vmem>>, %arg11: memref<1x32xf32, #tpu.memory_space<vmem>>, %arg12: memref<1x32xf32, #tpu.memory_space<vmem>>, %arg13: memref<1x32xf32, #tpu.memory_space<vmem>>, %arg14: memref<1x8x32xf32, #tpu.memory_space<vmem>>) attributes {dimension_semantics = [#tpu.dimension_semantics<parallel>, #tpu.dimension_semantics<parallel>], iteration_bounds = array<i64: 2, 1>, scalar_prefetch = 0 : i64, scratch_operands = 0 : i64, tpu.core_type = #tpu.core_type<tc>, window_params = [{transform_indices = @transform_0, window_bounds = array<i64: 1, 8, 32>}, {transform_indices = @transform_1, window_bounds = array<i64: 1, 16, 32>}, {pipeline_mode = #tpu.pipeline_mode<synchronous>, transform_indices = @transform_2, window_bounds = array<i64: 32, 32>}, {pipeline_mode = #tpu.pipeline_mode<synchronous>, transform_indices = @transform_3, window_bounds = array<i64: 1, 32>}, {pipeline_mode = #tpu.pipeline_mode<synchronous>, transform_indices = @transform_4, window_bounds = array<i64: 32, 32>}, {pipeline_mode = #tpu.pipeline_mode<synchronous>, transform_indices = @transform_5, window_bounds = array<i64: 1, 32>}, {pipeline_mode = #tpu.pipeline_mode<synchronous>, transform_indices = @transform_6, window_bounds = array<i64: 32, 32>}, {pipeline_mode = #tpu.pipeline_mode<synchronous>, transform_indices = @transform_7, window_bounds = array<i64: 1, 32>}, {pipeline_mode = #tpu.pipeline_mode<synchronous>, transform_indices = @transform_8, window_bounds = array<i64: 32, 32>}, {pipeline_mode = #tpu.pipeline_mode<synchronous>, transform_indices = @transform_9, window_bounds = array<i64: 1, 32>}, {pipeline_mode = #tpu.pipeline_mode<synchronous>, transform_indices = @transform_10, window_bounds = array<i64: 1, 32>}, {pipeline_mode = #tpu.pipeline_mode<synchronous>, transform_indices = @transform_11, window_bounds = array<i64: 1, 32>}, {transform_indices = @transform_12, window_bounds = array<i64: 1, 8, 32>}]} {
    %c0 = arith.constant 0 : index
    %c0_0 = arith.constant 0 : index
    %c0_1 = arith.constant 0 : index
    %0 = vector.load %arg2[%c0, %c0_0, %c0_1] : memref<1x8x32xf32, #tpu.memory_space<vmem>>, vector<1x8x32xf32>
    %1 = vector.shape_cast %0 : vector<1x8x32xf32> to vector<8x32xf32>
    %c0_2 = arith.constant 0 : index
    %c0_3 = arith.constant 0 : index
    %c0_4 = arith.constant 0 : index
    %2 = vector.load %arg3[%c0_2, %c0_3, %c0_4] : memref<1x16x32xf32, #tpu.memory_space<vmem>>, vector<1x16x32xf32>
    %3 = vector.shape_cast %2 : vector<1x16x32xf32> to vector<16x32xf32>
    %4 = arith.truncf %1 : vector<8x32xf32> to vector<8x32xbf16>
    %5 = arith.truncf %3 : vector<16x32xf32> to vector<16x32xbf16>
    %c0_5 = arith.constant 0 : index
    %c0_6 = arith.constant 0 : index
    %6 = vector.load %arg4[%c0_5, %c0_6] : memref<32x32xbf16, #tpu.memory_space<vmem>>, vector<32x32xbf16>
    %cst = arith.constant dense<0.000000e+00> : vector<8x32xf32>
    %7 = tpu.matmul %4, %6, %cst {dimension_numbers = #tpu.dot_dimension_numbers<[1], [0], [0], [1], [0, 0, 1, 1], [], []>} : vector<8x32xbf16>, vector<32x32xbf16>, vector<8x32xf32> -> vector<8x32xf32>
    %c0_7 = arith.constant 0 : index
    %c0_8 = arith.constant 0 : index
    %8 = vector.load %arg5[%c0_7, %c0_8] : memref<1x32xf32, #tpu.memory_space<vmem>>, vector<1x32xf32>
    %9 = vector.broadcast %8 : vector<1x32xf32> to vector<8x32xf32>
    %10 = arith.addf %7, %9 : vector<8x32xf32>
    %c0_9 = arith.constant 0 : index
    %c0_10 = arith.constant 0 : index
    %11 = vector.load %arg6[%c0_9, %c0_10] : memref<32x32xbf16, #tpu.memory_space<vmem>>, vector<32x32xbf16>
    %cst_11 = arith.constant dense<0.000000e+00> : vector<16x32xf32>
    %12 = tpu.matmul %5, %11, %cst_11 {dimension_numbers = #tpu.dot_dimension_numbers<[1], [0], [0], [1], [0, 0, 1, 1], [], []>} : vector<16x32xbf16>, vector<32x32xbf16>, vector<16x32xf32> -> vector<16x32xf32>
    %c0_12 = arith.constant 0 : index
    %c0_13 = arith.constant 0 : index
    %13 = vector.load %arg7[%c0_12, %c0_13] : memref<1x32xf32, #tpu.memory_space<vmem>>, vector<1x32xf32>
    %14 = vector.broadcast %13 : vector<1x32xf32> to vector<16x32xf32>
    %15 = arith.addf %12, %14 : vector<16x32xf32>
    %c0_14 = arith.constant 0 : index
    %c0_15 = arith.constant 0 : index
    %16 = vector.load %arg8[%c0_14, %c0_15] : memref<32x32xbf16, #tpu.memory_space<vmem>>, vector<32x32xbf16>
    %cst_16 = arith.constant dense<0.000000e+00> : vector<16x32xf32>
    %17 = tpu.matmul %5, %16, %cst_16 {dimension_numbers = #tpu.dot_dimension_numbers<[1], [0], [0], [1], [0, 0, 1, 1], [], []>} : vector<16x32xbf16>, vector<32x32xbf16>, vector<16x32xf32> -> vector<16x32xf32>
    %c0_17 = arith.constant 0 : index
    %c0_18 = arith.constant 0 : index
    %18 = vector.load %arg9[%c0_17, %c0_18] : memref<1x32xf32, #tpu.memory_space<vmem>>, vector<1x32xf32>
    %19 = vector.broadcast %18 : vector<1x32xf32> to vector<16x32xf32>
    %20 = arith.addf %17, %19 : vector<16x32xf32>
    %cst_19 = arith.constant 0.353553385 : f32
    %21 = vector.broadcast %cst_19 : f32 to vector<8x32xf32>
    %22 = arith.mulf %10, %21 : vector<8x32xf32>
    %23 = arith.truncf %22 : vector<8x32xf32> to vector<8x32xbf16>
    %24 = arith.truncf %15 : vector<16x32xf32> to vector<16x32xbf16>
    %25 = arith.truncf %20 : vector<16x32xf32> to vector<16x32xbf16>
    %c0_20 = arith.constant 0 : index
    %c0_21 = arith.constant 0 : index
    %26 = vector.load %arg10[%c0_20, %c0_21] : memref<32x32xbf16, #tpu.memory_space<vmem>>, vector<32x32xbf16>
    %cst_22 = arith.constant 0.000000e+00 : f32
    %27 = vector.broadcast %cst_22 : f32 to vector<8x32xf32>
    %28 = vector.extract_strided_slice %23 {offsets = [0, 0], sizes = [8, 8], strides = [1, 1]} : vector<8x32xbf16> to vector<8x8xbf16>
    %29 = vector.extract_strided_slice %24 {offsets = [0, 0], sizes = [16, 8], strides = [1, 1]} : vector<16x32xbf16> to vector<16x8xbf16>
    %cst_23 = arith.constant dense<0.000000e+00> : vector<8x16xf32>
    %30 = tpu.matmul %28, %29, %cst_23 {dimension_numbers = #tpu.dot_dimension_numbers<[1], [1], [0], [0], [0, 0, 1, 0], [], []>} : vector<8x8xbf16>, vector<16x8xbf16>, vector<8x16xf32> -> vector<8x16xf32>
    %cst_24 = arith.constant dense<0xFF800000> : vector<8xf32>
    %31 = vector.multi_reduction <maximumf>, %30, %cst_24 [1] : vector<8x16xf32> to vector<8xf32>
    %32 = vector.shape_cast %31 : vector<8xf32> to vector<8x1xf32>
    %33 = vector.broadcast %32 : vector<8x1xf32> to vector<8x16xf32>
    %34 = arith.subf %30, %33 : vector<8x16xf32>
    %35 = math.exp %34 : vector<8x16xf32>
    %cst_25 = arith.constant dense<0.000000e+00> : vector<8xf32>
    %36 = vector.multi_reduction <add>, %35, %cst_25 [1] : vector<8x16xf32> to vector<8xf32>
    %37 = vector.shape_cast %36 : vector<8xf32> to vector<8x1xf32>
    %38 = tpu.reciprocal %37 : vector<8x1xf32> -> vector<8x1xf32>
    %39 = arith.truncf %35 : vector<8x16xf32> to vector<8x16xbf16>
    %40 = vector.extract_strided_slice %25 {offsets = [0, 0], sizes = [16, 8], strides = [1, 1]} : vector<16x32xbf16> to vector<16x8xbf16>
    %cst_26 = arith.constant dense<0.000000e+00> : vector<8x8xf32>
    %41 = tpu.matmul %39, %40, %cst_26 {dimension_numbers = #tpu.dot_dimension_numbers<[1], [0], [0], [1], [0, 0, 1, 1], [], []>} : vector<8x16xbf16>, vector<16x8xbf16>, vector<8x8xf32> -> vector<8x8xf32>
    %42 = vector.broadcast %38 : vector<8x1xf32> to vector<8x8xf32>
    %43 = arith.mulf %41, %42 : vector<8x8xf32>
    %44 = arith.truncf %43 : vector<8x8xf32> to vector<8x8xbf16>
    %45 = vector.extract_strided_slice %26 {offsets = [0, 0], sizes = [8, 32], strides = [1, 1]} : vector<32x32xbf16> to vector<8x32xbf16>
    %cst_27 = arith.constant dense<0.000000e+00> : vector<8x32xf32>
    %46 = tpu.matmul %44, %45, %cst_27 {dimension_numbers = #tpu.dot_dimension_numbers<[1], [0], [0], [1], [0, 0, 1, 1], [], []>} : vector<8x8xbf16>, vector<8x32xbf16>, vector<8x32xf32> -> vector<8x32xf32>
    %47 = arith.addf %27, %46 : vector<8x32xf32>
    %48 = vector.extract_strided_slice %23 {offsets = [0, 8], sizes = [8, 8], strides = [1, 1]} : vector<8x32xbf16> to vector<8x8xbf16>
    %49 = vector.extract_strided_slice %24 {offsets = [0, 8], sizes = [16, 8], strides = [1, 1]} : vector<16x32xbf16> to vector<16x8xbf16>
    %cst_28 = arith.constant dense<0.000000e+00> : vector<8x16xf32>
    %50 = tpu.matmul %48, %49, %cst_28 {dimension_numbers = #tpu.dot_dimension_numbers<[1], [1], [0], [0], [0, 0, 1, 0], [], []>} : vector<8x8xbf16>, vector<16x8xbf16>, vector<8x16xf32> -> vector<8x16xf32>
    %cst_29 = arith.constant dense<0xFF800000> : vector<8xf32>
    %51 = vector.multi_reduction <maximumf>, %50, %cst_29 [1] : vector<8x16xf32> to vector<8xf32>
    %52 = vector.shape_cast %51 : vector<8xf32> to vector<8x1xf32>
    %53 = vector.broadcast %52 : vector<8x1xf32> to vector<8x16xf32>
    %54 = arith.subf %50, %53 : vector<8x16xf32>
    %55 = math.exp %54 : vector<8x16xf32>
    %cst_30 = arith.constant dense<0.000000e+00> : vector<8xf32>
    %56 = vector.multi_reduction <add>, %55, %cst_30 [1] : vector<8x16xf32> to vector<8xf32>
    %57 = vector.shape_cast %56 : vector<8xf32> to vector<8x1xf32>
    %58 = tpu.reciprocal %57 : vector<8x1xf32> -> vector<8x1xf32>
    %59 = arith.truncf %55 : vector<8x16xf32> to vector<8x16xbf16>
    %60 = vector.extract_strided_slice %25 {offsets = [0, 8], sizes = [16, 8], strides = [1, 1]} : vector<16x32xbf16> to vector<16x8xbf16>
    %cst_31 = arith.constant dense<0.000000e+00> : vector<8x8xf32>
    %61 = tpu.matmul %59, %60, %cst_31 {dimension_numbers = #tpu.dot_dimension_numbers<[1], [0], [0], [1], [0, 0, 1, 1], [], []>} : vector<8x16xbf16>, vector<16x8xbf16>, vector<8x8xf32> -> vector<8x8xf32>
    %62 = vector.broadcast %58 : vector<8x1xf32> to vector<8x8xf32>
    %63 = arith.mulf %61, %62 : vector<8x8xf32>
    %64 = arith.truncf %63 : vector<8x8xf32> to vector<8x8xbf16>
    %65 = vector.extract_strided_slice %26 {offsets = [8, 0], sizes = [8, 32], strides = [1, 1]} : vector<32x32xbf16> to vector<8x32xbf16>
    %cst_32 = arith.constant dense<0.000000e+00> : vector<8x32xf32>
    %66 = tpu.matmul %64, %65, %cst_32 {dimension_numbers = #tpu.dot_dimension_numbers<[1], [0], [0], [1], [0, 0, 1, 1], [], []>} : vector<8x8xbf16>, vector<8x32xbf16>, vector<8x32xf32> -> vector<8x32xf32>
    %67 = arith.addf %47, %66 : vector<8x32xf32>
    %68 = vector.extract_strided_slice %23 {offsets = [0, 16], sizes = [8, 8], strides = [1, 1]} : vector<8x32xbf16> to vector<8x8xbf16>
    %69 = vector.extract_strided_slice %24 {offsets = [0, 16], sizes = [16, 8], strides = [1, 1]} : vector<16x32xbf16> to vector<16x8xbf16>
    %cst_33 = arith.constant dense<0.000000e+00> : vector<8x16xf32>
    %70 = tpu.matmul %68, %69, %cst_33 {dimension_numbers = #tpu.dot_dimension_numbers<[1], [1], [0], [0], [0, 0, 1, 0], [], []>} : vector<8x8xbf16>, vector<16x8xbf16>, vector<8x16xf32> -> vector<8x16xf32>
    %cst_34 = arith.constant dense<0xFF800000> : vector<8xf32>
    %71 = vector.multi_reduction <maximumf>, %70, %cst_34 [1] : vector<8x16xf32> to vector<8xf32>
    %72 = vector.shape_cast %71 : vector<8xf32> to vector<8x1xf32>
    %73 = vector.broadcast %72 : vector<8x1xf32> to vector<8x16xf32>
    %74 = arith.subf %70, %73 : vector<8x16xf32>
    %75 = math.exp %74 : vector<8x16xf32>
    %cst_35 = arith.constant dense<0.000000e+00> : vector<8xf32>
    %76 = vector.multi_reduction <add>, %75, %cst_35 [1] : vector<8x16xf32> to vector<8xf32>
    %77 = vector.shape_cast %76 : vector<8xf32> to vector<8x1xf32>
    %78 = tpu.reciprocal %77 : vector<8x1xf32> -> vector<8x1xf32>
    %79 = arith.truncf %75 : vector<8x16xf32> to vector<8x16xbf16>
    %80 = vector.extract_strided_slice %25 {offsets = [0, 16], sizes = [16, 8], strides = [1, 1]} : vector<16x32xbf16> to vector<16x8xbf16>
    %cst_36 = arith.constant dense<0.000000e+00> : vector<8x8xf32>
    %81 = tpu.matmul %79, %80, %cst_36 {dimension_numbers = #tpu.dot_dimension_numbers<[1], [0], [0], [1], [0, 0, 1, 1], [], []>} : vector<8x16xbf16>, vector<16x8xbf16>, vector<8x8xf32> -> vector<8x8xf32>
    %82 = vector.broadcast %78 : vector<8x1xf32> to vector<8x8xf32>
    %83 = arith.mulf %81, %82 : vector<8x8xf32>
    %84 = arith.truncf %83 : vector<8x8xf32> to vector<8x8xbf16>
    %85 = vector.extract_strided_slice %26 {offsets = [16, 0], sizes = [8, 32], strides = [1, 1]} : vector<32x32xbf16> to vector<8x32xbf16>
    %cst_37 = arith.constant dense<0.000000e+00> : vector<8x32xf32>
    %86 = tpu.matmul %84, %85, %cst_37 {dimension_numbers = #tpu.dot_dimension_numbers<[1], [0], [0], [1], [0, 0, 1, 1], [], []>} : vector<8x8xbf16>, vector<8x32xbf16>, vector<8x32xf32> -> vector<8x32xf32>
    %87 = arith.addf %67, %86 : vector<8x32xf32>
    %88 = vector.extract_strided_slice %23 {offsets = [0, 24], sizes = [8, 8], strides = [1, 1]} : vector<8x32xbf16> to vector<8x8xbf16>
    %89 = vector.extract_strided_slice %24 {offsets = [0, 24], sizes = [16, 8], strides = [1, 1]} : vector<16x32xbf16> to vector<16x8xbf16>
    %cst_38 = arith.constant dense<0.000000e+00> : vector<8x16xf32>
    %90 = tpu.matmul %88, %89, %cst_38 {dimension_numbers = #tpu.dot_dimension_numbers<[1], [1], [0], [0], [0, 0, 1, 0], [], []>} : vector<8x8xbf16>, vector<16x8xbf16>, vector<8x16xf32> -> vector<8x16xf32>
    %cst_39 = arith.constant dense<0xFF800000> : vector<8xf32>
    %91 = vector.multi_reduction <maximumf>, %90, %cst_39 [1] : vector<8x16xf32> to vector<8xf32>
    %92 = vector.shape_cast %91 : vector<8xf32> to vector<8x1xf32>
    %93 = vector.broadcast %92 : vector<8x1xf32> to vector<8x16xf32>
    %94 = arith.subf %90, %93 : vector<8x16xf32>
    %95 = math.exp %94 : vector<8x16xf32>
    %cst_40 = arith.constant dense<0.000000e+00> : vector<8xf32>
    %96 = vector.multi_reduction <add>, %95, %cst_40 [1] : vector<8x16xf32> to vector<8xf32>
    %97 = vector.shape_cast %96 : vector<8xf32> to vector<8x1xf32>
    %98 = tpu.reciprocal %97 : vector<8x1xf32> -> vector<8x1xf32>
    %99 = arith.truncf %95 : vector<8x16xf32> to vector<8x16xbf16>
    %100 = vector.extract_strided_slice %25 {offsets = [0, 24], sizes = [16, 8], strides = [1, 1]} : vector<16x32xbf16> to vector<16x8xbf16>
    %cst_41 = arith.constant dense<0.000000e+00> : vector<8x8xf32>
    %101 = tpu.matmul %99, %100, %cst_41 {dimension_numbers = #tpu.dot_dimension_numbers<[1], [0], [0], [1], [0, 0, 1, 1], [], []>} : vector<8x16xbf16>, vector<16x8xbf16>, vector<8x8xf32> -> vector<8x8xf32>
    %102 = vector.broadcast %98 : vector<8x1xf32> to vector<8x8xf32>
    %103 = arith.mulf %101, %102 : vector<8x8xf32>
    %104 = arith.truncf %103 : vector<8x8xf32> to vector<8x8xbf16>
    %105 = vector.extract_strided_slice %26 {offsets = [24, 0], sizes = [8, 32], strides = [1, 1]} : vector<32x32xbf16> to vector<8x32xbf16>
    %cst_42 = arith.constant dense<0.000000e+00> : vector<8x32xf32>
    %106 = tpu.matmul %104, %105, %cst_42 {dimension_numbers = #tpu.dot_dimension_numbers<[1], [0], [0], [1], [0, 0, 1, 1], [], []>} : vector<8x8xbf16>, vector<8x32xbf16>, vector<8x32xf32> -> vector<8x32xf32>
    %107 = arith.addf %87, %106 : vector<8x32xf32>
    %108 = arith.addf %1, %107 : vector<8x32xf32>
    %c0_43 = arith.constant 0 : index
    %c0_44 = arith.constant 0 : index
    %109 = vector.load %arg11[%c0_43, %c0_44] : memref<1x32xf32, #tpu.memory_space<vmem>>, vector<1x32xf32>
    %110 = vector.broadcast %109 : vector<1x32xf32> to vector<8x32xf32>
    %111 = arith.addf %108, %110 : vector<8x32xf32>
    %cst_45 = arith.constant dense<0.000000e+00> : vector<8xf32>
    %112 = vector.multi_reduction <add>, %111, %cst_45 [1] : vector<8x32xf32> to vector<8xf32>
    %113 = vector.shape_cast %112 : vector<8xf32> to vector<8x1xf32>
    %cst_46 = arith.constant 3.200000e+01 : f32
    %114 = vector.broadcast %cst_46 : f32 to vector<8x1xf32>
    %115 = arith.divf %113, %114 : vector<8x1xf32>
    %116 = vector.broadcast %115 : vector<8x1xf32> to vector<8x32xf32>
    %117 = arith.subf %111, %116 : vector<8x32xf32>
    %118 = arith.mulf %117, %117 : vector<8x32xf32>
    %cst_47 = arith.constant dense<0.000000e+00> : vector<8xf32>
    %119 = vector.multi_reduction <add>, %118, %cst_47 [1] : vector<8x32xf32> to vector<8xf32>
    %120 = vector.shape_cast %119 : vector<8xf32> to vector<8x1xf32>
    %cst_48 = arith.constant 3.200000e+01 : f32
    %121 = vector.broadcast %cst_48 : f32 to vector<8x1xf32>
    %122 = arith.divf %120, %121 : vector<8x1xf32>
    %123 = vector.broadcast %115 : vector<8x1xf32> to vector<8x32xf32>
    %124 = arith.subf %111, %123 : vector<8x32xf32>
    %cst_49 = arith.constant 9.99999974E-6 : f32
    %125 = vector.broadcast %cst_49 : f32 to vector<8x1xf32>
    %126 = arith.addf %122, %125 : vector<8x1xf32>
    %127 = math.rsqrt %126 : vector<8x1xf32>
    %128 = vector.broadcast %127 : vector<8x1xf32> to vector<8x32xf32>
    %129 = arith.mulf %124, %128 : vector<8x32xf32>
    %c0_50 = arith.constant 0 : index
    %c0_51 = arith.constant 0 : index
    %130 = vector.load %arg12[%c0_50, %c0_51] : memref<1x32xf32, #tpu.memory_space<vmem>>, vector<1x32xf32>
    %131 = vector.broadcast %130 : vector<1x32xf32> to vector<8x32xf32>
    %132 = arith.mulf %129, %131 : vector<8x32xf32>
    %c0_52 = arith.constant 0 : index
    %c0_53 = arith.constant 0 : index
    %133 = vector.load %arg13[%c0_52, %c0_53] : memref<1x32xf32, #tpu.memory_space<vmem>>, vector<1x32xf32>
    %134 = vector.broadcast %133 : vector<1x32xf32> to vector<8x32xf32>
    %135 = arith.addf %132, %134 : vector<8x32xf32>
    %c0_54 = arith.constant 0 : index
    %c0_55 = arith.constant 0 : index
    %c0_56 = arith.constant 0 : index
    %136 = vector.load %arg14[%c0_54, %c0_55, %c0_56] : memref<1x8x32xf32, #tpu.memory_space<vmem>>, vector<1x8x32xf32>
    %137 = vector.shape_cast %136 : vector<1x8x32xf32> to vector<8x32xf32>
    %138 = vector.shape_cast %135 : vector<8x32xf32> to vector<1x8x32xf32>
    tpu.vector_store %arg14[%c0_54, %c0_55, %c0_56], %138 {strides = array<i32>} : memref<1x8x32xf32, #tpu.memory_space<vmem>>, vector<1x8x32xf32>,
    return
  }
  func.func @transform_0(%arg0: i32, %arg1: i32) -> (i32, i32, i32) {
    %c0_i32 = arith.constant 0 : i32
    %c0_i32_0 = arith.constant 0 : i32
    return %arg0, %arg1, %c0_i32 : i32, i32, i32
  }
  func.func @transform_1(%arg0: i32, %arg1: i32) -> (i32, i32, i32) {
    %c0_i32 = arith.constant 0 : i32
    %c0_i32_0 = arith.constant 0 : i32
    %c0_i32_1 = arith.constant 0 : i32
    return %arg0, %c0_i32, %c0_i32_0 : i32, i32, i32
  }
  func.func @transform_2(%arg0: i32, %arg1: i32) -> (i32, i32) {
    %c0_i32 = arith.constant 0 : i32
    %c0_i32_0 = arith.constant 0 : i32
    %c0_i32_1 = arith.constant 0 : i32
    return %c0_i32, %c0_i32_0 : i32, i32
  }
  func.func @transform_3(%arg0: i32, %arg1: i32) -> (i32, i32) {
    %c0_i32 = arith.constant 0 : i32
    %c0_i32_0 = arith.constant 0 : i32
    %c0_i32_1 = arith.constant 0 : i32
    return %c0_i32, %c0_i32_0 : i32, i32
  }
  func.func @transform_4(%arg0: i32, %arg1: i32) -> (i32, i32) {
    %c0_i32 = arith.constant 0 : i32
    %c0_i32_0 = arith.constant 0 : i32
    %c0_i32_1 = arith.constant 0 : i32
    return %c0_i32, %c0_i32_0 : i32, i32
  }
  func.func @transform_5(%arg0: i32, %arg1: i32) -> (i32, i32) {
    %c0_i32 = arith.constant 0 : i32
    %c0_i32_0 = arith.constant 0 : i32
    %c0_i32_1 = arith.constant 0 : i32
    return %c0_i32, %c0_i32_0 : i32, i32
  }
  func.func @transform_6(%arg0: i32, %arg1: i32) -> (i32, i32) {
    %c0_i32 = arith.constant 0 : i32
    %c0_i32_0 = arith.constant 0 : i32
    %c0_i32_1 = arith.constant 0 : i32
    return %c0_i32, %c0_i32_0 : i32, i32
  }
  func.func @transform_7(%arg0: i32, %arg1: i32) -> (i32, i32) {
    %c0_i32 = arith.constant 0 : i32
    %c0_i32_0 = arith.constant 0 : i32
    %c0_i32_1 = arith.constant 0 : i32
    return %c0_i32, %c0_i32_0 : i32, i32
  }
  func.func @transform_8(%arg0: i32, %arg1: i32) -> (i32, i32) {
    %c0_i32 = arith.constant 0 : i32
    %c0_i32_0 = arith.constant 0 : i32
    %c0_i32_1 = arith.constant 0 : i32
    return %c0_i32, %c0_i32_0 : i32, i32
  }
  func.func @transform_9(%arg0: i32, %arg1: i32) -> (i32, i32) {
    %c0_i32 = arith.constant 0 : i32
    %c0_i32_0 = arith.constant 0 : i32
    %c0_i32_1 = arith.constant 0 : i32
    return %c0_i32, %c0_i32_0 : i32, i32
  }
  func.func @transform_10(%arg0: i32, %arg1: i32) -> (i32, i32) {
    %c0_i32 = arith.constant 0 : i32
    %c0_i32_0 = arith.constant 0 : i32
    %c0_i32_1 = arith.constant 0 : i32
    return %c0_i32, %c0_i32_0 : i32, i32
  }
  func.func @transform_11(%arg0: i32, %arg1: i32) -> (i32, i32) {
    %c0_i32 = arith.constant 0 : i32
    %c0_i32_0 = arith.constant 0 : i32
    %c0_i32_1 = arith.constant 0 : i32
    return %c0_i32, %c0_i32_0 : i32, i32
  }
  func.func @transform_12(%arg0: i32, %arg1: i32) -> (i32, i32, i32) {
    %c0_i32 = arith.constant 0 : i32
    %c0_i32_0 = arith.constant 0 : i32
    return %arg0, %arg1, %c0_i32 : i32, i32, i32
  }
}

module attributes {stable_mosaic.version = 11 : i64} {
  func.func @_attn_mask_kernel(%arg0: i32, %arg1: i32, %arg2: memref<1x8x32xf32, #tpu.memory_space<vmem>>, %arg3: memref<1x8x32xf32, #tpu.memory_space<vmem>>, %arg4: memref<1x8x8xf32, #tpu.memory_space<vmem>>, %arg5: memref<32x32xbf16, #tpu.memory_space<vmem>>, %arg6: memref<1x32xf32, #tpu.memory_space<vmem>>, %arg7: memref<32x32xbf16, #tpu.memory_space<vmem>>, %arg8: memref<1x32xf32, #tpu.memory_space<vmem>>, %arg9: memref<32x32xbf16, #tpu.memory_space<vmem>>, %arg10: memref<1x32xf32, #tpu.memory_space<vmem>>, %arg11: memref<32x32xbf16, #tpu.memory_space<vmem>>, %arg12: memref<1x32xf32, #tpu.memory_space<vmem>>, %arg13: memref<1x32xf32, #tpu.memory_space<vmem>>, %arg14: memref<1x32xf32, #tpu.memory_space<vmem>>, %arg15: memref<1x8x32xf32, #tpu.memory_space<vmem>>) attributes {dimension_semantics = [#tpu.dimension_semantics<parallel>, #tpu.dimension_semantics<parallel>], iteration_bounds = array<i64: 2, 1>, scalar_prefetch = 0 : i64, scratch_operands = 0 : i64, tpu.core_type = #tpu.core_type<tc>, window_params = [{transform_indices = @transform_0, window_bounds = array<i64: 1, 8, 32>}, {transform_indices = @transform_1, window_bounds = array<i64: 1, 8, 32>}, {transform_indices = @transform_2, window_bounds = array<i64: 1, 8, 8>}, {pipeline_mode = #tpu.pipeline_mode<synchronous>, transform_indices = @transform_3, window_bounds = array<i64: 32, 32>}, {pipeline_mode = #tpu.pipeline_mode<synchronous>, transform_indices = @transform_4, window_bounds = array<i64: 1, 32>}, {pipeline_mode = #tpu.pipeline_mode<synchronous>, transform_indices = @transform_5, window_bounds = array<i64: 32, 32>}, {pipeline_mode = #tpu.pipeline_mode<synchronous>, transform_indices = @transform_6, window_bounds = array<i64: 1, 32>}, {pipeline_mode = #tpu.pipeline_mode<synchronous>, transform_indices = @transform_7, window_bounds = array<i64: 32, 32>}, {pipeline_mode = #tpu.pipeline_mode<synchronous>, transform_indices = @transform_8, window_bounds = array<i64: 1, 32>}, {pipeline_mode = #tpu.pipeline_mode<synchronous>, transform_indices = @transform_9, window_bounds = array<i64: 32, 32>}, {pipeline_mode = #tpu.pipeline_mode<synchronous>, transform_indices = @transform_10, window_bounds = array<i64: 1, 32>}, {pipeline_mode = #tpu.pipeline_mode<synchronous>, transform_indices = @transform_11, window_bounds = array<i64: 1, 32>}, {pipeline_mode = #tpu.pipeline_mode<synchronous>, transform_indices = @transform_12, window_bounds = array<i64: 1, 32>}, {transform_indices = @transform_13, window_bounds = array<i64: 1, 8, 32>}]} {
    %c0 = arith.constant 0 : index
    %c0_0 = arith.constant 0 : index
    %c0_1 = arith.constant 0 : index
    %0 = vector.load %arg2[%c0, %c0_0, %c0_1] : memref<1x8x32xf32, #tpu.memory_space<vmem>>, vector<1x8x32xf32>
    %1 = vector.shape_cast %0 : vector<1x8x32xf32> to vector<8x32xf32>
    %c0_2 = arith.constant 0 : index
    %c0_3 = arith.constant 0 : index
    %c0_4 = arith.constant 0 : index
    %2 = vector.load %arg3[%c0_2, %c0_3, %c0_4] : memref<1x8x32xf32, #tpu.memory_space<vmem>>, vector<1x8x32xf32>
    %3 = vector.shape_cast %2 : vector<1x8x32xf32> to vector<8x32xf32>
    %4 = arith.truncf %1 : vector<8x32xf32> to vector<8x32xbf16>
    %5 = arith.truncf %3 : vector<8x32xf32> to vector<8x32xbf16>
    %c0_5 = arith.constant 0 : index
    %c0_6 = arith.constant 0 : index
    %6 = vector.load %arg5[%c0_5, %c0_6] : memref<32x32xbf16, #tpu.memory_space<vmem>>, vector<32x32xbf16>
    %cst = arith.constant dense<0.000000e+00> : vector<8x32xf32>
    %7 = tpu.matmul %4, %6, %cst {dimension_numbers = #tpu.dot_dimension_numbers<[1], [0], [0], [1], [0, 0, 1, 1], [], []>} : vector<8x32xbf16>, vector<32x32xbf16>, vector<8x32xf32> -> vector<8x32xf32>
    %c0_7 = arith.constant 0 : index
    %c0_8 = arith.constant 0 : index
    %8 = vector.load %arg6[%c0_7, %c0_8] : memref<1x32xf32, #tpu.memory_space<vmem>>, vector<1x32xf32>
    %9 = vector.broadcast %8 : vector<1x32xf32> to vector<8x32xf32>
    %10 = arith.addf %7, %9 : vector<8x32xf32>
    %c0_9 = arith.constant 0 : index
    %c0_10 = arith.constant 0 : index
    %11 = vector.load %arg7[%c0_9, %c0_10] : memref<32x32xbf16, #tpu.memory_space<vmem>>, vector<32x32xbf16>
    %cst_11 = arith.constant dense<0.000000e+00> : vector<8x32xf32>
    %12 = tpu.matmul %5, %11, %cst_11 {dimension_numbers = #tpu.dot_dimension_numbers<[1], [0], [0], [1], [0, 0, 1, 1], [], []>} : vector<8x32xbf16>, vector<32x32xbf16>, vector<8x32xf32> -> vector<8x32xf32>
    %c0_12 = arith.constant 0 : index
    %c0_13 = arith.constant 0 : index
    %13 = vector.load %arg8[%c0_12, %c0_13] : memref<1x32xf32, #tpu.memory_space<vmem>>, vector<1x32xf32>
    %14 = vector.broadcast %13 : vector<1x32xf32> to vector<8x32xf32>
    %15 = arith.addf %12, %14 : vector<8x32xf32>
    %c0_14 = arith.constant 0 : index
    %c0_15 = arith.constant 0 : index
    %16 = vector.load %arg9[%c0_14, %c0_15] : memref<32x32xbf16, #tpu.memory_space<vmem>>, vector<32x32xbf16>
    %cst_16 = arith.constant dense<0.000000e+00> : vector<8x32xf32>
    %17 = tpu.matmul %5, %16, %cst_16 {dimension_numbers = #tpu.dot_dimension_numbers<[1], [0], [0], [1], [0, 0, 1, 1], [], []>} : vector<8x32xbf16>, vector<32x32xbf16>, vector<8x32xf32> -> vector<8x32xf32>
    %c0_17 = arith.constant 0 : index
    %c0_18 = arith.constant 0 : index
    %18 = vector.load %arg10[%c0_17, %c0_18] : memref<1x32xf32, #tpu.memory_space<vmem>>, vector<1x32xf32>
    %19 = vector.broadcast %18 : vector<1x32xf32> to vector<8x32xf32>
    %20 = arith.addf %17, %19 : vector<8x32xf32>
    %cst_19 = arith.constant 0.353553385 : f32
    %21 = vector.broadcast %cst_19 : f32 to vector<8x32xf32>
    %22 = arith.mulf %10, %21 : vector<8x32xf32>
    %23 = arith.truncf %22 : vector<8x32xf32> to vector<8x32xbf16>
    %24 = arith.truncf %15 : vector<8x32xf32> to vector<8x32xbf16>
    %25 = arith.truncf %20 : vector<8x32xf32> to vector<8x32xbf16>
    %c0_20 = arith.constant 0 : index
    %c0_21 = arith.constant 0 : index
    %26 = vector.load %arg11[%c0_20, %c0_21] : memref<32x32xbf16, #tpu.memory_space<vmem>>, vector<32x32xbf16>
    %c0_22 = arith.constant 0 : index
    %c0_23 = arith.constant 0 : index
    %c0_24 = arith.constant 0 : index
    %27 = vector.load %arg4[%c0_22, %c0_23, %c0_24] : memref<1x8x8xf32, #tpu.memory_space<vmem>>, vector<1x8x8xf32>
    %28 = vector.shape_cast %27 : vector<1x8x8xf32> to vector<8x8xf32>
    %cst_25 = arith.constant 0.000000e+00 : f32
    %29 = vector.broadcast %cst_25 : f32 to vector<8x8xf32>
    %30 = arith.cmpf oeq, %28, %29 : vector<8x8xf32>
    %cst_26 = arith.constant -1.000000e+09 : f32
    %cst_27 = arith.constant 0.000000e+00 : f32
    %31 = vector.broadcast %cst_26 : f32 to vector<8x8xf32>
    %32 = vector.broadcast %cst_27 : f32 to vector<8x8xf32>
    %33 = arith.select %30, %31, %32 : vector<8x8xi1>, vector<8x8xf32>
    %cst_28 = arith.constant 0.000000e+00 : f32
    %34 = vector.broadcast %cst_28 : f32 to vector<8x32xf32>
    %35 = vector.extract_strided_slice %23 {offsets = [0, 0], sizes = [8, 8], strides = [1, 1]} : vector<8x32xbf16> to vector<8x8xbf16>
    %36 = vector.extract_strided_slice %24 {offsets = [0, 0], sizes = [8, 8], strides = [1, 1]} : vector<8x32xbf16> to vector<8x8xbf16>
    %cst_29 = arith.constant dense<0.000000e+00> : vector<8x8xf32>
    %37 = tpu.matmul %35, %36, %cst_29 {dimension_numbers = #tpu.dot_dimension_numbers<[1], [1], [0], [0], [0, 0, 1, 0], [], []>} : vector<8x8xbf16>, vector<8x8xbf16>, vector<8x8xf32> -> vector<8x8xf32>
    %38 = arith.addf %37, %33 : vector<8x8xf32>
    %cst_30 = arith.constant dense<0xFF800000> : vector<8xf32>
    %39 = vector.multi_reduction <maximumf>, %38, %cst_30 [1] : vector<8x8xf32> to vector<8xf32>
    %40 = vector.shape_cast %39 : vector<8xf32> to vector<8x1xf32>
    %41 = vector.broadcast %40 : vector<8x1xf32> to vector<8x8xf32>
    %42 = arith.subf %38, %41 : vector<8x8xf32>
    %43 = math.exp %42 : vector<8x8xf32>
    %cst_31 = arith.constant dense<0.000000e+00> : vector<8xf32>
    %44 = vector.multi_reduction <add>, %43, %cst_31 [1] : vector<8x8xf32> to vector<8xf32>
    %45 = vector.shape_cast %44 : vector<8xf32> to vector<8x1xf32>
    %46 = tpu.reciprocal %45 : vector<8x1xf32> -> vector<8x1xf32>
    %47 = arith.truncf %43 : vector<8x8xf32> to vector<8x8xbf16>
    %48 = vector.extract_strided_slice %25 {offsets = [0, 0], sizes = [8, 8], strides = [1, 1]} : vector<8x32xbf16> to vector<8x8xbf16>
    %cst_32 = arith.constant dense<0.000000e+00> : vector<8x8xf32>
    %49 = tpu.matmul %47, %48, %cst_32 {dimension_numbers = #tpu.dot_dimension_numbers<[1], [0], [0], [1], [0, 0, 1, 1], [], []>} : vector<8x8xbf16>, vector<8x8xbf16>, vector<8x8xf32> -> vector<8x8xf32>
    %50 = vector.broadcast %46 : vector<8x1xf32> to vector<8x8xf32>
    %51 = arith.mulf %49, %50 : vector<8x8xf32>
    %52 = arith.truncf %51 : vector<8x8xf32> to vector<8x8xbf16>
    %53 = vector.extract_strided_slice %26 {offsets = [0, 0], sizes = [8, 32], strides = [1, 1]} : vector<32x32xbf16> to vector<8x32xbf16>
    %cst_33 = arith.constant dense<0.000000e+00> : vector<8x32xf32>
    %54 = tpu.matmul %52, %53, %cst_33 {dimension_numbers = #tpu.dot_dimension_numbers<[1], [0], [0], [1], [0, 0, 1, 1], [], []>} : vector<8x8xbf16>, vector<8x32xbf16>, vector<8x32xf32> -> vector<8x32xf32>
    %55 = arith.addf %34, %54 : vector<8x32xf32>
    %56 = vector.extract_strided_slice %23 {offsets = [0, 8], sizes = [8, 8], strides = [1, 1]} : vector<8x32xbf16> to vector<8x8xbf16>
    %57 = vector.extract_strided_slice %24 {offsets = [0, 8], sizes = [8, 8], strides = [1, 1]} : vector<8x32xbf16> to vector<8x8xbf16>
    %cst_34 = arith.constant dense<0.000000e+00> : vector<8x8xf32>
    %58 = tpu.matmul %56, %57, %cst_34 {dimension_numbers = #tpu.dot_dimension_numbers<[1], [1], [0], [0], [0, 0, 1, 0], [], []>} : vector<8x8xbf16>, vector<8x8xbf16>, vector<8x8xf32> -> vector<8x8xf32>
    %59 = arith.addf %58, %33 : vector<8x8xf32>
    %cst_35 = arith.constant dense<0xFF800000> : vector<8xf32>
    %60 = vector.multi_reduction <maximumf>, %59, %cst_35 [1] : vector<8x8xf32> to vector<8xf32>
    %61 = vector.shape_cast %60 : vector<8xf32> to vector<8x1xf32>
    %62 = vector.broadcast %61 : vector<8x1xf32> to vector<8x8xf32>
    %63 = arith.subf %59, %62 : vector<8x8xf32>
    %64 = math.exp %63 : vector<8x8xf32>
    %cst_36 = arith.constant dense<0.000000e+00> : vector<8xf32>
    %65 = vector.multi_reduction <add>, %64, %cst_36 [1] : vector<8x8xf32> to vector<8xf32>
    %66 = vector.shape_cast %65 : vector<8xf32> to vector<8x1xf32>
    %67 = tpu.reciprocal %66 : vector<8x1xf32> -> vector<8x1xf32>
    %68 = arith.truncf %64 : vector<8x8xf32> to vector<8x8xbf16>
    %69 = vector.extract_strided_slice %25 {offsets = [0, 8], sizes = [8, 8], strides = [1, 1]} : vector<8x32xbf16> to vector<8x8xbf16>
    %cst_37 = arith.constant dense<0.000000e+00> : vector<8x8xf32>
    %70 = tpu.matmul %68, %69, %cst_37 {dimension_numbers = #tpu.dot_dimension_numbers<[1], [0], [0], [1], [0, 0, 1, 1], [], []>} : vector<8x8xbf16>, vector<8x8xbf16>, vector<8x8xf32> -> vector<8x8xf32>
    %71 = vector.broadcast %67 : vector<8x1xf32> to vector<8x8xf32>
    %72 = arith.mulf %70, %71 : vector<8x8xf32>
    %73 = arith.truncf %72 : vector<8x8xf32> to vector<8x8xbf16>
    %74 = vector.extract_strided_slice %26 {offsets = [8, 0], sizes = [8, 32], strides = [1, 1]} : vector<32x32xbf16> to vector<8x32xbf16>
    %cst_38 = arith.constant dense<0.000000e+00> : vector<8x32xf32>
    %75 = tpu.matmul %73, %74, %cst_38 {dimension_numbers = #tpu.dot_dimension_numbers<[1], [0], [0], [1], [0, 0, 1, 1], [], []>} : vector<8x8xbf16>, vector<8x32xbf16>, vector<8x32xf32> -> vector<8x32xf32>
    %76 = arith.addf %55, %75 : vector<8x32xf32>
    %77 = vector.extract_strided_slice %23 {offsets = [0, 16], sizes = [8, 8], strides = [1, 1]} : vector<8x32xbf16> to vector<8x8xbf16>
    %78 = vector.extract_strided_slice %24 {offsets = [0, 16], sizes = [8, 8], strides = [1, 1]} : vector<8x32xbf16> to vector<8x8xbf16>
    %cst_39 = arith.constant dense<0.000000e+00> : vector<8x8xf32>
    %79 = tpu.matmul %77, %78, %cst_39 {dimension_numbers = #tpu.dot_dimension_numbers<[1], [1], [0], [0], [0, 0, 1, 0], [], []>} : vector<8x8xbf16>, vector<8x8xbf16>, vector<8x8xf32> -> vector<8x8xf32>
    %80 = arith.addf %79, %33 : vector<8x8xf32>
    %cst_40 = arith.constant dense<0xFF800000> : vector<8xf32>
    %81 = vector.multi_reduction <maximumf>, %80, %cst_40 [1] : vector<8x8xf32> to vector<8xf32>
    %82 = vector.shape_cast %81 : vector<8xf32> to vector<8x1xf32>
    %83 = vector.broadcast %82 : vector<8x1xf32> to vector<8x8xf32>
    %84 = arith.subf %80, %83 : vector<8x8xf32>
    %85 = math.exp %84 : vector<8x8xf32>
    %cst_41 = arith.constant dense<0.000000e+00> : vector<8xf32>
    %86 = vector.multi_reduction <add>, %85, %cst_41 [1] : vector<8x8xf32> to vector<8xf32>
    %87 = vector.shape_cast %86 : vector<8xf32> to vector<8x1xf32>
    %88 = tpu.reciprocal %87 : vector<8x1xf32> -> vector<8x1xf32>
    %89 = arith.truncf %85 : vector<8x8xf32> to vector<8x8xbf16>
    %90 = vector.extract_strided_slice %25 {offsets = [0, 16], sizes = [8, 8], strides = [1, 1]} : vector<8x32xbf16> to vector<8x8xbf16>
    %cst_42 = arith.constant dense<0.000000e+00> : vector<8x8xf32>
    %91 = tpu.matmul %89, %90, %cst_42 {dimension_numbers = #tpu.dot_dimension_numbers<[1], [0], [0], [1], [0, 0, 1, 1], [], []>} : vector<8x8xbf16>, vector<8x8xbf16>, vector<8x8xf32> -> vector<8x8xf32>
    %92 = vector.broadcast %88 : vector<8x1xf32> to vector<8x8xf32>
    %93 = arith.mulf %91, %92 : vector<8x8xf32>
    %94 = arith.truncf %93 : vector<8x8xf32> to vector<8x8xbf16>
    %95 = vector.extract_strided_slice %26 {offsets = [16, 0], sizes = [8, 32], strides = [1, 1]} : vector<32x32xbf16> to vector<8x32xbf16>
    %cst_43 = arith.constant dense<0.000000e+00> : vector<8x32xf32>
    %96 = tpu.matmul %94, %95, %cst_43 {dimension_numbers = #tpu.dot_dimension_numbers<[1], [0], [0], [1], [0, 0, 1, 1], [], []>} : vector<8x8xbf16>, vector<8x32xbf16>, vector<8x32xf32> -> vector<8x32xf32>
    %97 = arith.addf %76, %96 : vector<8x32xf32>
    %98 = vector.extract_strided_slice %23 {offsets = [0, 24], sizes = [8, 8], strides = [1, 1]} : vector<8x32xbf16> to vector<8x8xbf16>
    %99 = vector.extract_strided_slice %24 {offsets = [0, 24], sizes = [8, 8], strides = [1, 1]} : vector<8x32xbf16> to vector<8x8xbf16>
    %cst_44 = arith.constant dense<0.000000e+00> : vector<8x8xf32>
    %100 = tpu.matmul %98, %99, %cst_44 {dimension_numbers = #tpu.dot_dimension_numbers<[1], [1], [0], [0], [0, 0, 1, 0], [], []>} : vector<8x8xbf16>, vector<8x8xbf16>, vector<8x8xf32> -> vector<8x8xf32>
    %101 = arith.addf %100, %33 : vector<8x8xf32>
    %cst_45 = arith.constant dense<0xFF800000> : vector<8xf32>
    %102 = vector.multi_reduction <maximumf>, %101, %cst_45 [1] : vector<8x8xf32> to vector<8xf32>
    %103 = vector.shape_cast %102 : vector<8xf32> to vector<8x1xf32>
    %104 = vector.broadcast %103 : vector<8x1xf32> to vector<8x8xf32>
    %105 = arith.subf %101, %104 : vector<8x8xf32>
    %106 = math.exp %105 : vector<8x8xf32>
    %cst_46 = arith.constant dense<0.000000e+00> : vector<8xf32>
    %107 = vector.multi_reduction <add>, %106, %cst_46 [1] : vector<8x8xf32> to vector<8xf32>
    %108 = vector.shape_cast %107 : vector<8xf32> to vector<8x1xf32>
    %109 = tpu.reciprocal %108 : vector<8x1xf32> -> vector<8x1xf32>
    %110 = arith.truncf %106 : vector<8x8xf32> to vector<8x8xbf16>
    %111 = vector.extract_strided_slice %25 {offsets = [0, 24], sizes = [8, 8], strides = [1, 1]} : vector<8x32xbf16> to vector<8x8xbf16>
    %cst_47 = arith.constant dense<0.000000e+00> : vector<8x8xf32>
    %112 = tpu.matmul %110, %111, %cst_47 {dimension_numbers = #tpu.dot_dimension_numbers<[1], [0], [0], [1], [0, 0, 1, 1], [], []>} : vector<8x8xbf16>, vector<8x8xbf16>, vector<8x8xf32> -> vector<8x8xf32>
    %113 = vector.broadcast %109 : vector<8x1xf32> to vector<8x8xf32>
    %114 = arith.mulf %112, %113 : vector<8x8xf32>
    %115 = arith.truncf %114 : vector<8x8xf32> to vector<8x8xbf16>
    %116 = vector.extract_strided_slice %26 {offsets = [24, 0], sizes = [8, 32], strides = [1, 1]} : vector<32x32xbf16> to vector<8x32xbf16>
    %cst_48 = arith.constant dense<0.000000e+00> : vector<8x32xf32>
    %117 = tpu.matmul %115, %116, %cst_48 {dimension_numbers = #tpu.dot_dimension_numbers<[1], [0], [0], [1], [0, 0, 1, 1], [], []>} : vector<8x8xbf16>, vector<8x32xbf16>, vector<8x32xf32> -> vector<8x32xf32>
    %118 = arith.addf %97, %117 : vector<8x32xf32>
    %119 = arith.addf %1, %118 : vector<8x32xf32>
    %c0_49 = arith.constant 0 : index
    %c0_50 = arith.constant 0 : index
    %120 = vector.load %arg12[%c0_49, %c0_50] : memref<1x32xf32, #tpu.memory_space<vmem>>, vector<1x32xf32>
    %121 = vector.broadcast %120 : vector<1x32xf32> to vector<8x32xf32>
    %122 = arith.addf %119, %121 : vector<8x32xf32>
    %cst_51 = arith.constant dense<0.000000e+00> : vector<8xf32>
    %123 = vector.multi_reduction <add>, %122, %cst_51 [1] : vector<8x32xf32> to vector<8xf32>
    %124 = vector.shape_cast %123 : vector<8xf32> to vector<8x1xf32>
    %cst_52 = arith.constant 3.200000e+01 : f32
    %125 = vector.broadcast %cst_52 : f32 to vector<8x1xf32>
    %126 = arith.divf %124, %125 : vector<8x1xf32>
    %127 = vector.broadcast %126 : vector<8x1xf32> to vector<8x32xf32>
    %128 = arith.subf %122, %127 : vector<8x32xf32>
    %129 = arith.mulf %128, %128 : vector<8x32xf32>
    %cst_53 = arith.constant dense<0.000000e+00> : vector<8xf32>
    %130 = vector.multi_reduction <add>, %129, %cst_53 [1] : vector<8x32xf32> to vector<8xf32>
    %131 = vector.shape_cast %130 : vector<8xf32> to vector<8x1xf32>
    %cst_54 = arith.constant 3.200000e+01 : f32
    %132 = vector.broadcast %cst_54 : f32 to vector<8x1xf32>
    %133 = arith.divf %131, %132 : vector<8x1xf32>
    %134 = vector.broadcast %126 : vector<8x1xf32> to vector<8x32xf32>
    %135 = arith.subf %122, %134 : vector<8x32xf32>
    %cst_55 = arith.constant 9.99999974E-6 : f32
    %136 = vector.broadcast %cst_55 : f32 to vector<8x1xf32>
    %137 = arith.addf %133, %136 : vector<8x1xf32>
    %138 = math.rsqrt %137 : vector<8x1xf32>
    %139 = vector.broadcast %138 : vector<8x1xf32> to vector<8x32xf32>
    %140 = arith.mulf %135, %139 : vector<8x32xf32>
    %c0_56 = arith.constant 0 : index
    %c0_57 = arith.constant 0 : index
    %141 = vector.load %arg13[%c0_56, %c0_57] : memref<1x32xf32, #tpu.memory_space<vmem>>, vector<1x32xf32>
    %142 = vector.broadcast %141 : vector<1x32xf32> to vector<8x32xf32>
    %143 = arith.mulf %140, %142 : vector<8x32xf32>
    %c0_58 = arith.constant 0 : index
    %c0_59 = arith.constant 0 : index
    %144 = vector.load %arg14[%c0_58, %c0_59] : memref<1x32xf32, #tpu.memory_space<vmem>>, vector<1x32xf32>
    %145 = vector.broadcast %144 : vector<1x32xf32> to vector<8x32xf32>
    %146 = arith.addf %143, %145 : vector<8x32xf32>
    %c0_60 = arith.constant 0 : index
    %c0_61 = arith.constant 0 : index
    %c0_62 = arith.constant 0 : index
    %147 = vector.load %arg15[%c0_60, %c0_61, %c0_62] : memref<1x8x32xf32, #tpu.memory_space<vmem>>, vector<1x8x32xf32>
    %148 = vector.shape_cast %147 : vector<1x8x32xf32> to vector<8x32xf32>
    %149 = vector.shape_cast %146 : vector<8x32xf32> to vector<1x8x32xf32>
    tpu.vector_store %arg15[%c0_60, %c0_61, %c0_62], %149 {strides = array<i32>} : memref<1x8x32xf32, #tpu.memory_space<vmem>>, vector<1x8x32xf32>,
    return
  }
  func.func @transform_0(%arg0: i32, %arg1: i32) -> (i32, i32, i32) {
    %c0_i32 = arith.constant 0 : i32
    %c0_i32_0 = arith.constant 0 : i32
    return %arg0, %arg1, %c0_i32 : i32, i32, i32
  }
  func.func @transform_1(%arg0: i32, %arg1: i32) -> (i32, i32, i32) {
    %c0_i32 = arith.constant 0 : i32
    %c0_i32_0 = arith.constant 0 : i32
    %c0_i32_1 = arith.constant 0 : i32
    return %arg0, %c0_i32, %c0_i32_0 : i32, i32, i32
  }
  func.func @transform_2(%arg0: i32, %arg1: i32) -> (i32, i32, i32) {
    %c0_i32 = arith.constant 0 : i32
    %c0_i32_0 = arith.constant 0 : i32
    return %arg0, %arg1, %c0_i32 : i32, i32, i32
  }
  func.func @transform_3(%arg0: i32, %arg1: i32) -> (i32, i32) {
    %c0_i32 = arith.constant 0 : i32
    %c0_i32_0 = arith.constant 0 : i32
    %c0_i32_1 = arith.constant 0 : i32
    return %c0_i32, %c0_i32_0 : i32, i32
  }
  func.func @transform_4(%arg0: i32, %arg1: i32) -> (i32, i32) {
    %c0_i32 = arith.constant 0 : i32
    %c0_i32_0 = arith.constant 0 : i32
    %c0_i32_1 = arith.constant 0 : i32
    return %c0_i32, %c0_i32_0 : i32, i32
  }
  func.func @transform_5(%arg0: i32, %arg1: i32) -> (i32, i32) {
    %c0_i32 = arith.constant 0 : i32
    %c0_i32_0 = arith.constant 0 : i32
    %c0_i32_1 = arith.constant 0 : i32
    return %c0_i32, %c0_i32_0 : i32, i32
  }
  func.func @transform_6(%arg0: i32, %arg1: i32) -> (i32, i32) {
    %c0_i32 = arith.constant 0 : i32
    %c0_i32_0 = arith.constant 0 : i32
    %c0_i32_1 = arith.constant 0 : i32
    return %c0_i32, %c0_i32_0 : i32, i32
  }
  func.func @transform_7(%arg0: i32, %arg1: i32) -> (i32, i32) {
    %c0_i32 = arith.constant 0 : i32
    %c0_i32_0 = arith.constant 0 : i32
    %c0_i32_1 = arith.constant 0 : i32
    return %c0_i32, %c0_i32_0 : i32, i32
  }
  func.func @transform_8(%arg0: i32, %arg1: i32) -> (i32, i32) {
    %c0_i32 = arith.constant 0 : i32
    %c0_i32_0 = arith.constant 0 : i32
    %c0_i32_1 = arith.constant 0 : i32
    return %c0_i32, %c0_i32_0 : i32, i32
  }
  func.func @transform_9(%arg0: i32, %arg1: i32) -> (i32, i32) {
    %c0_i32 = arith.constant 0 : i32
    %c0_i32_0 = arith.constant 0 : i32
    %c0_i32_1 = arith.constant 0 : i32
    return %c0_i32, %c0_i32_0 : i32, i32
  }
  func.func @transform_10(%arg0: i32, %arg1: i32) -> (i32, i32) {
    %c0_i32 = arith.constant 0 : i32
    %c0_i32_0 = arith.constant 0 : i32
    %c0_i32_1 = arith.constant 0 : i32
    return %c0_i32, %c0_i32_0 : i32, i32
  }
  func.func @transform_11(%arg0: i32, %arg1: i32) -> (i32, i32) {
    %c0_i32 = arith.constant 0 : i32
    %c0_i32_0 = arith.constant 0 : i32
    %c0_i32_1 = arith.constant 0 : i32
    return %c0_i32, %c0_i32_0 : i32, i32
  }
  func.func @transform_12(%arg0: i32, %arg1: i32) -> (i32, i32) {
    %c0_i32 = arith.constant 0 : i32
    %c0_i32_0 = arith.constant 0 : i32
    %c0_i32_1 = arith.constant 0 : i32
    return %c0_i32, %c0_i32_0 : i32, i32
  }
  func.func @transform_13(%arg0: i32, %arg1: i32) -> (i32, i32, i32) {
    %c0_i32 = arith.constant 0 : i32
    %c0_i32_0 = arith.constant 0 : i32
    return %arg0, %arg1, %c0_i32 : i32, i32, i32
  }
}

module attributes {stable_mosaic.version = 11 : i64} {
  func.func @_ffn_add_ln_kernel(%arg0: i32, %arg1: i32, %arg2: memref<16x32xf32, #tpu.memory_space<vmem>>, %arg3: memref<32x64xbf16, #tpu.memory_space<vmem>>, %arg4: memref<1x64xf32, #tpu.memory_space<vmem>>, %arg5: memref<64x32xbf16, #tpu.memory_space<vmem>>, %arg6: memref<1x32xf32, #tpu.memory_space<vmem>>, %arg7: memref<1x32xf32, #tpu.memory_space<vmem>>, %arg8: memref<1x32xf32, #tpu.memory_space<vmem>>, %arg9: memref<16x32xf32, #tpu.memory_space<vmem>>, %arg10: memref<16x32xf32, #tpu.memory_space<vmem>>) attributes {dimension_semantics = [#tpu.dimension_semantics<parallel>, #tpu.dimension_semantics<arbitrary>], iteration_bounds = array<i64: 1, 1>, scalar_prefetch = 0 : i64, scratch_operands = 1 : i64, tpu.core_type = #tpu.core_type<tc>, window_params = [{transform_indices = @transform_0, window_bounds = array<i64: 16, 32>}, {transform_indices = @transform_1, window_bounds = array<i64: 32, 64>}, {transform_indices = @transform_2, window_bounds = array<i64: 1, 64>}, {transform_indices = @transform_3, window_bounds = array<i64: 64, 32>}, {pipeline_mode = #tpu.pipeline_mode<synchronous>, transform_indices = @transform_4, window_bounds = array<i64: 1, 32>}, {pipeline_mode = #tpu.pipeline_mode<synchronous>, transform_indices = @transform_5, window_bounds = array<i64: 1, 32>}, {pipeline_mode = #tpu.pipeline_mode<synchronous>, transform_indices = @transform_6, window_bounds = array<i64: 1, 32>}, {transform_indices = @transform_7, window_bounds = array<i64: 16, 32>}]} {
    %c0_i32 = arith.constant 0 : i32
    %0 = arith.cmpi eq, %arg1, %c0_i32 : i32
    %1 = arith.extui %0 : i1 to i32
    %c0_i32_0 = arith.constant 0 : i32
    %2 = arith.cmpi ne, %1, %c0_i32_0 : i32
    scf.if %2 {
      %cst_16 = arith.constant 0.000000e+00 : f32
      %21 = vector.broadcast %cst_16 : f32 to vector<16x32xf32>
      %c0_17 = arith.constant 0 : index
      %c0_18 = arith.constant 0 : index
      %22 = vector.load %arg10[%c0_17, %c0_18] : memref<16x32xf32, #tpu.memory_space<vmem>>, vector<16x32xf32>
      tpu.vector_store %arg10[%c0_17, %c0_18], %21 {strides = array<i32>} : memref<16x32xf32, #tpu.memory_space<vmem>>, vector<16x32xf32>,
    } else {
    }
    %c0 = arith.constant 0 : index
    %c0_1 = arith.constant 0 : index
    %3 = vector.load %arg2[%c0, %c0_1] : memref<16x32xf32, #tpu.memory_space<vmem>>, vector<16x32xf32>
    %4 = arith.truncf %3 : vector<16x32xf32> to vector<16x32xbf16>
    %c0_2 = arith.constant 0 : index
    %c0_3 = arith.constant 0 : index
    %5 = vector.load %arg3[%c0_2, %c0_3] : memref<32x64xbf16, #tpu.memory_space<vmem>>, vector<32x64xbf16>
    %cst = arith.constant dense<0.000000e+00> : vector<16x64xf32>
    %6 = tpu.matmul %4, %5, %cst {dimension_numbers = #tpu.dot_dimension_numbers<[1], [0], [0], [1], [0, 0, 1, 1], [], []>} : vector<16x32xbf16>, vector<32x64xbf16>, vector<16x64xf32> -> vector<16x64xf32>
    %c0_4 = arith.constant 0 : index
    %c0_5 = arith.constant 0 : index
    %7 = vector.load %arg4[%c0_4, %c0_5] : memref<1x64xf32, #tpu.memory_space<vmem>>, vector<1x64xf32>
    %8 = vector.broadcast %7 : vector<1x64xf32> to vector<16x64xf32>
    %9 = arith.addf %6, %8 : vector<16x64xf32>
    %cst_6 = arith.constant 0.000000e+00 : f32
    %10 = vector.broadcast %cst_6 : f32 to vector<16x64xf32>
    %11 = arith.maximumf %9, %10 : vector<16x64xf32>
    %c0_7 = arith.constant 0 : index
    %c0_8 = arith.constant 0 : index
    %12 = vector.load %arg10[%c0_7, %c0_8] : memref<16x32xf32, #tpu.memory_space<vmem>>, vector<16x32xf32>
    %13 = arith.truncf %11 : vector<16x64xf32> to vector<16x64xbf16>
    %c0_9 = arith.constant 0 : index
    %c0_10 = arith.constant 0 : index
    %14 = vector.load %arg5[%c0_9, %c0_10] : memref<64x32xbf16, #tpu.memory_space<vmem>>, vector<64x32xbf16>
    %cst_11 = arith.constant dense<0.000000e+00> : vector<16x32xf32>
    %15 = tpu.matmul %13, %14, %cst_11 {dimension_numbers = #tpu.dot_dimension_numbers<[1], [0], [0], [1], [0, 0, 1, 1], [], []>} : vector<16x64xbf16>, vector<64x32xbf16>, vector<16x32xf32> -> vector<16x32xf32>
    %16 = arith.addf %12, %15 : vector<16x32xf32>
    %c0_12 = arith.constant 0 : index
    %c0_13 = arith.constant 0 : index
    %17 = vector.load %arg10[%c0_12, %c0_13] : memref<16x32xf32, #tpu.memory_space<vmem>>, vector<16x32xf32>
    tpu.vector_store %arg10[%c0_12, %c0_13], %16 {strides = array<i32>} : memref<16x32xf32, #tpu.memory_space<vmem>>, vector<16x32xf32>,
    %c0_i32_14 = arith.constant 0 : i32
    %18 = arith.cmpi eq, %arg1, %c0_i32_14 : i32
    %19 = arith.extui %18 : i1 to i32
    %c0_i32_15 = arith.constant 0 : i32
    %20 = arith.cmpi ne, %19, %c0_i32_15 : i32
    scf.if %20 {
      %c0_16 = arith.constant 0 : index
      %c0_17 = arith.constant 0 : index
      %21 = vector.load %arg10[%c0_16, %c0_17] : memref<16x32xf32, #tpu.memory_space<vmem>>, vector<16x32xf32>
      %22 = arith.addf %3, %21 : vector<16x32xf32>
      %c0_18 = arith.constant 0 : index
      %c0_19 = arith.constant 0 : index
      %23 = vector.load %arg6[%c0_18, %c0_19] : memref<1x32xf32, #tpu.memory_space<vmem>>, vector<1x32xf32>
      %24 = vector.broadcast %23 : vector<1x32xf32> to vector<16x32xf32>
      %25 = arith.addf %22, %24 : vector<16x32xf32>
      %cst_20 = arith.constant dense<0.000000e+00> : vector<16xf32>
      %26 = vector.multi_reduction <add>, %25, %cst_20 [1] : vector<16x32xf32> to vector<16xf32>
      %27 = vector.shape_cast %26 : vector<16xf32> to vector<16x1xf32>
      %cst_21 = arith.constant 3.200000e+01 : f32
      %28 = vector.broadcast %cst_21 : f32 to vector<16x1xf32>
      %29 = arith.divf %27, %28 : vector<16x1xf32>
      %30 = vector.broadcast %29 : vector<16x1xf32> to vector<16x32xf32>
      %31 = arith.subf %25, %30 : vector<16x32xf32>
      %32 = arith.mulf %31, %31 : vector<16x32xf32>
      %cst_22 = arith.constant dense<0.000000e+00> : vector<16xf32>
      %33 = vector.multi_reduction <add>, %32, %cst_22 [1] : vector<16x32xf32> to vector<16xf32>
      %34 = vector.shape_cast %33 : vector<16xf32> to vector<16x1xf32>
      %cst_23 = arith.constant 3.200000e+01 : f32
      %35 = vector.broadcast %cst_23 : f32 to vector<16x1xf32>
      %36 = arith.divf %34, %35 : vector<16x1xf32>
      %37 = vector.broadcast %29 : vector<16x1xf32> to vector<16x32xf32>
      %38 = arith.subf %25, %37 : vector<16x32xf32>
      %cst_24 = arith.constant 9.99999974E-6 : f32
      %39 = vector.broadcast %cst_24 : f32 to vector<16x1xf32>
      %40 = arith.addf %36, %39 : vector<16x1xf32>
      %41 = math.rsqrt %40 : vector<16x1xf32>
      %42 = vector.broadcast %41 : vector<16x1xf32> to vector<16x32xf32>
      %43 = arith.mulf %38, %42 : vector<16x32xf32>
      %c0_25 = arith.constant 0 : index
      %c0_26 = arith.constant 0 : index
      %44 = vector.load %arg7[%c0_25, %c0_26] : memref<1x32xf32, #tpu.memory_space<vmem>>, vector<1x32xf32>
      %45 = vector.broadcast %44 : vector<1x32xf32> to vector<16x32xf32>
      %46 = arith.mulf %43, %45 : vector<16x32xf32>
      %c0_27 = arith.constant 0 : index
      %c0_28 = arith.constant 0 : index
      %47 = vector.load %arg8[%c0_27, %c0_28] : memref<1x32xf32, #tpu.memory_space<vmem>>, vector<1x32xf32>
      %48 = vector.broadcast %47 : vector<1x32xf32> to vector<16x32xf32>
      %49 = arith.addf %46, %48 : vector<16x32xf32>
      %c0_29 = arith.constant 0 : index
      %c0_30 = arith.constant 0 : index
      %50 = vector.load %arg9[%c0_29, %c0_30] : memref<16x32xf32, #tpu.memory_space<vmem>>, vector<16x32xf32>
      tpu.vector_store %arg9[%c0_29, %c0_30], %49 {strides = array<i32>} : memref<16x32xf32, #tpu.memory_space<vmem>>, vector<16x32xf32>,
    } else {
    }
    return
  }
  func.func @transform_0(%arg0: i32, %arg1: i32) -> (i32, i32) {
    %c0_i32 = arith.constant 0 : i32
    %c0_i32_0 = arith.constant 0 : i32
    return %arg0, %c0_i32 : i32, i32
  }
  func.func @transform_1(%arg0: i32, %arg1: i32) -> (i32, i32) {
    %c0_i32 = arith.constant 0 : i32
    %c0_i32_0 = arith.constant 0 : i32
    return %c0_i32, %arg1 : i32, i32
  }
  func.func @transform_2(%arg0: i32, %arg1: i32) -> (i32, i32) {
    %c0_i32 = arith.constant 0 : i32
    %c0_i32_0 = arith.constant 0 : i32
    return %c0_i32, %arg1 : i32, i32
  }
  func.func @transform_3(%arg0: i32, %arg1: i32) -> (i32, i32) {
    %c0_i32 = arith.constant 0 : i32
    %c0_i32_0 = arith.constant 0 : i32
    return %arg1, %c0_i32 : i32, i32
  }
  func.func @transform_4(%arg0: i32, %arg1: i32) -> (i32, i32) {
    %c0_i32 = arith.constant 0 : i32
    %c0_i32_0 = arith.constant 0 : i32
    %c0_i32_1 = arith.constant 0 : i32
    return %c0_i32, %c0_i32_0 : i32, i32
  }
  func.func @transform_5(%arg0: i32, %arg1: i32) -> (i32, i32) {
    %c0_i32 = arith.constant 0 : i32
    %c0_i32_0 = arith.constant 0 : i32
    %c0_i32_1 = arith.constant 0 : i32
    return %c0_i32, %c0_i32_0 : i32, i32
  }
  func.func @transform_6(%arg0: i32, %arg1: i32) -> (i32, i32) {
    %c0_i32 = arith.constant 0 : i32
    %c0_i32_0 = arith.constant 0 : i32
    %c0_i32_1 = arith.constant 0 : i32
    return %c0_i32, %c0_i32_0 : i32, i32
  }
  func.func @transform_7(%arg0: i32, %arg1: i32) -> (i32, i32) {
    %c0_i32 = arith.constant 0 : i32
    %c0_i32_0 = arith.constant 0 : i32
    return %arg0, %c0_i32 : i32, i32
  }
}

</mosaic_0001>

<llo_original>
// kernel: transformer_decoder_forward.8
$region0: #{transformer_decoder_forward.8}
  #allocation0 [shape = 'u32[]', space=smem, size = 0x4, offset = 0x4, fixed_abs, tag = 'smem constant byte address 0x4 - core index']
  #allocation1 [shape = 'u32[144,128]{1,0:T(1,128)}', space=vmem, size = 0x12000, scoped, tag = 'internal scratch']
  #allocation2 [shape = 'f32[16,32]{1,0:T(8,128)}', space=vmem, size = 0x2000, scoped, tag = 'scratch operand']
  %s0 = inlined_call_operand.hbm [shape: f32[16,32], index: 0, kind: input, shape index: {}]
  %s1 = inlined_call_operand.hbm [shape: bf16[32,64], index: 1, kind: input, shape index: {}]
  %s2 = inlined_call_operand.hbm [shape: f32[1,64], index: 2, kind: input, shape index: {}]
  %s3 = inlined_call_operand.hbm [shape: bf16[64,32], index: 3, kind: input, shape index: {}]
  %s4 = inlined_call_operand.hbm [shape: f32[1,32], index: 4, kind: input, shape index: {}]
  %s5 = inlined_call_operand.hbm [shape: f32[1,32], index: 5, kind: input, shape index: {}]
  %s6 = inlined_call_operand.hbm [shape: f32[1,32], index: 6, kind: input, shape index: {}]
  %s7 = inlined_call_operand.hbm [shape: f32[16,32], index: 7, kind: output, shape index: {}]
  %s8 = sld [smem:[#allocation0]]
  $region74: #{transformer_decoder_forward.8} parent=0
    _
  %s10 = ssub.s32 1, %s8
  %s11 = scalar_select 0, %s10, %s8
  $region1: #{transformer_decoder_forward.8} parent=0
    #allocation3 [shape = 'u8[8192]{0}', space=vmem, size = 0x2000, scoped, tag = 'input window, operand 0, single buffered']
    #allocation4 [shape = 's32[1]{0}', space=sflag, size = 0x4, scoped, tag = 'scoped memory for transformer_decoder_forward.8']
    #allocation5 [shape = 's32[1]{0}', space=sflag, size = 0x4, scoped, tag = 'scoped memory for transformer_decoder_forward.8']
    #allocation6 [shape = 'u8[8192]{0}', space=vmem, size = 0x2000, scoped, tag = 'input window, operand 1, single buffered']
    #allocation7 [shape = 's32[1]{0}', space=sflag, size = 0x4, scoped, tag = 'scoped memory for transformer_decoder_forward.8']
    #allocation8 [shape = 'u8[512]{0}', space=vmem, size = 0x400, scoped, tag = 'input window, operand 2, single buffered']
    #allocation9 [shape = 'u8[16384]{0}', space=vmem, size = 0x4000, scoped, tag = 'input window, operand 3, single buffered']
    #allocation10 [shape = 's32[1]{0}', space=sflag, size = 0x4, scoped, tag = 'scoped memory for transformer_decoder_forward.8']
    #allocation11 [shape = 'u8[512]{0}', space=vmem, size = 0x400, scoped, tag = 'input window, operand 4, single buffered']
    #allocation12 [shape = 'u8[512]{0}', space=vmem, size = 0x400, scoped, tag = 'input window, operand 5, single buffered']
    #allocation13 [shape = 's32[1]{0}', space=sflag, size = 0x4, scoped, tag = 'scoped memory for transformer_decoder_forward.8']
    #allocation14 [shape = 'u8[512]{0}', space=vmem, size = 0x400, scoped, tag = 'input window, operand 6, single buffered']
    #allocation15 [shape = 'u8[8192]{0}', space=vmem, size = 0x2000, scoped, tag = 'output window, operand 0, single buffered']
    %12 = vsyncpa [#allocation4], 0
    %13 = vsyncpa [#allocation7], 0
    %14 = vsyncpa [#allocation10], 0
    %15 = vsyncpa [#allocation13], 0
    %16 = vsyncpa [#allocation5], 0
    // Predicated region
    $region2: #{transformer_decoder_forward.8} parent=1 // pred_check
      _
    $region3: #{transformer_decoder_forward.8} parent=1 // pred_check_branch
      %18 = sbr.rel (0) target = $region5
    $region4: #{transformer_decoder_forward.8} parent=1 // pred_region
      %s20 = ssub.s32 256, 256
      %21 = vsyncadd [#allocation4], %s20
      %s22 = sshll.u32 [#allocation3], 4
      %s23 = int_to_ptr.vmem [resolvable:$true] %s22
      %28 = dma.hbm_to_vmem [thread:$0]  %s0, 256, %s23, [#allocation4], 128, 128, 8
    $region5: #{transformer_decoder_forward.8} parent=1 // pred_fallthru
      _
    // Predicated region
    $region6: #{transformer_decoder_forward.8} parent=1 // pred_check
      _
    $region7: #{transformer_decoder_forward.8} parent=1 // pred_check_branch
      %30 = sbr.rel (0) target = $region9
    $region8: #{transformer_decoder_forward.8} parent=1 // pred_region
      %s32 = ssub.s32 256, 256
      %33 = vsyncadd [#allocation7], %s32
      %s34 = sshll.u32 [#allocation6], 4
      %s35 = int_to_ptr.vmem [resolvable:$true] %s34
      %40 = dma.hbm_to_vmem [thread:$0]  %s1, 256, %s35, [#allocation7], 64, 64, 4
    $region9: #{transformer_decoder_forward.8} parent=1 // pred_fallthru
      _
    // Predicated region
    $region10: #{transformer_decoder_forward.8} parent=1 // pred_check
      _
    $region11: #{transformer_decoder_forward.8} parent=1 // pred_check_branch
      %42 = sbr.rel (0) target = $region13
    $region12: #{transformer_decoder_forward.8} parent=1 // pred_region
      %s44 = ssub.s32 16, 16
      %45 = vsyncadd [#allocation7], %s44
      %s47 = sshll.u32 [#allocation8], 4
      %s48 = int_to_ptr.vmem [resolvable:$true] %s47
      %50 = dma.hbm_to_vmem [thread:$0]  %s2, 16, %s48, [#allocation7]
    $region13: #{transformer_decoder_forward.8} parent=1 // pred_fallthru
      _
    // Predicated region
    $region14: #{transformer_decoder_forward.8} parent=1 // pred_check
      _
    $region15: #{transformer_decoder_forward.8} parent=1 // pred_check_branch
      %52 = sbr.rel (0) target = $region17
    $region16: #{transformer_decoder_forward.8} parent=1 // pred_region
      %s54 = ssub.s32 512, 512
      %55 = vsyncadd [#allocation10], %s54
      %s56 = sshll.u32 [#allocation9], 4
      %s57 = int_to_ptr.vmem [resolvable:$true] %s56
      %62 = dma.hbm_to_vmem [thread:$0]  %s3, 512, %s57, [#allocation10], 64, 64, 4
    $region17: #{transformer_decoder_forward.8} parent=1 // pred_fallthru
      _
    // Predicated region
    $region18: #{transformer_decoder_forward.8} parent=1 // pred_check
      _
    $region19: #{transformer_decoder_forward.8} parent=1 // pred_check_branch
      %64 = sbr.rel (0) target = $region21
    $region20: #{transformer_decoder_forward.8} parent=1 // pred_region
      %s66 = ssub.s32 16, 16
      %67 = vsyncadd [#allocation10], %s66
      %s69 = sshll.u32 [#allocation11], 4
      %s70 = int_to_ptr.vmem [resolvable:$true] %s69
      %72 = dma.hbm_to_vmem [thread:$0]  %s4, 16, %s70, [#allocation10]
    $region21: #{transformer_decoder_forward.8} parent=1 // pred_fallthru
      _
    // Predicated region
    $region22: #{transformer_decoder_forward.8} parent=1 // pred_check
      _
    $region23: #{transformer_decoder_forward.8} parent=1 // pred_check_branch
      %74 = sbr.rel (0) target = $region25
    $region24: #{transformer_decoder_forward.8} parent=1 // pred_region
      %s76 = ssub.s32 16, 16
      %77 = vsyncadd [#allocation13], %s76
      %s79 = sshll.u32 [#allocation12], 4
      %s80 = int_to_ptr.vmem [resolvable:$true] %s79
      %82 = dma.hbm_to_vmem [thread:$0]  %s5, 16, %s80, [#allocation13]
    $region25: #{transformer_decoder_forward.8} parent=1 // pred_fallthru
      _
    // Predicated region
    $region26: #{transformer_decoder_forward.8} parent=1 // pred_check
      _
    $region27: #{transformer_decoder_forward.8} parent=1 // pred_check_branch
      %84 = sbr.rel (0) target = $region29
    $region28: #{transformer_decoder_forward.8} parent=1 // pred_region
      %s86 = ssub.s32 16, 16
      %87 = vsyncadd [#allocation13], %s86
      %s89 = sshll.u32 [#allocation14], 4
      %s90 = int_to_ptr.vmem [resolvable:$true] %s89
      %92 = dma.hbm_to_vmem [thread:$0]  %s6, 16, %s90, [#allocation13]
    $region29: #{transformer_decoder_forward.8} parent=1 // pred_fallthru
      _
    // Predicated region
    $region30: #{transformer_decoder_forward.8} parent=1 // pred_check
      _
    $region31: #{transformer_decoder_forward.8} parent=1 // pred_check_branch
      %94 = sbr.rel (0) target = $region33
    $region32: #{transformer_decoder_forward.8} parent=1 // pred_region
      %95 = dma.done [#allocation4], 256
    $region33: #{transformer_decoder_forward.8} parent=1 // pred_fallthru
      _
    // Predicated region
    $region34: #{transformer_decoder_forward.8} parent=1 // pred_check
      _
    $region35: #{transformer_decoder_forward.8} parent=1 // pred_check_branch
      %97 = sbr.rel (0) target = $region37
    $region36: #{transformer_decoder_forward.8} parent=1 // pred_region
      %98 = dma.done [#allocation7], 256
    $region37: #{transformer_decoder_forward.8} parent=1 // pred_fallthru
      _
    // Predicated region
    $region38: #{transformer_decoder_forward.8} parent=1 // pred_check
      _
    $region39: #{transformer_decoder_forward.8} parent=1 // pred_check_branch
      %100 = sbr.rel (0) target = $region41
    $region40: #{transformer_decoder_forward.8} parent=1 // pred_region
      %101 = dma.done [#allocation7], 16
    $region41: #{transformer_decoder_forward.8} parent=1 // pred_fallthru
      _
    // Predicated region
    $region42: #{transformer_decoder_forward.8} parent=1 // pred_check
      _
    $region43: #{transformer_decoder_forward.8} parent=1 // pred_check_branch
      %103 = sbr.rel (0) target = $region45
    $region44: #{transformer_decoder_forward.8} parent=1 // pred_region
      %104 = dma.done [#allocation10], 512
    $region45: #{transformer_decoder_forward.8} parent=1 // pred_fallthru
      _
    // Predicated region
    $region46: #{transformer_decoder_forward.8} parent=1 // pred_check
      _
    $region47: #{transformer_decoder_forward.8} parent=1 // pred_check_branch
      %106 = sbr.rel (0) target = $region49
    $region48: #{transformer_decoder_forward.8} parent=1 // pred_region
      %107 = dma.done [#allocation10], 16
    $region49: #{transformer_decoder_forward.8} parent=1 // pred_fallthru
      _
    // Predicated region
    $region50: #{transformer_decoder_forward.8} parent=1 // pred_check
      _
    $region51: #{transformer_decoder_forward.8} parent=1 // pred_check_branch
      %109 = sbr.rel (0) target = $region53
    $region52: #{transformer_decoder_forward.8} parent=1 // pred_region
      %110 = dma.done [#allocation13], 16
    $region53: #{transformer_decoder_forward.8} parent=1 // pred_fallthru
      _
    // Predicated region
    $region54: #{transformer_decoder_forward.8} parent=1 // pred_check
      _
    $region55: #{transformer_decoder_forward.8} parent=1 // pred_check_branch
      %112 = sbr.rel (0) target = $region57
    $region56: #{transformer_decoder_forward.8} parent=1 // pred_region
      %113 = dma.done [#allocation13], 16
    $region57: #{transformer_decoder_forward.8} parent=1 // pred_fallthru
      _
    %p115 = scmp.eq.s32.totalorder 0, 0
    // Predicated region
    $region58: #{transformer_decoder_forward.8} parent=1 // pred_check
      %p116 = pneg %p115
    $region59: #{transformer_decoder_forward.8} parent=1 // pred_check_branch
      %118 = sbr.rel (%p116) target = $region61
    $region60: #{transformer_decoder_forward.8} parent=1 // pred_region
      %vm119 = vcmask 261120
      %120 = vst.msk [vmem:[#allocation2] sm:$0xff] %vm119, 0.0
      %121 = vst.msk [vmem:[#allocation2 + $0x8] sm:$0xff] %vm119, 0.0
    $region61: #{transformer_decoder_forward.8} parent=1 // pred_fallthru
      _
    %v122 = vld [vmem:[#allocation3] sm:$0xff]
    %v123 = vld [vmem:[#allocation3 + $0x8] sm:$0xff]
    %v124 = vpack.c.bf16 %v123, %v122
    %v125 = vld [vmem:[#allocation6] sm:$0xf]
    %v126 = vld [vmem:[#allocation6 + $0x4] sm:$0xf]
    %v127 = vld [vmem:[#allocation6 + $0x8] sm:$0xf]
    %v128 = vld [vmem:[#allocation6 + $0xc] sm:$0xf]
    %v129 = vld [vmem:[#allocation8] sm:$0x1]
    %v131 = vlaneseq
    %v132 = vshrl.u32 %v131, 7
    %v133 = vsub.s32 0, %v132
    %v134 = vrot.slane %v129, %v133
    %v140 = vunpack.c.l.b16 %v125
    %v141 = vunpack.c.l.b16 %v126
    %v142 = vunpack.c.l.b16 %v127
    %v143 = vunpack.c.l.b16 %v128
    %v144 = vpack.c.b16 %v141, %v140
    %v145 = vpack.c.b16 %v143, %v142
    %vm148 = vcmask 261120
    %v150 = vsel %vm148, %v124, 0
    %152 = vmatprep.subr.bf16.mxu0 0
    %153 = vmatpush1.bf16.msra.mxu0 %v144
    %154 = vmatprep.subr.bf16.mxu0 0
    %155 = vmatpush1.bf16.msra.mxu0 %v145
    %156 = vmatprep.subr.bf16.mxu0 0
    %157 = vmatpush1.bf16.msra.mxu0 0
    %158 = vmatprep.subr.bf16.mxu0 0
    %159 = vmatpush1.bf16.msra.mxu0 0
    %160 = vmatprep.subr.bf16.mxu0 0
    %161 = vmatpush1.bf16.msra.mxu0 0
    %162 = vmatprep.subr.bf16.mxu0 0
    %163 = vmatpush1.bf16.msra.mxu0 0
    %164 = vmatprep.subr.bf16.mxu0 0
    %165 = vmatpush1.bf16.msra.mxu0 0
    %166 = vmatprep.subr.bf16.mxu0 0
    %167 = vmatpush1.bf16.msra.mxu0 0
    %168 = vmatprep.subr.bf16.mxu0 0
    %169 = vmatpush1.bf16.msra.mxu0 0
    %170 = vmatprep.subr.bf16.mxu0 0
    %171 = vmatpush1.bf16.msra.mxu0 0
    %172 = vmatprep.subr.bf16.mxu0 0
    %173 = vmatpush1.bf16.msra.mxu0 0
    %174 = vmatprep.subr.bf16.mxu0 0
    %175 = vmatpush1.bf16.msra.mxu0 0
    %176 = vmatprep.subr.bf16.mxu0 0
    %177 = vmatpush1.bf16.msra.mxu0 0
    %178 = vmatprep.subr.bf16.mxu0 0
    %179 = vmatpush1.bf16.msra.mxu0 0
    %180 = vmatprep.subr.bf16.mxu0 0
    %181 = vmatpush1.bf16.msra.mxu0 0
    %182 = vmatprep.subr.bf16.mxu0 0
    %183 = vmatpush1.bf16.msra.mxu0 0
    %184 = vmatprep.mubr.bf16.mxu0 0
    %185 = vmatmul.mubr.bf16.gmra.mrb[0].mxu0 %v150
    %v186 = vpop.f32.mrb[0].mxu0
    %v187 = vadd.f32 %v134, %v186
    %v188 = vpop.f32.mrb[0].mxu0
    %v189 = vpop.f32.mrb[0].mxu0
    %v190 = vadd.f32 %v134, %v189
    %v191 = vpop.f32.mrb[0].mxu0
    %192 = vdwg.mxu0
    %v193 = vmax.f32 %v187, 0.0
    %v194 = vmax.f32 %v190, 0.0
    %v195 = vld [vmem:[#allocation2] sm:$0xff]
    %v196 = vld [vmem:[#allocation2 + $0x8] sm:$0xff]
    %v197 = vpack.c.bf16 %v194, %v193
    %v198 = vld [vmem:[#allocation9] sm:$0xf]
    %v199 = vld [vmem:[#allocation9 + $0x4] sm:$0xf]
    %v200 = vld [vmem:[#allocation9 + $0x8] sm:$0xf]
    %v201 = vld [vmem:[#allocation9 + $0xc] sm:$0xf]
    %v202 = vld [vmem:[#allocation9 + $0x10] sm:$0xf]
    %v203 = vld [vmem:[#allocation9 + $0x14] sm:$0xf]
    %v204 = vld [vmem:[#allocation9 + $0x18] sm:$0xf]
    %v205 = vld [vmem:[#allocation9 + $0x1c] sm:$0xf]
    %v214 = vunpack.c.l.b16 %v198
    %v215 = vunpack.c.l.b16 %v199
    %v216 = vunpack.c.l.b16 %v200
    %v217 = vunpack.c.l.b16 %v201
    %v218 = vunpack.c.l.b16 %v202
    %v219 = vunpack.c.l.b16 %v203
    %v220 = vunpack.c.l.b16 %v204
    %v221 = vunpack.c.l.b16 %v205
    %v222 = vpack.c.b16 %v215, %v214
    %v223 = vpack.c.b16 %v217, %v216
    %v224 = vpack.c.b16 %v219, %v218
    %v225 = vpack.c.b16 %v221, %v220
    %vm230 = vcmask 523264
    %v232 = vsel %vm230, %v197, 0
    %234 = vmatprep.subr.bf16.mxu0 0
    %235 = vmatpush1.bf16.msra.mxu0 %v222
    %236 = vmatprep.subr.bf16.mxu0 0
    %237 = vmatpush1.bf16.msra.mxu0 %v223
    %238 = vmatprep.subr.bf16.mxu0 0
    %239 = vmatpush1.bf16.msra.mxu0 %v224
    %240 = vmatprep.subr.bf16.mxu0 0
    %241 = vmatpush1.bf16.msra.mxu0 %v225
    %242 = vmatprep.subr.bf16.mxu0 0
    %243 = vmatpush1.bf16.msra.mxu0 0
    %244 = vmatprep.subr.bf16.mxu0 0
    %245 = vmatpush1.bf16.msra.mxu0 0
    %246 = vmatprep.subr.bf16.mxu0 0
    %247 = vmatpush1.bf16.msra.mxu0 0
    %248 = vmatprep.subr.bf16.mxu0 0
    %249 = vmatpush1.bf16.msra.mxu0 0
    %250 = vmatprep.subr.bf16.mxu0 0
    %251 = vmatpush1.bf16.msra.mxu0 0
    %252 = vmatprep.subr.bf16.mxu0 0
    %253 = vmatpush1.bf16.msra.mxu0 0
    %254 = vmatprep.subr.bf16.mxu0 0
    %255 = vmatpush1.bf16.msra.mxu0 0
    %256 = vmatprep.subr.bf16.mxu0 0
    %257 = vmatpush1.bf16.msra.mxu0 0
    %258 = vmatprep.subr.bf16.mxu0 0
    %259 = vmatpush1.bf16.msra.mxu0 0
    %260 = vmatprep.subr.bf16.mxu0 0
    %261 = vmatpush1.bf16.msra.mxu0 0
    %262 = vmatprep.subr.bf16.mxu0 0
    %263 = vmatpush1.bf16.msra.mxu0 0
    %264 = vmatprep.subr.bf16.mxu0 0
    %265 = vmatpush1.bf16.msra.mxu0 0
    %266 = vmatprep.mubr.bf16.mxu0 0
    %267 = vmatmul.mubr.bf16.gmra.mrb[0].mxu0 %v232
    %v268 = vpop.f32.mrb[0].mxu0
    %v269 = vadd.f32 0.0, %v268
    %v270 = vpop.f32.mrb[0].mxu0
    %v271 = vpop.f32.mrb[0].mxu0
    %v272 = vadd.f32 0.0, %v271
    %v273 = vpop.f32.mrb[0].mxu0
    %274 = vdwg.mxu0
    %v275 = vadd.f32 %v195, %v269
    %v276 = vadd.f32 %v196, %v272
    %277 = vst.msk [vmem:[#allocation2] sm:$0xff] %vm148, %v275
    %278 = vst.msk [vmem:[#allocation2 + $0x8] sm:$0xff] %vm148, %v276
    // Predicated region
    $region62: #{transformer_decoder_forward.8} parent=1 // pred_check
      %p279 = pneg %p115
    $region63: #{transformer_decoder_forward.8} parent=1 // pred_check_branch
      %281 = sbr.rel (%p279) target = $region65
    $region64: #{transformer_decoder_forward.8} parent=1 // pred_region
      %v282 = vld [vmem:[#allocation2] sm:$0xff]
      %v283 = vld [vmem:[#allocation2 + $0x8] sm:$0xff]
      %v284 = vadd.f32 %v122, %v282
      %v285 = vadd.f32 %v123, %v283
      %v286 = vld [vmem:[#allocation11] sm:$0x1]
      %v288 = vlaneseq
      %v289 = vshrl.u32 %v288, 7
      %v290 = vsub.s32 0, %v289
      %v291 = vrot.slane %v286, %v290
      %v293 = vadd.f32 %v284, %v291
      %v294 = vadd.f32 %v285, %v291
      %v295 = vsel %vm148, %v293, 0.0
      %296 = vadd.xlane.f32.xlu0 %v295
      %v297 = vpop.xlane.xlu0 %296
      %v298 = vsel %vm148, %v294, 0.0
      %299 = vadd.xlane.f32.xlu0 %v298
      %v300 = vpop.xlane.xlu0 %299
      %v301 = vrcp.pop 32.0
      %v302 = vmul.f32 %v297, %v301
      %v303 = vmul.f32 %v300, %v301
      %v304 = vsub.f32 %v293, %v302
      %v305 = vsub.f32 %v294, %v303
      %v306 = vmul.f32 %v304, %v304
      %v307 = vmul.f32 %v305, %v305
      %v308 = vsel %vm148, %v306, 0.0
      %309 = vadd.xlane.f32.xlu0 %v308
      %v310 = vpop.xlane.xlu0 %309
      %v311 = vsel %vm148, %v307, 0.0
      %312 = vadd.xlane.f32.xlu0 %v311
      %v313 = vpop.xlane.xlu0 %312
      %v314 = vmul.f32 %v310, %v301
      %v315 = vmul.f32 %v313, %v301
      %v316 = vadd.f32 %v314, 1e-05
      %v317 = vadd.f32 %v315, 1e-05
      %v318 = vrsqrt.pop %v316
      %v319 = vrsqrt.pop %v317
      %v320 = vmul.f32 %v304, %v318
      %v321 = vmul.f32 %v305, %v319
      %v322 = vld [vmem:[#allocation12] sm:$0x1]
      %v324 = vlaneseq
      %v325 = vshrl.u32 %v324, 7
      %v326 = vsub.s32 0, %v325
      %v327 = vrot.slane %v322, %v326
      %v329 = vmul.f32 %v320, %v327
      %v330 = vmul.f32 %v321, %v327
      %v331 = vld [vmem:[#allocation14] sm:$0x1]
      %v333 = vlaneseq
      %v334 = vshrl.u32 %v333, 7
      %v335 = vsub.s32 0, %v334
      %v336 = vrot.slane %v331, %v335
      %v338 = vadd.f32 %v329, %v336
      %v339 = vadd.f32 %v330, %v336
      %340 = vst.msk [vmem:[#allocation15] sm:$0xff] %vm148, %v338
      %341 = vst.msk [vmem:[#allocation15 + $0x8] sm:$0xff] %vm148, %v339
    $region65: #{transformer_decoder_forward.8} parent=1 // pred_fallthru
      _
    // Predicated region
    $region66: #{transformer_decoder_forward.8} parent=1 // pred_check
      _
    $region67: #{transformer_decoder_forward.8} parent=1 // pred_check_branch
      %343 = sbr.rel (0) target = $region69
    $region68: #{transformer_decoder_forward.8} parent=1 // pred_region
      %s345 = ssub.s32 256, 256
      %346 = vsyncadd [#allocation5], %s345
      %s347 = sshll.u32 [#allocation15], 4
      %s348 = int_to_ptr.vmem [resolvable:$true] %s347
      %353 = dma.vmem_to_hbm [thread:$0]  %s348, 256, %s7, [#allocation5], 128, 128, 8
    $region69: #{transformer_decoder_forward.8} parent=1 // pred_fallthru
      _
    // Predicated region
    $region70: #{transformer_decoder_forward.8} parent=1 // pred_check
      _
    $region71: #{transformer_decoder_forward.8} parent=1 // pred_check_branch
      %355 = sbr.rel (0) target = $region73
    $region72: #{transformer_decoder_forward.8} parent=1 // pred_region
      %356 = dma.done [#allocation5], 256
    $region73: #{transformer_decoder_forward.8} parent=1 // pred_fallthru
      _
    %357 = vsyncpa [#allocation4], 1
    %358 = vsyncpa [#allocation7], 1
    %359 = vsyncpa [#allocation10], 1
    %360 = vsyncpa [#allocation13], 1
    %361 = vsyncpa [#allocation5], 1

// kernel: transformer_decoder_forward.6
$region0: #{transformer_decoder_forward.6}
  #allocation0 [shape = 'u32[]', space=smem, size = 0x4, offset = 0x4, fixed_abs, tag = 'smem constant byte address 0x4 - core index']
  #allocation1 [shape = 'u32[144,128]{1,0:T(1,128)}', space=vmem, size = 0x12000, scoped, tag = 'internal scratch']
  %s0 = inlined_call_operand.hbm [shape: f32[2,8,32], index: 0, kind: input, shape index: {}, may-alias: {0,1}]
  %s1 = inlined_call_operand.hbm [shape: f32[2,8,32], index: 1, kind: input, shape index: {}, may-alias: {0,1}]
  %s2 = inlined_call_operand.hbm [shape: f32[2,8,8], index: 2, kind: input, shape index: {}]
  %s3 = inlined_call_operand.hbm [shape: bf16[32,32], index: 3, kind: input, shape index: {}]
  %s4 = inlined_call_operand.hbm [shape: f32[1,32], index: 4, kind: input, shape index: {}]
  %s5 = inlined_call_operand.hbm [shape: bf16[32,32], index: 5, kind: input, shape index: {}]
  %s6 = inlined_call_operand.hbm [shape: f32[1,32], index: 6, kind: input, shape index: {}]
  %s7 = inlined_call_operand.hbm [shape: bf16[32,32], index: 7, kind: input, shape index: {}]
  %s8 = inlined_call_operand.hbm [shape: f32[1,32], index: 8, kind: input, shape index: {}]
  %s9 = inlined_call_operand.hbm [shape: bf16[32,32], index: 9, kind: input, shape index: {}]
  %s10 = inlined_call_operand.hbm [shape: f32[1,32], index: 10, kind: input, shape index: {}]
  %s11 = inlined_call_operand.hbm [shape: f32[1,32], index: 11, kind: input, shape index: {}]
  %s12 = inlined_call_operand.hbm [shape: f32[1,32], index: 12, kind: input, shape index: {}]
  %s13 = inlined_call_operand.hbm [shape: f32[2,8,32], index: 13, kind: output, shape index: {}]
  %s14 = sld [smem:[#allocation0]]
  $region137: #{transformer_decoder_forward.6} parent=0
    _
  %s16 = ssub.s32 1, %s14
  %s17 = scalar_select 0, %s16, %s14
  $region1: #{transformer_decoder_forward.6} parent=0
    #allocation2 [shape = 'u8[8192]{0}', space=vmem, size = 0x2000, scoped, tag = 'input window, operand 0']
    #allocation3 [shape = 's32[2]{0}', space=sflag, size = 0x8, scoped, tag = 'scoped memory for transformer_decoder_forward.6']
    #allocation4 [shape = 's32[2]{0}', space=sflag, size = 0x8, scoped, tag = 'scoped memory for transformer_decoder_forward.6']
    #allocation5 [shape = 'u8[8192]{0}', space=vmem, size = 0x2000, scoped, tag = 'input window, operand 1']
    #allocation6 [shape = 's32[2]{0}', space=sflag, size = 0x8, scoped, tag = 'scoped memory for transformer_decoder_forward.6']
    #allocation7 [shape = 'u8[8192]{0}', space=vmem, size = 0x2000, scoped, tag = 'input window, operand 2']
    #allocation8 [shape = 'u8[8192]{0}', space=vmem, size = 0x2000, scoped, tag = 'input window, operand 3, single buffered']
    #allocation9 [shape = 's32[1]{0}', space=sflag, size = 0x4, scoped, tag = 'scoped memory for transformer_decoder_forward.6']
    #allocation10 [shape = 'u8[512]{0}', space=vmem, size = 0x400, scoped, tag = 'input window, operand 4, single buffered']
    #allocation11 [shape = 'u8[8192]{0}', space=vmem, size = 0x2000, scoped, tag = 'input window, operand 5, single buffered']
    #allocation12 [shape = 's32[1]{0}', space=sflag, size = 0x4, scoped, tag = 'scoped memory for transformer_decoder_forward.6']
    #allocation13 [shape = 'u8[512]{0}', space=vmem, size = 0x400, scoped, tag = 'input window, operand 6, single buffered']
    #allocation14 [shape = 'u8[8192]{0}', space=vmem, size = 0x2000, scoped, tag = 'input window, operand 7, single buffered']
    #allocation15 [shape = 's32[1]{0}', space=sflag, size = 0x4, scoped, tag = 'scoped memory for transformer_decoder_forward.6']
    #allocation16 [shape = 'u8[512]{0}', space=vmem, size = 0x400, scoped, tag = 'input window, operand 8, single buffered']
    #allocation17 [shape = 'u8[8192]{0}', space=vmem, size = 0x2000, scoped, tag = 'input window, operand 9, single buffered']
    #allocation18 [shape = 's32[1]{0}', space=sflag, size = 0x4, scoped, tag = 'scoped memory for transformer_decoder_forward.6']
    #allocation19 [shape = 'u8[512]{0}', space=vmem, size = 0x400, scoped, tag = 'input window, operand 10, single buffered']
    #allocation20 [shape = 'u8[512]{0}', space=vmem, size = 0x400, scoped, tag = 'input window, operand 11, single buffered']
    #allocation21 [shape = 's32[1]{0}', space=sflag, size = 0x4, scoped, tag = 'scoped memory for transformer_decoder_forward.6']
    #allocation22 [shape = 'u8[512]{0}', space=vmem, size = 0x400, scoped, tag = 'input window, operand 12, single buffered']
    #allocation23 [shape = 'u8[8192]{0}', space=vmem, size = 0x2000, scoped, tag = 'output window, operand 0']
    %18 = vsyncpa [#allocation3], 0
    %s19 = scalar_lea.sflag [#allocation3], 1
    %20 = vsyncpa %s19, 0
    %21 = vsyncpa [#allocation6], 0
    %s22 = scalar_lea.sflag [#allocation6], 1
    %23 = vsyncpa %s22, 0
    %24 = vsyncpa [#allocation9], 0
    %25 = vsyncpa [#allocation12], 0
    %26 = vsyncpa [#allocation15], 0
    %27 = vsyncpa [#allocation18], 0
    %28 = vsyncpa [#allocation21], 0
    %29 = vsyncpa [#allocation4], 0
    %s30 = scalar_lea.sflag [#allocation4], 1
    %31 = vsyncpa %s30, 0
    loop: start=0, step=1, limit=4
    $region2: #{transformer_decoder_forward.6} parent=1 // loop_pre_header
      _
    $region3: #{transformer_decoder_forward.6} parent=1 // loop_header
      %s33 = sphi 0, %s37
      %p34 = scmp.ge.s32.totalorder %s33, 4
      %s40 = sphi 0, %s52
      %s41 = sphi 0, %s48
      %s42 = sphi 0, %s40
      %s43 = sphi 0, %s41
      %s44 = sphi 0, %s42
      %s45 = sphi 0, %s43
      %s57 = sphi 0, %s59
      %s60 = sphi 0, %s57
      %s61 = sphi 0, %s60
      %s77 = sphi 0, %s61
      %s83 = sphi 0, %s85
      %s86 = sphi 0, %s83
      %s87 = sphi 0, %s86
      %s103 = sphi 0, %s87
      %s111 = sphi 0, %s113
      %s114 = sphi 0, %s111
      %s115 = sphi 0, %s114
      %s131 = sphi 0, %s115
      %s135 = sphi 0, %s135
      %s137 = sphi 0, %s135
      %s138 = sphi 0, %s137
      %s152 = sphi 0, %s138
      %s156 = sphi 0, %s156
      %s158 = sphi 0, %s156
      %s159 = sphi 0, %s158
      %s173 = sphi 0, %s159
      %s177 = sphi 0, %s177
      %s179 = sphi 0, %s177
      %s180 = sphi 0, %s179
      %s194 = sphi 0, %s180
      %s198 = sphi 0, %s198
      %s200 = sphi 0, %s198
      %s201 = sphi 0, %s200
      %s215 = sphi 0, %s201
      %s219 = sphi 0, %s219
      %s221 = sphi 0, %s219
      %s222 = sphi 0, %s221
      %s236 = sphi 0, %s222
      %s240 = sphi 0, %s240
      %s242 = sphi 0, %s240
      %s243 = sphi 0, %s242
      %s257 = sphi 0, %s243
      %s261 = sphi 0, %s261
      %s263 = sphi 0, %s261
      %s264 = sphi 0, %s263
      %s278 = sphi 0, %s264
      %s282 = sphi 0, %s282
      %s284 = sphi 0, %s282
      %s285 = sphi 0, %s284
      %s299 = sphi 0, %s285
      %s303 = sphi 0, %s303
      %s305 = sphi 0, %s303
      %s306 = sphi 0, %s305
      %s320 = sphi 0, %s306
      %s324 = sphi 0, %s324
      %s326 = sphi 0, %s324
      %s327 = sphi 0, %s326
      %s341 = sphi 0, %s327
      %s349 = sphi 0, %s351
      %s352 = sphi 0, %s349
      %s353 = sphi 0, %s352
      %s369 = sphi 0, %s353
    $region4: #{transformer_decoder_forward.6} parent=1 // loop_header_branch
      %36 = sbr.rel (%p34) target = $region8
    $region5: #{transformer_decoder_forward.6} parent=1 // loop_body
      %s38 = ssub.s32 %s33, 1
      %s39 = ssub.s32 %s33, 2
      %s46 = sadd.s32 1, %s41
      %p47 = scmp.ge.s32.totalorder %s46, 1
      %s48 = scalar_select %p47, 0, %s46
      %s49 = sadd.s32 1, %s40
      %s50 = scalar_select %p47, %s49, %s40
      %p51 = scmp.ge.s32.totalorder %s50, 2
      %s52 = scalar_select %p51, 0, %s50
      %s53 = ssub.s32 %s40, %s52
      %s54 = ssub.s32 %s41, %s48
      %s55 = sor.u32 %s53, %s54
      %p56 = scmp.eq.s32.totalorder %s55, 0
      %s58 = sadd.s32 %s57, 1
      %s59 = scalar_select %p56, %s57, %s58
      %p62 = pneg %p56
      %p63 = scmp.eq.s32.totalorder %s33, 1
      %p64 = por %p62, %p63
      %p65 = scmp.ne.s32.totalorder %s57, %s60
      %p66 = scmp.eq.s32.totalorder %s33, 0
      %p67 = por %p65, %p66
      %p68 = scmp.ne.s32.totalorder %s57, %s60
      %p69 = scmp.eq.s32.totalorder %s38, 1
      %p70 = por %p68, %p69
      %p71 = scmp.ne.s32.totalorder %s60, %s61
      %p72 = scmp.eq.s32.totalorder %s38, 0
      %p73 = por %p71, %p72
      %p74 = scmp.ne.s32.totalorder %s60, %s61
      %p75 = scmp.eq.s32.totalorder %s39, 1
      %p76 = por %p74, %p75
      %p78 = scmp.ne.s32.totalorder %s61, %s77
      %p79 = scmp.eq.s32.totalorder %s39, 0
      %p80 = por %p78, %p79
      %s81 = ssub.s32 %s40, %s52
      %p82 = scmp.eq.s32.totalorder %s81, 0
      %s84 = sadd.s32 %s83, 1
      %s85 = scalar_select %p82, %s83, %s84
      %p88 = pneg %p82
      %p89 = scmp.eq.s32.totalorder %s33, 1
      %p90 = por %p88, %p89
      %p91 = scmp.ne.s32.totalorder %s83, %s86
      %p92 = scmp.eq.s32.totalorder %s33, 0
      %p93 = por %p91, %p92
      %p94 = scmp.ne.s32.totalorder %s83, %s86
      %p95 = scmp.eq.s32.totalorder %s38, 1
      %p96 = por %p94, %p95
      %p97 = scmp.ne.s32.totalorder %s86, %s87
      %p98 = scmp.eq.s32.totalorder %s38, 0
      %p99 = por %p97, %p98
      %p100 = scmp.ne.s32.totalorder %s86, %s87
      %p101 = scmp.eq.s32.totalorder %s39, 1
      %p102 = por %p100, %p101
      %p104 = scmp.ne.s32.totalorder %s87, %s103
      %p105 = scmp.eq.s32.totalorder %s39, 0
      %p106 = por %p104, %p105
      %s107 = ssub.s32 %s40, %s52
      %s108 = ssub.s32 %s41, %s48
      %s109 = sor.u32 %s107, %s108
      %p110 = scmp.eq.s32.totalorder %s109, 0
      %s112 = sadd.s32 %s111, 1
      %s113 = scalar_select %p110, %s111, %s112
      %p116 = pneg %p110
      %p117 = scmp.eq.s32.totalorder %s33, 1
      %p118 = por %p116, %p117
      %p119 = scmp.ne.s32.totalorder %s111, %s114
      %p120 = scmp.eq.s32.totalorder %s33, 0
      %p121 = por %p119, %p120
      %p122 = scmp.ne.s32.totalorder %s111, %s114
      %p123 = scmp.eq.s32.totalorder %s38, 1
      %p124 = por %p122, %p123
      %p125 = scmp.ne.s32.totalorder %s114, %s115
      %p126 = scmp.eq.s32.totalorder %s38, 0
      %p127 = por %p125, %p126
      %p128 = scmp.ne.s32.totalorder %s114, %s115
      %p129 = scmp.eq.s32.totalorder %s39, 1
      %p130 = por %p128, %p129
      %p132 = scmp.ne.s32.totalorder %s115, %s131
      %p133 = scmp.eq.s32.totalorder %s39, 0
      %p134 = por %p132, %p133
      %s136 = sadd.s32 %s135, 1
      %p139 = scmp.eq.s32.totalorder %s33, 1
      %p140 = scmp.ne.s32.totalorder %s135, %s137
      %p141 = scmp.eq.s32.totalorder %s33, 0
      %p142 = por %p140, %p141
      %p143 = scmp.ne.s32.totalorder %s135, %s137
      %p144 = scmp.eq.s32.totalorder %s38, 1
      %p145 = por %p143, %p144
      %p146 = scmp.ne.s32.totalorder %s137, %s138
      %p147 = scmp.eq.s32.totalorder %s38, 0
      %p148 = por %p146, %p147
      %p149 = scmp.ne.s32.totalorder %s137, %s138
      %p150 = scmp.eq.s32.totalorder %s39, 1
      %p151 = por %p149, %p150
      %p153 = scmp.ne.s32.totalorder %s138, %s152
      %p154 = scmp.eq.s32.totalorder %s39, 0
      %p155 = por %p153, %p154
      %s157 = sadd.s32 %s156, 1
      %p160 = scmp.eq.s32.totalorder %s33, 1
      %p161 = scmp.ne.s32.totalorder %s156, %s158
      %p162 = scmp.eq.s32.totalorder %s33, 0
      %p163 = por %p161, %p162
      %p164 = scmp.ne.s32.totalorder %s156, %s158
      %p165 = scmp.eq.s32.totalorder %s38, 1
      %p166 = por %p164, %p165
      %p167 = scmp.ne.s32.totalorder %s158, %s159
      %p168 = scmp.eq.s32.totalorder %s38, 0
      %p169 = por %p167, %p168
      %p170 = scmp.ne.s32.totalorder %s158, %s159
      %p171 = scmp.eq.s32.totalorder %s39, 1
      %p172 = por %p170, %p171
      %p174 = scmp.ne.s32.totalorder %s159, %s173
      %p175 = scmp.eq.s32.totalorder %s39, 0
      %p176 = por %p174, %p175
      %s178 = sadd.s32 %s177, 1
      %p181 = scmp.eq.s32.totalorder %s33, 1
      %p182 = scmp.ne.s32.totalorder %s177, %s179
      %p183 = scmp.eq.s32.totalorder %s33, 0
      %p184 = por %p182, %p183
      %p185 = scmp.ne.s32.totalorder %s177, %s179
      %p186 = scmp.eq.s32.totalorder %s38, 1
      %p187 = por %p185, %p186
      %p188 = scmp.ne.s32.totalorder %s179, %s180
      %p189 = scmp.eq.s32.totalorder %s38, 0
      %p190 = por %p188, %p189
      %p191 = scmp.ne.s32.totalorder %s179, %s180
      %p192 = scmp.eq.s32.totalorder %s39, 1
      %p193 = por %p191, %p192
      %p195 = scmp.ne.s32.totalorder %s180, %s194
      %p196 = scmp.eq.s32.totalorder %s39, 0
      %p197 = por %p195, %p196
      %s199 = sadd.s32 %s198, 1
      %p202 = scmp.eq.s32.totalorder %s33, 1
      %p203 = scmp.ne.s32.totalorder %s198, %s200
      %p204 = scmp.eq.s32.totalorder %s33, 0
      %p205 = por %p203, %p204
      %p206 = scmp.ne.s32.totalorder %s198, %s200
      %p207 = scmp.eq.s32.totalorder %s38, 1
      %p208 = por %p206, %p207
      %p209 = scmp.ne.s32.totalorder %s200, %s201
      %p210 = scmp.eq.s32.totalorder %s38, 0
      %p211 = por %p209, %p210
      %p212 = scmp.ne.s32.totalorder %s200, %s201
      %p213 = scmp.eq.s32.totalorder %s39, 1
      %p214 = por %p212, %p213
      %p216 = scmp.ne.s32.totalorder %s201, %s215
      %p217 = scmp.eq.s32.totalorder %s39, 0
      %p218 = por %p216, %p217
      %s220 = sadd.s32 %s219, 1
      %p223 = scmp.eq.s32.totalorder %s33, 1
      %p224 = scmp.ne.s32.totalorder %s219, %s221
      %p225 = scmp.eq.s32.totalorder %s33, 0
      %p226 = por %p224, %p225
      %p227 = scmp.ne.s32.totalorder %s219, %s221
      %p228 = scmp.eq.s32.totalorder %s38, 1
      %p229 = por %p227, %p228
      %p230 = scmp.ne.s32.totalorder %s221, %s222
      %p231 = scmp.eq.s32.totalorder %s38, 0
      %p232 = por %p230, %p231
      %p233 = scmp.ne.s32.totalorder %s221, %s222
      %p234 = scmp.eq.s32.totalorder %s39, 1
      %p235 = por %p233, %p234
      %p237 = scmp.ne.s32.totalorder %s222, %s236
      %p238 = scmp.eq.s32.totalorder %s39, 0
      %p239 = por %p237, %p238
      %s241 = sadd.s32 %s240, 1
      %p244 = scmp.eq.s32.totalorder %s33, 1
      %p245 = scmp.ne.s32.totalorder %s240, %s242
      %p246 = scmp.eq.s32.totalorder %s33, 0
      %p247 = por %p245, %p246
      %p248 = scmp.ne.s32.totalorder %s240, %s242
      %p249 = scmp.eq.s32.totalorder %s38, 1
      %p250 = por %p248, %p249
      %p251 = scmp.ne.s32.totalorder %s242, %s243
      %p252 = scmp.eq.s32.totalorder %s38, 0
      %p253 = por %p251, %p252
      %p254 = scmp.ne.s32.totalorder %s242, %s243
      %p255 = scmp.eq.s32.totalorder %s39, 1
      %p256 = por %p254, %p255
      %p258 = scmp.ne.s32.totalorder %s243, %s257
      %p259 = scmp.eq.s32.totalorder %s39, 0
      %p260 = por %p258, %p259
      %s262 = sadd.s32 %s261, 1
      %p265 = scmp.eq.s32.totalorder %s33, 1
      %p266 = scmp.ne.s32.totalorder %s261, %s263
      %p267 = scmp.eq.s32.totalorder %s33, 0
      %p268 = por %p266, %p267
      %p269 = scmp.ne.s32.totalorder %s261, %s263
      %p270 = scmp.eq.s32.totalorder %s38, 1
      %p271 = por %p269, %p270
      %p272 = scmp.ne.s32.totalorder %s263, %s264
      %p273 = scmp.eq.s32.totalorder %s38, 0
      %p274 = por %p272, %p273
      %p275 = scmp.ne.s32.totalorder %s263, %s264
      %p276 = scmp.eq.s32.totalorder %s39, 1
      %p277 = por %p275, %p276
      %p279 = scmp.ne.s32.totalorder %s264, %s278
      %p280 = scmp.eq.s32.totalorder %s39, 0
      %p281 = por %p279, %p280
      %s283 = sadd.s32 %s282, 1
      %p286 = scmp.eq.s32.totalorder %s33, 1
      %p287 = scmp.ne.s32.totalorder %s282, %s284
      %p288 = scmp.eq.s32.totalorder %s33, 0
      %p289 = por %p287, %p288
      %p290 = scmp.ne.s32.totalorder %s282, %s284
      %p291 = scmp.eq.s32.totalorder %s38, 1
      %p292 = por %p290, %p291
      %p293 = scmp.ne.s32.totalorder %s284, %s285
      %p294 = scmp.eq.s32.totalorder %s38, 0
      %p295 = por %p293, %p294
      %p296 = scmp.ne.s32.totalorder %s284, %s285
      %p297 = scmp.eq.s32.totalorder %s39, 1
      %p298 = por %p296, %p297
      %p300 = scmp.ne.s32.totalorder %s285, %s299
      %p301 = scmp.eq.s32.totalorder %s39, 0
      %p302 = por %p300, %p301
      %s304 = sadd.s32 %s303, 1
      %p307 = scmp.eq.s32.totalorder %s33, 1
      %p308 = scmp.ne.s32.totalorder %s303, %s305
      %p309 = scmp.eq.s32.totalorder %s33, 0
      %p310 = por %p308, %p309
      %p311 = scmp.ne.s32.totalorder %s303, %s305
      %p312 = scmp.eq.s32.totalorder %s38, 1
      %p313 = por %p311, %p312
      %p314 = scmp.ne.s32.totalorder %s305, %s306
      %p315 = scmp.eq.s32.totalorder %s38, 0
      %p316 = por %p314, %p315
      %p317 = scmp.ne.s32.totalorder %s305, %s306
      %p318 = scmp.eq.s32.totalorder %s39, 1
      %p319 = por %p317, %p318
      %p321 = scmp.ne.s32.totalorder %s306, %s320
      %p322 = scmp.eq.s32.totalorder %s39, 0
      %p323 = por %p321, %p322
      %s325 = sadd.s32 %s324, 1
      %p328 = scmp.eq.s32.totalorder %s33, 1
      %p329 = scmp.ne.s32.totalorder %s324, %s326
      %p330 = scmp.eq.s32.totalorder %s33, 0
      %p331 = por %p329, %p330
      %p332 = scmp.ne.s32.totalorder %s324, %s326
      %p333 = scmp.eq.s32.totalorder %s38, 1
      %p334 = por %p332, %p333
      %p335 = scmp.ne.s32.totalorder %s326, %s327
      %p336 = scmp.eq.s32.totalorder %s38, 0
      %p337 = por %p335, %p336
      %p338 = scmp.ne.s32.totalorder %s326, %s327
      %p339 = scmp.eq.s32.totalorder %s39, 1
      %p340 = por %p338, %p339
      %p342 = scmp.ne.s32.totalorder %s327, %s341
      %p343 = scmp.eq.s32.totalorder %s39, 0
      %p344 = por %p342, %p343
      %s345 = ssub.s32 %s40, %s52
      %s346 = ssub.s32 %s41, %s48
      %s347 = sor.u32 %s345, %s346
      %p348 = scmp.eq.s32.totalorder %s347, 0
      %s350 = sadd.s32 %s349, 1
      %s351 = scalar_select %p348, %s349, %s350
      %p354 = pneg %p348
      %p355 = scmp.eq.s32.totalorder %s33, 1
      %p356 = por %p354, %p355
      %p357 = scmp.ne.s32.totalorder %s349, %s352
      %p358 = scmp.eq.s32.totalorder %s33, 0
      %p359 = por %p357, %p358
      %p360 = scmp.ne.s32.totalorder %s349, %s352
      %p361 = scmp.eq.s32.totalorder %s38, 1
      %p362 = por %p360, %p361
      %p363 = scmp.ne.s32.totalorder %s352, %s353
      %p364 = scmp.eq.s32.totalorder %s38, 0
      %p365 = por %p363, %p364
      %p366 = scmp.ne.s32.totalorder %s352, %s353
      %p367 = scmp.eq.s32.totalorder %s39, 1
      %p368 = por %p366, %p367
      %p370 = scmp.ne.s32.totalorder %s353, %s369
      %p371 = scmp.eq.s32.totalorder %s39, 0
      %p372 = por %p370, %p371
      %p373 = scmp.le.s32.totalorder 1, %s33
      %p374 = scmp.lt.s32.totalorder %s33, 3
      %p375 = pnand %p373, %p374
      %p376 = pneg %p375
      // Predicated region
      $region9: #{transformer_decoder_forward.6} parent=5 // pred_check
        _
      $region10: #{transformer_decoder_forward.6} parent=5 // pred_check_branch
        %378 = sbr.rel (%p375) target = $region12
      $region11: #{transformer_decoder_forward.6} parent=5 // pred_region
        %s379 = ssub.s32 %s33, 1
        // Predicated region
        $region13: #{transformer_decoder_forward.6} parent=11 // pred_check
          %p380 = pneg %p148
        $region14: #{transformer_decoder_forward.6} parent=11 // pred_check_branch
          %382 = sbr.rel (%p380) target = $region16
        $region15: #{transformer_decoder_forward.6} parent=11 // pred_region
          %s384 = ssub.s32 256, 256
          %385 = vsyncadd [#allocation9], %s384
          %s386 = sshll.u32 [#allocation8], 4
          %s387 = int_to_ptr.vmem [resolvable:$true] %s386
          %392 = dma.hbm_to_vmem [thread:$0]  %s3, 256, %s387, [#allocation9], 64, 64, 4
        $region16: #{transformer_decoder_forward.6} parent=11 // pred_fallthru
          _
        // Predicated region
        $region17: #{transformer_decoder_forward.6} parent=11 // pred_check
          %p393 = pneg %p169
        $region18: #{transformer_decoder_forward.6} parent=11 // pred_check_branch
          %395 = sbr.rel (%p393) target = $region20
        $region19: #{transformer_decoder_forward.6} parent=11 // pred_region
          %s397 = ssub.s32 16, 16
          %398 = vsyncadd [#allocation9], %s397
          %s400 = sshll.u32 [#allocation10], 4
          %s401 = int_to_ptr.vmem [resolvable:$true] %s400
          %403 = dma.hbm_to_vmem [thread:$0]  %s4, 16, %s401, [#allocation9]
        $region20: #{transformer_decoder_forward.6} parent=11 // pred_fallthru
          _
        // Predicated region
        $region21: #{transformer_decoder_forward.6} parent=11 // pred_check
          %p404 = pneg %p190
        $region22: #{transformer_decoder_forward.6} parent=11 // pred_check_branch
          %406 = sbr.rel (%p404) target = $region24
        $region23: #{transformer_decoder_forward.6} parent=11 // pred_region
          %s408 = ssub.s32 256, 256
          %409 = vsyncadd [#allocation12], %s408
          %s410 = sshll.u32 [#allocation11], 4
          %s411 = int_to_ptr.vmem [resolvable:$true] %s410
          %416 = dma.hbm_to_vmem [thread:$0]  %s5, 256, %s411, [#allocation12], 64, 64, 4
        $region24: #{transformer_decoder_forward.6} parent=11 // pred_fallthru
          _
        // Predicated region
        $region25: #{transformer_decoder_forward.6} parent=11 // pred_check
          %p417 = pneg %p211
        $region26: #{transformer_decoder_forward.6} parent=11 // pred_check_branch
          %419 = sbr.rel (%p417) target = $region28
        $region27: #{transformer_decoder_forward.6} parent=11 // pred_region
          %s421 = ssub.s32 16, 16
          %422 = vsyncadd [#allocation12], %s421
          %s424 = sshll.u32 [#allocation13], 4
          %s425 = int_to_ptr.vmem [resolvable:$true] %s424
          %427 = dma.hbm_to_vmem [thread:$0]  %s6, 16, %s425, [#allocation12]
        $region28: #{transformer_decoder_forward.6} parent=11 // pred_fallthru
          _
        // Predicated region
        $region29: #{transformer_decoder_forward.6} parent=11 // pred_check
          %p428 = pneg %p232
        $region30: #{transformer_decoder_forward.6} parent=11 // pred_check_branch
          %430 = sbr.rel (%p428) target = $region32
        $region31: #{transformer_decoder_forward.6} parent=11 // pred_region
          %s432 = ssub.s32 256, 256
          %433 = vsyncadd [#allocation15], %s432
          %s434 = sshll.u32 [#allocation14], 4
          %s435 = int_to_ptr.vmem [resolvable:$true] %s434
          %440 = dma.hbm_to_vmem [thread:$0]  %s7, 256, %s435, [#allocation15], 64, 64, 4
        $region32: #{transformer_decoder_forward.6} parent=11 // pred_fallthru
          _
        // Predicated region
        $region33: #{transformer_decoder_forward.6} parent=11 // pred_check
          %p441 = pneg %p253
        $region34: #{transformer_decoder_forward.6} parent=11 // pred_check_branch
          %443 = sbr.rel (%p441) target = $region36
        $region35: #{transformer_decoder_forward.6} parent=11 // pred_region
          %s445 = ssub.s32 16, 16
          %446 = vsyncadd [#allocation15], %s445
          %s448 = sshll.u32 [#allocation16], 4
          %s449 = int_to_ptr.vmem [resolvable:$true] %s448
          %451 = dma.hbm_to_vmem [thread:$0]  %s8, 16, %s449, [#allocation15]
        $region36: #{transformer_decoder_forward.6} parent=11 // pred_fallthru
          _
        // Predicated region
        $region37: #{transformer_decoder_forward.6} parent=11 // pred_check
          %p452 = pneg %p274
        $region38: #{transformer_decoder_forward.6} parent=11 // pred_check_branch
          %454 = sbr.rel (%p452) target = $region40
        $region39: #{transformer_decoder_forward.6} parent=11 // pred_region
          %s456 = ssub.s32 256, 256
          %457 = vsyncadd [#allocation18], %s456
          %s458 = sshll.u32 [#allocation17], 4
          %s459 = int_to_ptr.vmem [resolvable:$true] %s458
          %464 = dma.hbm_to_vmem [thread:$0]  %s9, 256, %s459, [#allocation18], 64, 64, 4
        $region40: #{transformer_decoder_forward.6} parent=11 // pred_fallthru
          _
        // Predicated region
        $region41: #{transformer_decoder_forward.6} parent=11 // pred_check
          %p465 = pneg %p295
        $region42: #{transformer_decoder_forward.6} parent=11 // pred_check_branch
          %467 = sbr.rel (%p465) target = $region44
        $region43: #{transformer_decoder_forward.6} parent=11 // pred_region
          %s469 = ssub.s32 16, 16
          %470 = vsyncadd [#allocation18], %s469
          %s472 = sshll.u32 [#allocation19], 4
          %s473 = int_to_ptr.vmem [resolvable:$true] %s472
          %475 = dma.hbm_to_vmem [thread:$0]  %s10, 16, %s473, [#allocation18]
        $region44: #{transformer_decoder_forward.6} parent=11 // pred_fallthru
          _
        // Predicated region
        $region45: #{transformer_decoder_forward.6} parent=11 // pred_check
          %p476 = pneg %p316
        $region46: #{transformer_decoder_forward.6} parent=11 // pred_check_branch
          %478 = sbr.rel (%p476) target = $region48
        $region47: #{transformer_decoder_forward.6} parent=11 // pred_region
          %s480 = ssub.s32 16, 16
          %481 = vsyncadd [#allocation21], %s480
          %s483 = sshll.u32 [#allocation20], 4
          %s484 = int_to_ptr.vmem [resolvable:$true] %s483
          %486 = dma.hbm_to_vmem [thread:$0]  %s11, 16, %s484, [#allocation21]
        $region48: #{transformer_decoder_forward.6} parent=11 // pred_fallthru
          _
        // Predicated region
        $region49: #{transformer_decoder_forward.6} parent=11 // pred_check
          %p487 = pneg %p337
        $region50: #{transformer_decoder_forward.6} parent=11 // pred_check_branch
          %489 = sbr.rel (%p487) target = $region52
        $region51: #{transformer_decoder_forward.6} parent=11 // pred_region
          %s491 = ssub.s32 16, 16
          %492 = vsyncadd [#allocation21], %s491
          %s494 = sshll.u32 [#allocation22], 4
          %s495 = int_to_ptr.vmem [resolvable:$true] %s494
          %497 = dma.hbm_to_vmem [thread:$0]  %s12, 16, %s495, [#allocation21]
        $region52: #{transformer_decoder_forward.6} parent=11 // pred_fallthru
          _
      $region12: #{transformer_decoder_forward.6} parent=5 // pred_fallthru
        _
      %p498 = scmp.lt.s32.totalorder %s33, 2
      // Predicated region
      $region53: #{transformer_decoder_forward.6} parent=5 // pred_check
        %p499 = pneg %p498
      $region54: #{transformer_decoder_forward.6} parent=5 // pred_check_branch
        %501 = sbr.rel (%p499) target = $region56
      $region55: #{transformer_decoder_forward.6} parent=5 // pred_region
        // Predicated region
        $region57: #{transformer_decoder_forward.6} parent=55 // pred_check
          %p502 = pneg %p67
        $region58: #{transformer_decoder_forward.6} parent=55 // pred_check_branch
          %504 = sbr.rel (%p502) target = $region60
        $region59: #{transformer_decoder_forward.6} parent=55 // pred_region
          %s505 = sand.u32 %s57, 1
          %s506 = scalar_lea.sflag [#allocation3], %s505
          %s507 = sand.u32 %s57, 1
          %s508 = smul.addr %s507, 8
          %s509 = scalar_lea.vmem [#allocation2], %s508
          %s511 = ssub.s32 128, 128
          %512 = vsyncadd %s506, %s511
          %s513 = sadd.s32 %s41, %s40
          %s514 = smul.addr %s513, 128
          %s515 = scalar_lea.hbm %s0, %s514
          %s517 = sshll.u32 %s509, 4
          %s518 = int_to_ptr.vmem [resolvable:$true] %s517
          %520 = dma.hbm_to_vmem [thread:$0]  %s515, 128, %s518, %s506
        $region60: #{transformer_decoder_forward.6} parent=55 // pred_fallthru
          _
        // Predicated region
        $region61: #{transformer_decoder_forward.6} parent=55 // pred_check
          %p521 = pneg %p93
        $region62: #{transformer_decoder_forward.6} parent=55 // pred_check_branch
          %523 = sbr.rel (%p521) target = $region64
        $region63: #{transformer_decoder_forward.6} parent=55 // pred_region
          %s524 = sand.u32 %s33, 1
          %s525 = scalar_lea.sflag [#allocation6], %s524
          %s526 = sand.u32 %s83, 1
          %s527 = smul.addr %s526, 8
          %s528 = scalar_lea.vmem [#allocation5], %s527
          %s530 = ssub.s32 128, 128
          %531 = vsyncadd %s525, %s530
          %s532 = smul.addr %s40, 128
          %s533 = scalar_lea.hbm %s1, %s532
          %s535 = sshll.u32 %s528, 4
          %s536 = int_to_ptr.vmem [resolvable:$true] %s535
          %538 = dma.hbm_to_vmem [thread:$0]  %s533, 128, %s536, %s525
        $region64: #{transformer_decoder_forward.6} parent=55 // pred_fallthru
          _
        // Predicated region
        $region65: #{transformer_decoder_forward.6} parent=55 // pred_check
          %p539 = pneg %p121
        $region66: #{transformer_decoder_forward.6} parent=55 // pred_check_branch
          %541 = sbr.rel (%p539) target = $region68
        $region67: #{transformer_decoder_forward.6} parent=55 // pred_region
          %s542 = sand.u32 %s33, 1
          %s543 = scalar_lea.sflag [#allocation6], %s542
          %s544 = sand.u32 %s111, 1
          %s545 = smul.addr %s544, 8
          %s546 = scalar_lea.vmem [#allocation7], %s545
          %s548 = ssub.s32 128, 128
          %549 = vsyncadd %s543, %s548
          %s550 = sadd.s32 %s41, %s40
          %s551 = smul.addr %s550, 128
          %s552 = scalar_lea.hbm %s2, %s551
          %s554 = sshll.u32 %s546, 4
          %s555 = int_to_ptr.vmem [resolvable:$true] %s554
          %557 = dma.hbm_to_vmem [thread:$0]  %s552, 128, %s555, %s543
        $region68: #{transformer_decoder_forward.6} parent=55 // pred_fallthru
          _
      $region56: #{transformer_decoder_forward.6} parent=5 // pred_fallthru
        _
      %p558 = scmp.le.s32.totalorder 1, %s33
      %p559 = scmp.lt.s32.totalorder %s33, 3
      %p560 = pnand %p558, %p559
      %p561 = pneg %p560
      // Predicated region
      $region69: #{transformer_decoder_forward.6} parent=5 // pred_check
        _
      $region70: #{transformer_decoder_forward.6} parent=5 // pred_check_branch
        %563 = sbr.rel (%p560) target = $region72
      $region71: #{transformer_decoder_forward.6} parent=5 // pred_region
        %s564 = ssub.s32 %s33, 1
        %s565 = sand.u32 %s60, 1
        %s566 = scalar_lea.sflag [#allocation3], %s565
        %s567 = sand.u32 %s60, 1
        %s568 = smul.addr %s567, 8
        %s569 = scalar_lea.vmem [#allocation2], %s568
        // Predicated region
        $region73: #{transformer_decoder_forward.6} parent=71 // pred_check
          %p570 = pneg %p73
        $region74: #{transformer_decoder_forward.6} parent=71 // pred_check_branch
          %572 = sbr.rel (%p570) target = $region76
        $region75: #{transformer_decoder_forward.6} parent=71 // pred_region
          %573 = dma.done %s566, 128
        $region76: #{transformer_decoder_forward.6} parent=71 // pred_fallthru
          _
        %s574 = sand.u32 %s38, 1
        %s575 = scalar_lea.sflag [#allocation6], %s574
        %s576 = sand.u32 %s86, 1
        %s577 = smul.addr %s576, 8
        %s578 = scalar_lea.vmem [#allocation5], %s577
        // Predicated region
        $region77: #{transformer_decoder_forward.6} parent=71 // pred_check
          %p579 = pneg %p99
        $region78: #{transformer_decoder_forward.6} parent=71 // pred_check_branch
          %581 = sbr.rel (%p579) target = $region80
        $region79: #{transformer_decoder_forward.6} parent=71 // pred_region
          %582 = dma.done %s575, 128
        $region80: #{transformer_decoder_forward.6} parent=71 // pred_fallthru
          _
        %s583 = sand.u32 %s38, 1
        %s584 = scalar_lea.sflag [#allocation6], %s583
        %s585 = sand.u32 %s114, 1
        %s586 = smul.addr %s585, 8
        %s587 = scalar_lea.vmem [#allocation7], %s586
        // Predicated region
        $region81: #{transformer_decoder_forward.6} parent=71 // pred_check
          %p588 = pneg %p127
        $region82: #{transformer_decoder_forward.6} parent=71 // pred_check_branch
          %590 = sbr.rel (%p588) target = $region84
        $region83: #{transformer_decoder_forward.6} parent=71 // pred_region
          %591 = dma.done %s584, 128
        $region84: #{transformer_decoder_forward.6} parent=71 // pred_fallthru
          _
        // Predicated region
        $region85: #{transformer_decoder_forward.6} parent=71 // pred_check
          %p592 = pneg %p148
        $region86: #{transformer_decoder_forward.6} parent=71 // pred_check_branch
          %594 = sbr.rel (%p592) target = $region88
        $region87: #{transformer_decoder_forward.6} parent=71 // pred_region
          %595 = dma.done [#allocation9], 256
        $region88: #{transformer_decoder_forward.6} parent=71 // pred_fallthru
          _
        // Predicated region
        $region89: #{transformer_decoder_forward.6} parent=71 // pred_check
          %p596 = pneg %p169
        $region90: #{transformer_decoder_forward.6} parent=71 // pred_check_branch
          %598 = sbr.rel (%p596) target = $region92
        $region91: #{transformer_decoder_forward.6} parent=71 // pred_region
          %599 = dma.done [#allocation9], 16
        $region92: #{transformer_decoder_forward.6} parent=71 // pred_fallthru
          _
        // Predicated region
        $region93: #{transformer_decoder_forward.6} parent=71 // pred_check
          %p600 = pneg %p190
        $region94: #{transformer_decoder_forward.6} parent=71 // pred_check_branch
          %602 = sbr.rel (%p600) target = $region96
        $region95: #{transformer_decoder_forward.6} parent=71 // pred_region
          %603 = dma.done [#allocation12], 256
        $region96: #{transformer_decoder_forward.6} parent=71 // pred_fallthru
          _
        // Predicated region
        $region97: #{transformer_decoder_forward.6} parent=71 // pred_check
          %p604 = pneg %p211
        $region98: #{transformer_decoder_forward.6} parent=71 // pred_check_branch
          %606 = sbr.rel (%p604) target = $region100
        $region99: #{transformer_decoder_forward.6} parent=71 // pred_region
          %607 = dma.done [#allocation12], 16
        $region100: #{transformer_decoder_forward.6} parent=71 // pred_fallthru
          _
        // Predicated region
        $region101: #{transformer_decoder_forward.6} parent=71 // pred_check
          %p608 = pneg %p232
        $region102: #{transformer_decoder_forward.6} parent=71 // pred_check_branch
          %610 = sbr.rel (%p608) target = $region104
        $region103: #{transformer_decoder_forward.6} parent=71 // pred_region
          %611 = dma.done [#allocation15], 256
        $region104: #{transformer_decoder_forward.6} parent=71 // pred_fallthru
          _
        // Predicated region
        $region105: #{transformer_decoder_forward.6} parent=71 // pred_check
          %p612 = pneg %p253
        $region106: #{transformer_decoder_forward.6} parent=71 // pred_check_branch
          %614 = sbr.rel (%p612) target = $region108
        $region107: #{transformer_decoder_forward.6} parent=71 // pred_region
          %615 = dma.done [#allocation15], 16
        $region108: #{transformer_decoder_forward.6} parent=71 // pred_fallthru
          _
        // Predicated region
        $region109: #{transformer_decoder_forward.6} parent=71 // pred_check
          %p616 = pneg %p274
        $region110: #{transformer_decoder_forward.6} parent=71 // pred_check_branch
          %618 = sbr.rel (%p616) target = $region112
        $region111: #{transformer_decoder_forward.6} parent=71 // pred_region
          %619 = dma.done [#allocation18], 256
        $region112: #{transformer_decoder_forward.6} parent=71 // pred_fallthru
          _
        // Predicated region
        $region113: #{transformer_decoder_forward.6} parent=71 // pred_check
          %p620 = pneg %p295
        $region114: #{transformer_decoder_forward.6} parent=71 // pred_check_branch
          %622 = sbr.rel (%p620) target = $region116
        $region115: #{transformer_decoder_forward.6} parent=71 // pred_region
          %623 = dma.done [#allocation18], 16
        $region116: #{transformer_decoder_forward.6} parent=71 // pred_fallthru
          _
        // Predicated region
        $region117: #{transformer_decoder_forward.6} parent=71 // pred_check
          %p624 = pneg %p316
        $region118: #{transformer_decoder_forward.6} parent=71 // pred_check_branch
          %626 = sbr.rel (%p624) target = $region120
        $region119: #{transformer_decoder_forward.6} parent=71 // pred_region
          %627 = dma.done [#allocation21], 16
        $region120: #{transformer_decoder_forward.6} parent=71 // pred_fallthru
          _
        // Predicated region
        $region121: #{transformer_decoder_forward.6} parent=71 // pred_check
          %p628 = pneg %p337
        $region122: #{transformer_decoder_forward.6} parent=71 // pred_check_branch
          %630 = sbr.rel (%p628) target = $region124
        $region123: #{transformer_decoder_forward.6} parent=71 // pred_region
          %631 = dma.done [#allocation21], 16
        $region124: #{transformer_decoder_forward.6} parent=71 // pred_fallthru
          _
        %s632 = sand.u32 %s60, 1
        %s633 = scalar_lea.sflag [#allocation3], %s632
        %s634 = sand.u32 %s60, 1
        %s635 = smul.addr %s634, 8
        %s636 = scalar_lea.vmem [#allocation2], %s635
        %p637 = pneg %p73
        %p638 = pneg %p70
        %s639 = sand.u32 %s38, 1
        %s640 = scalar_lea.sflag [#allocation6], %s639
        %s641 = sand.u32 %s86, 1
        %s642 = smul.addr %s641, 8
        %s643 = scalar_lea.vmem [#allocation5], %s642
        %p644 = pneg %p99
        %p645 = pneg %p96
        %s646 = sand.u32 %s38, 1
        %s647 = scalar_lea.sflag [#allocation6], %s646
        %s648 = sand.u32 %s114, 1
        %s649 = smul.addr %s648, 8
        %s650 = scalar_lea.vmem [#allocation7], %s649
        %p651 = pneg %p127
        %p652 = pneg %p124
        %p653 = pneg %p148
        %p654 = pneg %p145
        %p655 = pneg %p169
        %p656 = pneg %p166
        %p657 = pneg %p190
        %p658 = pneg %p187
        %p659 = pneg %p211
        %p660 = pneg %p208
        %p661 = pneg %p232
        %p662 = pneg %p229
        %p663 = pneg %p253
        %p664 = pneg %p250
        %p665 = pneg %p274
        %p666 = pneg %p271
        %p667 = pneg %p295
        %p668 = pneg %p292
        %p669 = pneg %p316
        %p670 = pneg %p313
        %p671 = pneg %p337
        %p672 = pneg %p334
        %p673 = pneg %p365
        %p674 = pneg %p362
        %s675 = sand.u32 %s352, 1
        %s676 = scalar_lea.sflag [#allocation4], %s675
        %s677 = sand.u32 %s352, 1
        %s678 = smul.addr %s677, 8
        %s679 = scalar_lea.vmem [#allocation23], %s678
        %v681 = vld [vmem:[%s569] sm:$0xff]
        %v682 = vld [vmem:[%s578] sm:$0xff]
        %v683 = vpack.c.bf16 %v681, %v681
        %v684 = vpack.c.bf16 %v682, %v682
        %v685 = vld [vmem:[#allocation8] sm:$0xf]
        %v686 = vld [vmem:[#allocation8 + $0x4] sm:$0xf]
        %v687 = vld [vmem:[#allocation8 + $0x8] sm:$0xf]
        %v688 = vld [vmem:[#allocation8 + $0xc] sm:$0xf]
        %v689 = vld [vmem:[#allocation10] sm:$0x1]
        %v691 = vlaneseq
        %v692 = vshrl.u32 %v691, 7
        %v693 = vsub.s32 0, %v692
        %v694 = vrot.slane %v689, %v693
        %v700 = vunpack.c.l.b16 %v685
        %v701 = vunpack.c.l.b16 %v686
        %v702 = vunpack.c.l.b16 %v687
        %v703 = vunpack.c.l.b16 %v688
        %v704 = vpack.c.b16 %v701, %v700
        %v705 = vpack.c.b16 %v703, %v702
        %vm708 = vcmask 261120
        %v710 = vsel %vm708, %v683, 0
        %712 = vmatprep.subr.bf16.mxu0 0
        %713 = vmatpush1.bf16.msra.mxu0 %v704
        %714 = vmatprep.subr.bf16.mxu0 0
        %715 = vmatpush1.bf16.msra.mxu0 %v705
        %716 = vmatprep.subr.bf16.mxu0 0
        %717 = vmatpush1.bf16.msra.mxu0 0
        %718 = vmatprep.subr.bf16.mxu0 0
        %719 = vmatpush1.bf16.msra.mxu0 0
        %720 = vmatprep.subr.bf16.mxu0 0
        %721 = vmatpush1.bf16.msra.mxu0 0
        %722 = vmatprep.subr.bf16.mxu0 0
        %723 = vmatpush1.bf16.msra.mxu0 0
        %724 = vmatprep.subr.bf16.mxu0 0
        %725 = vmatpush1.bf16.msra.mxu0 0
        %726 = vmatprep.subr.bf16.mxu0 0
        %727 = vmatpush1.bf16.msra.mxu0 0
        %728 = vmatprep.subr.bf16.mxu0 0
        %729 = vmatpush1.bf16.msra.mxu0 0
        %730 = vmatprep.subr.bf16.mxu0 0
        %731 = vmatpush1.bf16.msra.mxu0 0
        %732 = vmatprep.subr.bf16.mxu0 0
        %733 = vmatpush1.bf16.msra.mxu0 0
        %734 = vmatprep.subr.bf16.mxu0 0
        %735 = vmatpush1.bf16.msra.mxu0 0
        %736 = vmatprep.subr.bf16.mxu0 0
        %737 = vmatpush1.bf16.msra.mxu0 0
        %738 = vmatprep.subr.bf16.mxu0 0
        %739 = vmatpush1.bf16.msra.mxu0 0
        %740 = vmatprep.subr.bf16.mxu0 0
        %741 = vmatpush1.bf16.msra.mxu0 0
        %742 = vmatprep.subr.bf16.mxu0 0
        %743 = vmatpush1.bf16.msra.mxu0 0
        %744 = vmatprep.mubr.bf16.mxu0 0
        %745 = vmatmul.mubr.bf16.gmra.mrb[0].mxu0 %v710
        %v746 = vpop.f32.mrb[0].mxu0
        %v747 = vadd.f32 %v694, %v746
        %v748 = vpop.f32.mrb[0].mxu0
        %v749 = vpop.f32.mrb[0].mxu0
        %v750 = vpop.f32.mrb[0].mxu0
        %751 = vdwg.mxu0
        %v752 = vld [vmem:[#allocation11] sm:$0xf]
        %v753 = vld [vmem:[#allocation11 + $0x4] sm:$0xf]
        %v754 = vld [vmem:[#allocation11 + $0x8] sm:$0xf]
        %v755 = vld [vmem:[#allocation11 + $0xc] sm:$0xf]
        %v756 = vld [vmem:[#allocation13] sm:$0x1]
        %v758 = vlaneseq
        %v759 = vshrl.u32 %v758, 7
        %v760 = vsub.s32 0, %v759
        %v761 = vrot.slane %v756, %v760
        %v767 = vunpack.c.l.b16 %v752
        %v768 = vunpack.c.l.b16 %v753
        %v769 = vunpack.c.l.b16 %v754
        %v770 = vunpack.c.l.b16 %v755
        %v771 = vpack.c.b16 %v768, %v767
        %v772 = vpack.c.b16 %v770, %v769
        %v776 = vsel %vm708, %v684, 0
        %778 = vmatprep.subr.bf16.mxu0 0
        %779 = vmatpush1.bf16.msra.mxu0 %v771
        %780 = vmatprep.subr.bf16.mxu0 0
        %781 = vmatpush1.bf16.msra.mxu0 %v772
        %782 = vmatprep.subr.bf16.mxu0 0
        %783 = vmatpush1.bf16.msra.mxu0 0
        %784 = vmatprep.subr.bf16.mxu0 0
        %785 = vmatpush1.bf16.msra.mxu0 0
        %786 = vmatprep.subr.bf16.mxu0 0
        %787 = vmatpush1.bf16.msra.mxu0 0
        %788 = vmatprep.subr.bf16.mxu0 0
        %789 = vmatpush1.bf16.msra.mxu0 0
        %790 = vmatprep.subr.bf16.mxu0 0
        %791 = vmatpush1.bf16.msra.mxu0 0
        %792 = vmatprep.subr.bf16.mxu0 0
        %793 = vmatpush1.bf16.msra.mxu0 0
        %794 = vmatprep.subr.bf16.mxu0 0
        %795 = vmatpush1.bf16.msra.mxu0 0
        %796 = vmatprep.subr.bf16.mxu0 0
        %797 = vmatpush1.bf16.msra.mxu0 0
        %798 = vmatprep.subr.bf16.mxu0 0
        %799 = vmatpush1.bf16.msra.mxu0 0
        %800 = vmatprep.subr.bf16.mxu0 0
        %801 = vmatpush1.bf16.msra.mxu0 0
        %802 = vmatprep.subr.bf16.mxu0 0
        %803 = vmatpush1.bf16.msra.mxu0 0
        %804 = vmatprep.subr.bf16.mxu0 0
        %805 = vmatpush1.bf16.msra.mxu0 0
        %806 = vmatprep.subr.bf16.mxu0 0
        %807 = vmatpush1.bf16.msra.mxu0 0
        %808 = vmatprep.subr.bf16.mxu0 0
        %809 = vmatpush1.bf16.msra.mxu0 0
        %810 = vmatprep.mubr.bf16.mxu0 0
        %811 = vmatmul.mubr.bf16.gmra.mrb[0].mxu0 %v776
        %v812 = vpop.f32.mrb[0].mxu0
        %v813 = vadd.f32 %v761, %v812
        %v814 = vpop.f32.mrb[0].mxu0
        %v815 = vpop.f32.mrb[0].mxu0
        %v816 = vpop.f32.mrb[0].mxu0
        %817 = vdwg.mxu0
        %v818 = vld [vmem:[#allocation14] sm:$0xf]
        %v819 = vld [vmem:[#allocation14 + $0x4] sm:$0xf]
        %v820 = vld [vmem:[#allocation14 + $0x8] sm:$0xf]
        %v821 = vld [vmem:[#allocation14 + $0xc] sm:$0xf]
        %v822 = vld [vmem:[#allocation16] sm:$0x1]
        %v824 = vlaneseq
        %v825 = vshrl.u32 %v824, 7
        %v826 = vsub.s32 0, %v825
        %v827 = vrot.slane %v822, %v826
        %v833 = vunpack.c.l.b16 %v818
        %v834 = vunpack.c.l.b16 %v819
        %v835 = vunpack.c.l.b16 %v820
        %v836 = vunpack.c.l.b16 %v821
        %v837 = vpack.c.b16 %v834, %v833
        %v838 = vpack.c.b16 %v836, %v835
        %841 = vmatprep.subr.bf16.mxu0 0
        %842 = vmatpush1.bf16.msra.mxu0 %v837
        %843 = vmatprep.subr.bf16.mxu0 0
        %844 = vmatpush1.bf16.msra.mxu0 %v838
        %845 = vmatprep.subr.bf16.mxu0 0
        %846 = vmatpush1.bf16.msra.mxu0 0
        %847 = vmatprep.subr.bf16.mxu0 0
        %848 = vmatpush1.bf16.msra.mxu0 0
        %849 = vmatprep.subr.bf16.mxu0 0
        %850 = vmatpush1.bf16.msra.mxu0 0
        %851 = vmatprep.subr.bf16.mxu0 0
        %852 = vmatpush1.bf16.msra.mxu0 0
        %853 = vmatprep.subr.bf16.mxu0 0
        %854 = vmatpush1.bf16.msra.mxu0 0
        %855 = vmatprep.subr.bf16.mxu0 0
        %856 = vmatpush1.bf16.msra.mxu0 0
        %857 = vmatprep.subr.bf16.mxu0 0
        %858 = vmatpush1.bf16.msra.mxu0 0
        %859 = vmatprep.subr.bf16.mxu0 0
        %860 = vmatpush1.bf16.msra.mxu0 0
        %861 = vmatprep.subr.bf16.mxu0 0
        %862 = vmatpush1.bf16.msra.mxu0 0
        %863 = vmatprep.subr.bf16.mxu0 0
        %864 = vmatpush1.bf16.msra.mxu0 0
        %865 = vmatprep.subr.bf16.mxu0 0
        %866 = vmatpush1.bf16.msra.mxu0 0
        %867 = vmatprep.subr.bf16.mxu0 0
        %868 = vmatpush1.bf16.msra.mxu0 0
        %869 = vmatprep.subr.bf16.mxu0 0
        %870 = vmatpush1.bf16.msra.mxu0 0
        %871 = vmatprep.subr.bf16.mxu0 0
        %872 = vmatpush1.bf16.msra.mxu0 0
        %873 = vmatprep.mubr.bf16.mxu0 0
        %874 = vmatmul.mubr.bf16.gmra.mrb[0].mxu0 %v776
        %v875 = vpop.f32.mrb[0].mxu0
        %v876 = vadd.f32 %v827, %v875
        %v877 = vpop.f32.mrb[0].mxu0
        %v878 = vpop.f32.mrb[0].mxu0
        %v879 = vpop.f32.mrb[0].mxu0
        %880 = vdwg.mxu0
        %v881 = vmul.f32 %v747, 0.35355338
        %v882 = vpack.c.bf16 %v881, %v881
        %v883 = vpack.c.bf16 %v813, %v813
        %v884 = vpack.c.bf16 %v876, %v876
        %v885 = vld [vmem:[#allocation17] sm:$0xf]
        %v886 = vld [vmem:[#allocation17 + $0x4] sm:$0xf]
        %v887 = vld [vmem:[#allocation17 + $0x8] sm:$0xf]
        %v888 = vld [vmem:[#allocation17 + $0xc] sm:$0xf]
        %v889 = vld [vmem:[%s587] sm:$0xff]
        %vm890 = vcmp.eq.f32.partialorder %v889, 0.0
        %v891 = vsel %vm890, -1e+09, 0.0
        %vm892 = vcmask 64512
        %v894 = vsel %vm892, %v882, 0
        %v897 = vsel %vm892, %v883, 0
        %899 = vmatprep.subr.bf16.mxu0 0
        %900 = vmatpush1.bf16.xpose.msra.mxu0 %v897
        %901 = vmatprep.subr.bf16.mxu0 0
        %902 = vmatpush1.bf16.xpose.msra.mxu0 0
        %903 = vmatprep.subr.bf16.mxu0 0
        %904 = vmatpush1.bf16.xpose.msra.mxu0 0
        %905 = vmatprep.subr.bf16.mxu0 0
        %906 = vmatpush1.bf16.xpose.msra.mxu0 0
        %907 = vmatprep.subr.bf16.mxu0 0
        %908 = vmatpush1.bf16.xpose.msra.mxu0 0
        %909 = vmatprep.subr.bf16.mxu0 0
        %910 = vmatpush1.bf16.xpose.msra.mxu0 0
        %911 = vmatprep.subr.bf16.mxu0 0
        %912 = vmatpush1.bf16.xpose.msra.mxu0 0
        %913 = vmatprep.subr.bf16.mxu0 0
        %914 = vmatpush1.bf16.xpose.msra.mxu0 0
        %915 = vmatprep.subr.bf16.mxu0 0
        %916 = vmatpush1.bf16.xpose.msra.mxu0 0
        %917 = vmatprep.subr.bf16.mxu0 0
        %918 = vmatpush1.bf16.xpose.msra.mxu0 0
        %919 = vmatprep.subr.bf16.mxu0 0
        %920 = vmatpush1.bf16.xpose.msra.mxu0 0
        %921 = vmatprep.subr.bf16.mxu0 0
        %922 = vmatpush1.bf16.xpose.msra.mxu0 0
        %923 = vmatprep.subr.bf16.mxu0 0
        %924 = vmatpush1.bf16.xpose.msra.mxu0 0
        %925 = vmatprep.subr.bf16.mxu0 0
        %926 = vmatpush1.bf16.xpose.msra.mxu0 0
        %927 = vmatprep.subr.bf16.mxu0 0
        %928 = vmatpush1.bf16.xpose.msra.mxu0 0
        %929 = vmatprep.subr.bf16.mxu0 0
        %930 = vmatpush1.bf16.xpose.msra.mxu0 0
        %931 = vmatprep.mubr.bf16.mxu0 0
        %932 = vmatmul.mubr.bf16.gmra.mrb[0].mxu0 %v894
        %v933 = vpop.f32.mrb[0].mxu0
        %v934 = vadd.f32 %v891, %v933
        %v935 = vpop.f32.mrb[0].mxu0
        %v936 = vpop.f32.mrb[0].mxu0
        %v937 = vpop.f32.mrb[0].mxu0
        %938 = vdwg.mxu0
        %v939 = vsel %vm892, %v934, -inf
        %940 = vmax.xlane.f32.xlu0 %v939
        %v941 = vpop.xlane.xlu0 %940
        %v942 = vsub.f32 %v934, %v941
        %v943 = vmul.f32 %v942, 1.442695
        %v944 = vpow.pop %v943
        %v945 = vsel %vm892, %v944, 0.0
        %946 = vadd.xlane.f32.xlu0 %v945
        %v947 = vpop.xlane.xlu0 %946
        %v948 = vrcp.pop %v947
        %v949 = vpack.c.bf16 %v944, %v944
        %v951 = vsel %vm892, %v949, 0
        %vm953 = vcmask 1043456
        %v955 = vsel %vm953, %v884, 0
        %957 = vmatprep.subr.bf16.mxu0 0
        %958 = vmatpush1.bf16.msra.mxu0 %v955
        %959 = vmatprep.subr.bf16.mxu0 0
        %960 = vmatpush1.bf16.msra.mxu0 0
        %961 = vmatprep.subr.bf16.mxu0 0
        %962 = vmatpush1.bf16.msra.mxu0 0
        %963 = vmatprep.subr.bf16.mxu0 0
        %964 = vmatpush1.bf16.msra.mxu0 0
        %965 = vmatprep.subr.bf16.mxu0 0
        %966 = vmatpush1.bf16.msra.mxu0 0
        %967 = vmatprep.subr.bf16.mxu0 0
        %968 = vmatpush1.bf16.msra.mxu0 0
        %969 = vmatprep.subr.bf16.mxu0 0
        %970 = vmatpush1.bf16.msra.mxu0 0
        %971 = vmatprep.subr.bf16.mxu0 0
        %972 = vmatpush1.bf16.msra.mxu0 0
        %973 = vmatprep.subr.bf16.mxu0 0
        %974 = vmatpush1.bf16.msra.mxu0 0
        %975 = vmatprep.subr.bf16.mxu0 0
        %976 = vmatpush1.bf16.msra.mxu0 0
        %977 = vmatprep.subr.bf16.mxu0 0
        %978 = vmatpush1.bf16.msra.mxu0 0
        %979 = vmatprep.subr.bf16.mxu0 0
        %980 = vmatpush1.bf16.msra.mxu0 0
        %981 = vmatprep.subr.bf16.mxu0 0
        %982 = vmatpush1.bf16.msra.mxu0 0
        %983 = vmatprep.subr.bf16.mxu0 0
        %984 = vmatpush1.bf16.msra.mxu0 0
        %985 = vmatprep.subr.bf16.mxu0 0
        %986 = vmatpush1.bf16.msra.mxu0 0
        %987 = vmatprep.subr.bf16.mxu0 0
        %988 = vmatpush1.bf16.msra.mxu0 0
        %989 = vmatprep.mubr.bf16.mxu0 0
        %990 = vmatmul.mubr.bf16.gmra.mrb[0].mxu0 %v951
        %v991 = vpop.f32.mrb[0].mxu0
        %v992 = vadd.f32 0.0, %v991
        %v993 = vpop.f32.mrb[0].mxu0
        %v994 = vpop.f32.mrb[0].mxu0
        %v995 = vpop.f32.mrb[0].mxu0
        %996 = vdwg.mxu0
        %v997 = vmul.f32 %v992, %v948
        %v998 = vpack.c.bf16 %v997, %v997
        %1000 = vrot.lane.b32.xlu0 %v882, 120
        %v1001 = vpop.permute.xlu0 %1000
        %1003 = vrot.lane.b32.xlu0 %v883, 120
        %v1004 = vpop.permute.xlu0 %1003
        %v1006 = vsel %vm892, %v1001, 0
        %v1009 = vsel %vm892, %v1004, 0
        %1011 = vmatprep.subr.bf16.mxu0 0
        %1012 = vmatpush1.bf16.xpose.msra.mxu0 %v1009
        %1013 = vmatprep.subr.bf16.mxu0 0
        %1014 = vmatpush1.bf16.xpose.msra.mxu0 0
        %1015 = vmatprep.subr.bf16.mxu0 0
        %1016 = vmatpush1.bf16.xpose.msra.mxu0 0
        %1017 = vmatprep.subr.bf16.mxu0 0
        %1018 = vmatpush1.bf16.xpose.msra.mxu0 0
        %1019 = vmatprep.subr.bf16.mxu0 0
        %1020 = vmatpush1.bf16.xpose.msra.mxu0 0
        %1021 = vmatprep.subr.bf16.mxu0 0
        %1022 = vmatpush1.bf16.xpose.msra.mxu0 0
        %1023 = vmatprep.subr.bf16.mxu0 0
        %1024 = vmatpush1.bf16.xpose.msra.mxu0 0
        %1025 = vmatprep.subr.bf16.mxu0 0
        %1026 = vmatpush1.bf16.xpose.msra.mxu0 0
        %1027 = vmatprep.subr.bf16.mxu0 0
        %1028 = vmatpush1.bf16.xpose.msra.mxu0 0
        %1029 = vmatprep.subr.bf16.mxu0 0
        %1030 = vmatpush1.bf16.xpose.msra.mxu0 0
        %1031 = vmatprep.subr.bf16.mxu0 0
        %1032 = vmatpush1.bf16.xpose.msra.mxu0 0
        %1033 = vmatprep.subr.bf16.mxu0 0
        %1034 = vmatpush1.bf16.xpose.msra.mxu0 0
        %1035 = vmatprep.subr.bf16.mxu0 0
        %1036 = vmatpush1.bf16.xpose.msra.mxu0 0
        %1037 = vmatprep.subr.bf16.mxu0 0
        %1038 = vmatpush1.bf16.xpose.msra.mxu0 0
        %1039 = vmatprep.subr.bf16.mxu0 0
        %1040 = vmatpush1.bf16.xpose.msra.mxu0 0
        %1041 = vmatprep.subr.bf16.mxu0 0
        %1042 = vmatpush1.bf16.xpose.msra.mxu0 0
        %1043 = vmatprep.mubr.bf16.mxu0 0
        %1044 = vmatmul.mubr.bf16.gmra.mrb[0].mxu0 %v1006
        %v1045 = vpop.f32.mrb[0].mxu0
        %v1046 = vadd.f32 %v891, %v1045
        %v1047 = vpop.f32.mrb[0].mxu0
        %v1048 = vpop.f32.mrb[0].mxu0
        %v1049 = vpop.f32.mrb[0].mxu0
        %1050 = vdwg.mxu0
        %v1051 = vsel %vm892, %v1046, -inf
        %1052 = vmax.xlane.f32.xlu0 %v1051
        %v1053 = vpop.xlane.xlu0 %1052
        %v1054 = vsub.f32 %v1046, %v1053
        %v1055 = vmul.f32 %v1054, 1.442695
        %v1056 = vpow.pop %v1055
        %v1057 = vsel %vm892, %v1056, 0.0
        %1058 = vadd.xlane.f32.xlu0 %v1057
        %v1059 = vpop.xlane.xlu0 %1058
        %v1060 = vrcp.pop %v1059
        %v1061 = vpack.c.bf16 %v1056, %v1056
        %1063 = vrot.lane.b32.xlu0 %v884, 120
        %v1064 = vpop.permute.xlu0 %1063
        %v1066 = vsel %vm892, %v1061, 0
        %v1069 = vsel %vm953, %v1064, 0
        %1071 = vmatprep.subr.bf16.mxu0 0
        %1072 = vmatpush1.bf16.msra.mxu0 %v1069
        %1073 = vmatprep.subr.bf16.mxu0 0
        %1074 = vmatpush1.bf16.msra.mxu0 0
        %1075 = vmatprep.subr.bf16.mxu0 0
        %1076 = vmatpush1.bf16.msra.mxu0 0
        %1077 = vmatprep.subr.bf16.mxu0 0
        %1078 = vmatpush1.bf16.msra.mxu0 0
        %1079 = vmatprep.subr.bf16.mxu0 0
        %1080 = vmatpush1.bf16.msra.mxu0 0
        %1081 = vmatprep.subr.bf16.mxu0 0
        %1082 = vmatpush1.bf16.msra.mxu0 0
        %1083 = vmatprep.subr.bf16.mxu0 0
        %1084 = vmatpush1.bf16.msra.mxu0 0
        %1085 = vmatprep.subr.bf16.mxu0 0
        %1086 = vmatpush1.bf16.msra.mxu0 0
        %1087 = vmatprep.subr.bf16.mxu0 0
        %1088 = vmatpush1.bf16.msra.mxu0 0
        %1089 = vmatprep.subr.bf16.mxu0 0
        %1090 = vmatpush1.bf16.msra.mxu0 0
        %1091 = vmatprep.subr.bf16.mxu0 0
        %1092 = vmatpush1.bf16.msra.mxu0 0
        %1093 = vmatprep.subr.bf16.mxu0 0
        %1094 = vmatpush1.bf16.msra.mxu0 0
        %1095 = vmatprep.subr.bf16.mxu0 0
        %1096 = vmatpush1.bf16.msra.mxu0 0
        %1097 = vmatprep.subr.bf16.mxu0 0
        %1098 = vmatpush1.bf16.msra.mxu0 0
        %1099 = vmatprep.subr.bf16.mxu0 0
        %1100 = vmatpush1.bf16.msra.mxu0 0
        %1101 = vmatprep.subr.bf16.mxu0 0
        %1102 = vmatpush1.bf16.msra.mxu0 0
        %1103 = vmatprep.mubr.bf16.mxu0 0
        %1104 = vmatmul.mubr.bf16.gmra.mrb[0].mxu0 %v1066
        %v1105 = vpop.f32.mrb[0].mxu0
        %v1106 = vadd.f32 0.0, %v1105
        %v1107 = vpop.f32.mrb[0].mxu0
        %v1108 = vpop.f32.mrb[0].mxu0
        %v1109 = vpop.f32.mrb[0].mxu0
        %1110 = vdwg.mxu0
        %v1111 = vmul.f32 %v1106, %v1060
        %v1112 = vpack.c.bf16 %v1111, %v1111
        %v1114 = vsel %vm892, %v1112, 0
        %v1117 = vsel %vm953, %v886, 0
        %1119 = vmatprep.subr.bf16.mxu0 0
        %1120 = vmatpush1.bf16.msra.mxu0 %v1117
        %1121 = vmatprep.subr.bf16.mxu0 0
        %1122 = vmatpush1.bf16.msra.mxu0 0
        %1123 = vmatprep.subr.bf16.mxu0 0
        %1124 = vmatpush1.bf16.msra.mxu0 0
        %1125 = vmatprep.subr.bf16.mxu0 0
        %1126 = vmatpush1.bf16.msra.mxu0 0
        %1127 = vmatprep.subr.bf16.mxu0 0
        %1128 = vmatpush1.bf16.msra.mxu0 0
        %1129 = vmatprep.subr.bf16.mxu0 0
        %1130 = vmatpush1.bf16.msra.mxu0 0
        %1131 = vmatprep.subr.bf16.mxu0 0
        %1132 = vmatpush1.bf16.msra.mxu0 0
        %1133 = vmatprep.subr.bf16.mxu0 0
        %1134 = vmatpush1.bf16.msra.mxu0 0
        %1135 = vmatprep.subr.bf16.mxu0 0
        %1136 = vmatpush1.bf16.msra.mxu0 0
        %1137 = vmatprep.subr.bf16.mxu0 0
        %1138 = vmatpush1.bf16.msra.mxu0 0
        %1139 = vmatprep.subr.bf16.mxu0 0
        %1140 = vmatpush1.bf16.msra.mxu0 0
        %1141 = vmatprep.subr.bf16.mxu0 0
        %1142 = vmatpush1.bf16.msra.mxu0 0
        %1143 = vmatprep.subr.bf16.mxu0 0
        %1144 = vmatpush1.bf16.msra.mxu0 0
        %1145 = vmatprep.subr.bf16.mxu0 0
        %1146 = vmatpush1.bf16.msra.mxu0 0
        %1147 = vmatprep.subr.bf16.mxu0 0
        %1148 = vmatpush1.bf16.msra.mxu0 0
        %1149 = vmatprep.subr.bf16.mxu0 0
        %1150 = vmatpush1.bf16.msra.mxu0 0
        %1151 = vmatprep.mubr.bf16.mxu0 0
        %1152 = vmatmul.mubr.bf16.gmra.mrb[0].mxu0 %v1114
        %v1153 = vpop.f32.mrb[0].mxu0
        %v1154 = vadd.f32 0.0, %v1153
        %v1155 = vpop.f32.mrb[0].mxu0
        %v1156 = vpop.f32.mrb[0].mxu0
        %v1157 = vpop.f32.mrb[0].mxu0
        %1158 = vdwg.mxu0
        %v1160 = vsel %vm892, %v998, 0
        %v1163 = vsel %vm953, %v885, 0
        %1165 = vmatprep.subr.bf16.mxu0 0
        %1166 = vmatpush1.bf16.msra.mxu0 %v1163
        %1167 = vmatprep.subr.bf16.mxu0 0
        %1168 = vmatpush1.bf16.msra.mxu0 0
        %1169 = vmatprep.subr.bf16.mxu0 0
        %1170 = vmatpush1.bf16.msra.mxu0 0
        %1171 = vmatprep.subr.bf16.mxu0 0
        %1172 = vmatpush1.bf16.msra.mxu0 0
        %1173 = vmatprep.subr.bf16.mxu0 0
        %1174 = vmatpush1.bf16.msra.mxu0 0
        %1175 = vmatprep.subr.bf16.mxu0 0
        %1176 = vmatpush1.bf16.msra.mxu0 0
        %1177 = vmatprep.subr.bf16.mxu0 0
        %1178 = vmatpush1.bf16.msra.mxu0 0
        %1179 = vmatprep.subr.bf16.mxu0 0
        %1180 = vmatpush1.bf16.msra.mxu0 0
        %1181 = vmatprep.subr.bf16.mxu0 0
        %1182 = vmatpush1.bf16.msra.mxu0 0
        %1183 = vmatprep.subr.bf16.mxu0 0
        %1184 = vmatpush1.bf16.msra.mxu0 0
        %1185 = vmatprep.subr.bf16.mxu0 0
        %1186 = vmatpush1.bf16.msra.mxu0 0
        %1187 = vmatprep.subr.bf16.mxu0 0
        %1188 = vmatpush1.bf16.msra.mxu0 0
        %1189 = vmatprep.subr.bf16.mxu0 0
        %1190 = vmatpush1.bf16.msra.mxu0 0
        %1191 = vmatprep.subr.bf16.mxu0 0
        %1192 = vmatpush1.bf16.msra.mxu0 0
        %1193 = vmatprep.subr.bf16.mxu0 0
        %1194 = vmatpush1.bf16.msra.mxu0 0
        %1195 = vmatprep.subr.bf16.mxu0 0
        %1196 = vmatpush1.bf16.msra.mxu0 0
        %1197 = vmatprep.mubr.bf16.mxu0 0
        %1198 = vmatmul.mubr.bf16.gmra.mrb[0].mxu0 %v1160
        %v1199 = vpop.f32.mrb[0].mxu0
        %v1200 = vadd.f32 %v1154, %v1199
        %v1201 = vpop.f32.mrb[0].mxu0
        %v1202 = vpop.f32.mrb[0].mxu0
        %v1203 = vpop.f32.mrb[0].mxu0
        %1204 = vdwg.mxu0
        %1205 = vrot.lane.b32.xlu0 %v882, 112
        %v1206 = vpop.permute.xlu0 %1205
        %1207 = vrot.lane.b32.xlu0 %v883, 112
        %v1208 = vpop.permute.xlu0 %1207
        %v1210 = vsel %vm892, %v1206, 0
        %v1213 = vsel %vm892, %v1208, 0
        %1215 = vmatprep.subr.bf16.mxu0 0
        %1216 = vmatpush1.bf16.xpose.msra.mxu0 %v1213
        %1217 = vmatprep.subr.bf16.mxu0 0
        %1218 = vmatpush1.bf16.xpose.msra.mxu0 0
        %1219 = vmatprep.subr.bf16.mxu0 0
        %1220 = vmatpush1.bf16.xpose.msra.mxu0 0
        %1221 = vmatprep.subr.bf16.mxu0 0
        %1222 = vmatpush1.bf16.xpose.msra.mxu0 0
        %1223 = vmatprep.subr.bf16.mxu0 0
        %1224 = vmatpush1.bf16.xpose.msra.mxu0 0
        %1225 = vmatprep.subr.bf16.mxu0 0
        %1226 = vmatpush1.bf16.xpose.msra.mxu0 0
        %1227 = vmatprep.subr.bf16.mxu0 0
        %1228 = vmatpush1.bf16.xpose.msra.mxu0 0
        %1229 = vmatprep.subr.bf16.mxu0 0
        %1230 = vmatpush1.bf16.xpose.msra.mxu0 0
        %1231 = vmatprep.subr.bf16.mxu0 0
        %1232 = vmatpush1.bf16.xpose.msra.mxu0 0
        %1233 = vmatprep.subr.bf16.mxu0 0
        %1234 = vmatpush1.bf16.xpose.msra.mxu0 0
        %1235 = vmatprep.subr.bf16.mxu0 0
        %1236 = vmatpush1.bf16.xpose.msra.mxu0 0
        %1237 = vmatprep.subr.bf16.mxu0 0
        %1238 = vmatpush1.bf16.xpose.msra.mxu0 0
        %1239 = vmatprep.subr.bf16.mxu0 0
        %1240 = vmatpush1.bf16.xpose.msra.mxu0 0
        %1241 = vmatprep.subr.bf16.mxu0 0
        %1242 = vmatpush1.bf16.xpose.msra.mxu0 0
        %1243 = vmatprep.subr.bf16.mxu0 0
        %1244 = vmatpush1.bf16.xpose.msra.mxu0 0
        %1245 = vmatprep.subr.bf16.mxu0 0
        %1246 = vmatpush1.bf16.xpose.msra.mxu0 0
        %1247 = vmatprep.mubr.bf16.mxu0 0
        %1248 = vmatmul.mubr.bf16.gmra.mrb[0].mxu0 %v1210
        %v1249 = vpop.f32.mrb[0].mxu0
        %v1250 = vadd.f32 %v891, %v1249
        %v1251 = vpop.f32.mrb[0].mxu0
        %v1252 = vpop.f32.mrb[0].mxu0
        %v1253 = vpop.f32.mrb[0].mxu0
        %1254 = vdwg.mxu0
        %v1255 = vsel %vm892, %v1250, -inf
        %1256 = vmax.xlane.f32.xlu0 %v1255
        %v1257 = vpop.xlane.xlu0 %1256
        %v1258 = vsub.f32 %v1250, %v1257
        %v1259 = vmul.f32 %v1258, 1.442695
        %v1260 = vpow.pop %v1259
        %v1261 = vsel %vm892, %v1260, 0.0
        %1262 = vadd.xlane.f32.xlu0 %v1261
        %v1263 = vpop.xlane.xlu0 %1262
        %v1264 = vrcp.pop %v1263
        %v1265 = vpack.c.bf16 %v1260, %v1260
        %1266 = vrot.lane.b32.xlu0 %v884, 112
        %v1267 = vpop.permute.xlu0 %1266
        %v1269 = vsel %vm892, %v1265, 0
        %v1272 = vsel %vm953, %v1267, 0
        %1274 = vmatprep.subr.bf16.mxu0 0
        %1275 = vmatpush1.bf16.msra.mxu0 %v1272
        %1276 = vmatprep.subr.bf16.mxu0 0
        %1277 = vmatpush1.bf16.msra.mxu0 0
        %1278 = vmatprep.subr.bf16.mxu0 0
        %1279 = vmatpush1.bf16.msra.mxu0 0
        %1280 = vmatprep.subr.bf16.mxu0 0
        %1281 = vmatpush1.bf16.msra.mxu0 0
        %1282 = vmatprep.subr.bf16.mxu0 0
        %1283 = vmatpush1.bf16.msra.mxu0 0
        %1284 = vmatprep.subr.bf16.mxu0 0
        %1285 = vmatpush1.bf16.msra.mxu0 0
        %1286 = vmatprep.subr.bf16.mxu0 0
        %1287 = vmatpush1.bf16.msra.mxu0 0
        %1288 = vmatprep.subr.bf16.mxu0 0
        %1289 = vmatpush1.bf16.msra.mxu0 0
        %1290 = vmatprep.subr.bf16.mxu0 0
        %1291 = vmatpush1.bf16.msra.mxu0 0
        %1292 = vmatprep.subr.bf16.mxu0 0
        %1293 = vmatpush1.bf16.msra.mxu0 0
        %1294 = vmatprep.subr.bf16.mxu0 0
        %1295 = vmatpush1.bf16.msra.mxu0 0
        %1296 = vmatprep.subr.bf16.mxu0 0
        %1297 = vmatpush1.bf16.msra.mxu0 0
        %1298 = vmatprep.subr.bf16.mxu0 0
        %1299 = vmatpush1.bf16.msra.mxu0 0
        %1300 = vmatprep.subr.bf16.mxu0 0
        %1301 = vmatpush1.bf16.msra.mxu0 0
        %1302 = vmatprep.subr.bf16.mxu0 0
        %1303 = vmatpush1.bf16.msra.mxu0 0
        %1304 = vmatprep.subr.bf16.mxu0 0
        %1305 = vmatpush1.bf16.msra.mxu0 0
        %1306 = vmatprep.mubr.bf16.mxu0 0
        %1307 = vmatmul.mubr.bf16.gmra.mrb[0].mxu0 %v1269
        %v1308 = vpop.f32.mrb[0].mxu0
        %v1309 = vadd.f32 0.0, %v1308
        %v1310 = vpop.f32.mrb[0].mxu0
        %v1311 = vpop.f32.mrb[0].mxu0
        %v1312 = vpop.f32.mrb[0].mxu0
        %1313 = vdwg.mxu0
        %v1314 = vmul.f32 %v1309, %v1264
        %v1315 = vpack.c.bf16 %v1314, %v1314
        %v1317 = vsel %vm892, %v1315, 0
        %v1320 = vsel %vm953, %v887, 0
        %1322 = vmatprep.subr.bf16.mxu0 0
        %1323 = vmatpush1.bf16.msra.mxu0 %v1320
        %1324 = vmatprep.subr.bf16.mxu0 0
        %1325 = vmatpush1.bf16.msra.mxu0 0
        %1326 = vmatprep.subr.bf16.mxu0 0
        %1327 = vmatpush1.bf16.msra.mxu0 0
        %1328 = vmatprep.subr.bf16.mxu0 0
        %1329 = vmatpush1.bf16.msra.mxu0 0
        %1330 = vmatprep.subr.bf16.mxu0 0
        %1331 = vmatpush1.bf16.msra.mxu0 0
        %1332 = vmatprep.subr.bf16.mxu0 0
        %1333 = vmatpush1.bf16.msra.mxu0 0
        %1334 = vmatprep.subr.bf16.mxu0 0
        %1335 = vmatpush1.bf16.msra.mxu0 0
        %1336 = vmatprep.subr.bf16.mxu0 0
        %1337 = vmatpush1.bf16.msra.mxu0 0
        %1338 = vmatprep.subr.bf16.mxu0 0
        %1339 = vmatpush1.bf16.msra.mxu0 0
        %1340 = vmatprep.subr.bf16.mxu0 0
        %1341 = vmatpush1.bf16.msra.mxu0 0
        %1342 = vmatprep.subr.bf16.mxu0 0
        %1343 = vmatpush1.bf16.msra.mxu0 0
        %1344 = vmatprep.subr.bf16.mxu0 0
        %1345 = vmatpush1.bf16.msra.mxu0 0
        %1346 = vmatprep.subr.bf16.mxu0 0
        %1347 = vmatpush1.bf16.msra.mxu0 0
        %1348 = vmatprep.subr.bf16.mxu0 0
        %1349 = vmatpush1.bf16.msra.mxu0 0
        %1350 = vmatprep.subr.bf16.mxu0 0
        %1351 = vmatpush1.bf16.msra.mxu0 0
        %1352 = vmatprep.subr.bf16.mxu0 0
        %1353 = vmatpush1.bf16.msra.mxu0 0
        %1354 = vmatprep.mubr.bf16.mxu0 0
        %1355 = vmatmul.mubr.bf16.gmra.mrb[0].mxu0 %v1317
        %v1356 = vpop.f32.mrb[0].mxu0
        %v1357 = vadd.f32 0.0, %v1356
        %v1358 = vpop.f32.mrb[0].mxu0
        %v1359 = vpop.f32.mrb[0].mxu0
        %v1360 = vpop.f32.mrb[0].mxu0
        %1361 = vdwg.mxu0
        %v1362 = vadd.f32 %v1200, %v1357
        %1363 = vrot.lane.b32.xlu0 %v882, 104
        %v1364 = vpop.permute.xlu0 %1363
        %1365 = vrot.lane.b32.xlu0 %v883, 104
        %v1366 = vpop.permute.xlu0 %1365
        %v1368 = vsel %vm892, %v1364, 0
        %v1371 = vsel %vm892, %v1366, 0
        %1373 = vmatprep.subr.bf16.mxu0 0
        %1374 = vmatpush1.bf16.xpose.msra.mxu0 %v1371
        %1375 = vmatprep.subr.bf16.mxu0 0
        %1376 = vmatpush1.bf16.xpose.msra.mxu0 0
        %1377 = vmatprep.subr.bf16.mxu0 0
        %1378 = vmatpush1.bf16.xpose.msra.mxu0 0
        %1379 = vmatprep.subr.bf16.mxu0 0
        %1380 = vmatpush1.bf16.xpose.msra.mxu0 0
        %1381 = vmatprep.subr.bf16.mxu0 0
        %1382 = vmatpush1.bf16.xpose.msra.mxu0 0
        %1383 = vmatprep.subr.bf16.mxu0 0
        %1384 = vmatpush1.bf16.xpose.msra.mxu0 0
        %1385 = vmatprep.subr.bf16.mxu0 0
        %1386 = vmatpush1.bf16.xpose.msra.mxu0 0
        %1387 = vmatprep.subr.bf16.mxu0 0
        %1388 = vmatpush1.bf16.xpose.msra.mxu0 0
        %1389 = vmatprep.subr.bf16.mxu0 0
        %1390 = vmatpush1.bf16.xpose.msra.mxu0 0
        %1391 = vmatprep.subr.bf16.mxu0 0
        %1392 = vmatpush1.bf16.xpose.msra.mxu0 0
        %1393 = vmatprep.subr.bf16.mxu0 0
        %1394 = vmatpush1.bf16.xpose.msra.mxu0 0
        %1395 = vmatprep.subr.bf16.mxu0 0
        %1396 = vmatpush1.bf16.xpose.msra.mxu0 0
        %1397 = vmatprep.subr.bf16.mxu0 0
        %1398 = vmatpush1.bf16.xpose.msra.mxu0 0
        %1399 = vmatprep.subr.bf16.mxu0 0
        %1400 = vmatpush1.bf16.xpose.msra.mxu0 0
        %1401 = vmatprep.subr.bf16.mxu0 0
        %1402 = vmatpush1.bf16.xpose.msra.mxu0 0
        %1403 = vmatprep.subr.bf16.mxu0 0
        %1404 = vmatpush1.bf16.xpose.msra.mxu0 0
        %1405 = vmatprep.mubr.bf16.mxu0 0
        %1406 = vmatmul.mubr.bf16.gmra.mrb[0].mxu0 %v1368
        %v1407 = vpop.f32.mrb[0].mxu0
        %v1408 = vadd.f32 %v891, %v1407
        %v1409 = vpop.f32.mrb[0].mxu0
        %v1410 = vpop.f32.mrb[0].mxu0
        %v1411 = vpop.f32.mrb[0].mxu0
        %1412 = vdwg.mxu0
        %v1413 = vsel %vm892, %v1408, -inf
        %1414 = vmax.xlane.f32.xlu0 %v1413
        %v1415 = vpop.xlane.xlu0 %1414
        %v1416 = vsub.f32 %v1408, %v1415
        %v1417 = vmul.f32 %v1416, 1.442695
        %v1418 = vpow.pop %v1417
        %v1419 = vsel %vm892, %v1418, 0.0
        %1420 = vadd.xlane.f32.xlu0 %v1419
        %v1421 = vpop.xlane.xlu0 %1420
        %v1422 = vrcp.pop %v1421
        %v1423 = vpack.c.bf16 %v1418, %v1418
        %1424 = vrot.lane.b32.xlu0 %v884, 104
        %v1425 = vpop.permute.xlu0 %1424
        %v1427 = vsel %vm892, %v1423, 0
        %v1430 = vsel %vm953, %v1425, 0
        %1432 = vmatprep.subr.bf16.mxu0 0
        %1433 = vmatpush1.bf16.msra.mxu0 %v1430
        %1434 = vmatprep.subr.bf16.mxu0 0
        %1435 = vmatpush1.bf16.msra.mxu0 0
        %1436 = vmatprep.subr.bf16.mxu0 0
        %1437 = vmatpush1.bf16.msra.mxu0 0
        %1438 = vmatprep.subr.bf16.mxu0 0
        %1439 = vmatpush1.bf16.msra.mxu0 0
        %1440 = vmatprep.subr.bf16.mxu0 0
        %1441 = vmatpush1.bf16.msra.mxu0 0
        %1442 = vmatprep.subr.bf16.mxu0 0
        %1443 = vmatpush1.bf16.msra.mxu0 0
        %1444 = vmatprep.subr.bf16.mxu0 0
        %1445 = vmatpush1.bf16.msra.mxu0 0
        %1446 = vmatprep.subr.bf16.mxu0 0
        %1447 = vmatpush1.bf16.msra.mxu0 0
        %1448 = vmatprep.subr.bf16.mxu0 0
        %1449 = vmatpush1.bf16.msra.mxu0 0
        %1450 = vmatprep.subr.bf16.mxu0 0
        %1451 = vmatpush1.bf16.msra.mxu0 0
        %1452 = vmatprep.subr.bf16.mxu0 0
        %1453 = vmatpush1.bf16.msra.mxu0 0
        %1454 = vmatprep.subr.bf16.mxu0 0
        %1455 = vmatpush1.bf16.msra.mxu0 0
        %1456 = vmatprep.subr.bf16.mxu0 0
        %1457 = vmatpush1.bf16.msra.mxu0 0
        %1458 = vmatprep.subr.bf16.mxu0 0
        %1459 = vmatpush1.bf16.msra.mxu0 0
        %1460 = vmatprep.subr.bf16.mxu0 0
        %1461 = vmatpush1.bf16.msra.mxu0 0
        %1462 = vmatprep.subr.bf16.mxu0 0
        %1463 = vmatpush1.bf16.msra.mxu0 0
        %1464 = vmatprep.mubr.bf16.mxu0 0
        %1465 = vmatmul.mubr.bf16.gmra.mrb[0].mxu0 %v1427
        %v1466 = vpop.f32.mrb[0].mxu0
        %v1467 = vadd.f32 0.0, %v1466
        %v1468 = vpop.f32.mrb[0].mxu0
        %v1469 = vpop.f32.mrb[0].mxu0
        %v1470 = vpop.f32.mrb[0].mxu0
        %1471 = vdwg.mxu0
        %v1472 = vmul.f32 %v1467, %v1422
        %v1473 = vpack.c.bf16 %v1472, %v1472
        %v1475 = vsel %vm892, %v1473, 0
        %v1478 = vsel %vm953, %v888, 0
        %1480 = vmatprep.subr.bf16.mxu0 0
        %1481 = vmatpush1.bf16.msra.mxu0 %v1478
        %1482 = vmatprep.subr.bf16.mxu0 0
        %1483 = vmatpush1.bf16.msra.mxu0 0
        %1484 = vmatprep.subr.bf16.mxu0 0
        %1485 = vmatpush1.bf16.msra.mxu0 0
        %1486 = vmatprep.subr.bf16.mxu0 0
        %1487 = vmatpush1.bf16.msra.mxu0 0
        %1488 = vmatprep.subr.bf16.mxu0 0
        %1489 = vmatpush1.bf16.msra.mxu0 0
        %1490 = vmatprep.subr.bf16.mxu0 0
        %1491 = vmatpush1.bf16.msra.mxu0 0
        %1492 = vmatprep.subr.bf16.mxu0 0
        %1493 = vmatpush1.bf16.msra.mxu0 0
        %1494 = vmatprep.subr.bf16.mxu0 0
        %1495 = vmatpush1.bf16.msra.mxu0 0
        %1496 = vmatprep.subr.bf16.mxu0 0
        %1497 = vmatpush1.bf16.msra.mxu0 0
        %1498 = vmatprep.subr.bf16.mxu0 0
        %1499 = vmatpush1.bf16.msra.mxu0 0
        %1500 = vmatprep.subr.bf16.mxu0 0
        %1501 = vmatpush1.bf16.msra.mxu0 0
        %1502 = vmatprep.subr.bf16.mxu0 0
        %1503 = vmatpush1.bf16.msra.mxu0 0
        %1504 = vmatprep.subr.bf16.mxu0 0
        %1505 = vmatpush1.bf16.msra.mxu0 0
        %1506 = vmatprep.subr.bf16.mxu0 0
        %1507 = vmatpush1.bf16.msra.mxu0 0
        %1508 = vmatprep.subr.bf16.mxu0 0
        %1509 = vmatpush1.bf16.msra.mxu0 0
        %1510 = vmatprep.subr.bf16.mxu0 0
        %1511 = vmatpush1.bf16.msra.mxu0 0
        %1512 = vmatprep.mubr.bf16.mxu0 0
        %1513 = vmatmul.mubr.bf16.gmra.mrb[0].mxu0 %v1475
        %v1514 = vpop.f32.mrb[0].mxu0
        %v1515 = vadd.f32 0.0, %v1514
        %v1516 = vpop.f32.mrb[0].mxu0
        %v1517 = vpop.f32.mrb[0].mxu0
        %v1518 = vpop.f32.mrb[0].mxu0
        %1519 = vdwg.mxu0
        %v1520 = vadd.f32 %v1362, %v1515
        %v1521 = vadd.f32 %v681, %v1520
        %v1522 = vld [vmem:[#allocation19] sm:$0x1]
        %v1524 = vlaneseq
        %v1525 = vshrl.u32 %v1524, 7
        %v1526 = vsub.s32 0, %v1525
        %v1527 = vrot.slane %v1522, %v1526
        %v1529 = vadd.f32 %v1521, %v1527
        %v1530 = vsel %vm708, %v1529, 0.0
        %1531 = vadd.xlane.f32.xlu0 %v1530
        %v1532 = vpop.xlane.xlu0 %1531
        %v1533 = vrcp.pop 32.0
        %v1534 = vmul.f32 %v1532, %v1533
        %v1535 = vsub.f32 %v1529, %v1534
        %v1536 = vmul.f32 %v1535, %v1535
        %v1537 = vsel %vm708, %v1536, 0.0
        %1538 = vadd.xlane.f32.xlu0 %v1537
        %v1539 = vpop.xlane.xlu0 %1538
        %v1540 = vmul.f32 %v1539, %v1533
        %v1541 = vadd.f32 %v1540, 1e-05
        %v1542 = vrsqrt.pop %v1541
        %v1543 = vmul.f32 %v1535, %v1542
        %v1544 = vld [vmem:[#allocation20] sm:$0x1]
        %v1546 = vlaneseq
        %v1547 = vshrl.u32 %v1546, 7
        %v1548 = vsub.s32 0, %v1547
        %v1549 = vrot.slane %v1544, %v1548
        %v1551 = vmul.f32 %v1543, %v1549
        %v1552 = vld [vmem:[#allocation22] sm:$0x1]
        %v1554 = vlaneseq
        %v1555 = vshrl.u32 %v1554, 7
        %v1556 = vsub.s32 0, %v1555
        %v1557 = vrot.slane %v1552, %v1556
        %v1559 = vadd.f32 %v1551, %v1557
        %1560 = vst.msk [vmem:[%s679] sm:$0xff] %vm708, %v1559
        %s1561 = sand.u32 %s352, 1
        %s1562 = scalar_lea.sflag [#allocation4], %s1561
        %s1563 = sand.u32 %s352, 1
        %s1564 = smul.addr %s1563, 8
        %s1565 = scalar_lea.vmem [#allocation23], %s1564
        // Predicated region
        $region125: #{transformer_decoder_forward.6} parent=71 // pred_check
          %p1566 = pneg %p362
        $region126: #{transformer_decoder_forward.6} parent=71 // pred_check_branch
          %1568 = sbr.rel (%p1566) target = $region128
        $region127: #{transformer_decoder_forward.6} parent=71 // pred_region
          %s1570 = ssub.s32 128, 128
          %1571 = vsyncadd %s1562, %s1570
          %s1572 = sadd.s32 %s43, %s42
          %s1573 = smul.addr %s1572, 128
          %s1574 = scalar_lea.hbm %s13, %s1573
          %s1576 = sshll.u32 %s1565, 4
          %s1577 = int_to_ptr.vmem [resolvable:$true] %s1576
          %1579 = dma.vmem_to_hbm [thread:$0]  %s1577, 128, %s1574, %s1562
        $region128: #{transformer_decoder_forward.6} parent=71 // pred_fallthru
          _
      $region72: #{transformer_decoder_forward.6} parent=5 // pred_fallthru
        _
      %p1580 = scmp.le.s32.totalorder 2, %s33
      // Predicated region
      $region129: #{transformer_decoder_forward.6} parent=5 // pred_check
        %p1581 = pneg %p1580
      $region130: #{transformer_decoder_forward.6} parent=5 // pred_check_branch
        %1583 = sbr.rel (%p1581) target = $region132
      $region131: #{transformer_decoder_forward.6} parent=5 // pred_region
        %s1584 = ssub.s32 %s33, 2
        // Predicated region
        $region133: #{transformer_decoder_forward.6} parent=131 // pred_check
          %p1585 = pneg %p368
        $region134: #{transformer_decoder_forward.6} parent=131 // pred_check_branch
          %1587 = sbr.rel (%p1585) target = $region136
        $region135: #{transformer_decoder_forward.6} parent=131 // pred_region
          %s1588 = sand.u32 %s353, 1
          %s1589 = scalar_lea.sflag [#allocation4], %s1588
          %s1590 = sand.u32 %s353, 1
          %s1591 = smul.addr %s1590, 8
          %s1592 = scalar_lea.vmem [#allocation23], %s1591
          %1593 = dma.done %s1589, 128
        $region136: #{transformer_decoder_forward.6} parent=131 // pred_fallthru
          _
      $region132: #{transformer_decoder_forward.6} parent=5 // pred_fallthru
        _
    $region6: #{transformer_decoder_forward.6} parent=1 // loop_footer
      %s37 = sadd.s32 1, %s33
    $region7: #{transformer_decoder_forward.6} parent=1 // loop_footer_branch
      %32 = sbr.rel target = $region3
    $region8: #{transformer_decoder_forward.6} parent=1 // loop_exit
      _
    %1594 = vsyncpa [#allocation3], 1
    %s1595 = scalar_lea.sflag [#allocation3], 1
    %1596 = vsyncpa %s1595, 1
    %1597 = vsyncpa [#allocation6], 1
    %s1598 = scalar_lea.sflag [#allocation6], 1
    %1599 = vsyncpa %s1598, 1
    %1600 = vsyncpa [#allocation9], 1
    %1601 = vsyncpa [#allocation12], 1
    %1602 = vsyncpa [#allocation15], 1
    %1603 = vsyncpa [#allocation18], 1
    %1604 = vsyncpa [#allocation21], 1
    %1605 = vsyncpa [#allocation4], 1
    %s1606 = scalar_lea.sflag [#allocation4], 1
    %1607 = vsyncpa %s1606, 1

// kernel: transformer_decoder_forward.7
$region0: #{transformer_decoder_forward.7}
  #allocation0 [shape = 'u32[]', space=smem, size = 0x4, offset = 0x4, fixed_abs, tag = 'smem constant byte address 0x4 - core index']
  #allocation1 [shape = 'u32[144,128]{1,0:T(1,128)}', space=vmem, size = 0x12000, scoped, tag = 'internal scratch']
  %s0 = inlined_call_operand.hbm [shape: f32[2,8,32], index: 0, kind: input, shape index: {}]
  %s1 = inlined_call_operand.hbm [shape: f32[2,16,32], index: 1, kind: input, shape index: {}]
  %s2 = inlined_call_operand.hbm [shape: bf16[32,32], index: 2, kind: input, shape index: {}]
  %s3 = inlined_call_operand.hbm [shape: f32[1,32], index: 3, kind: input, shape index: {}]
  %s4 = inlined_call_operand.hbm [shape: bf16[32,32], index: 4, kind: input, shape index: {}]
  %s5 = inlined_call_operand.hbm [shape: f32[1,32], index: 5, kind: input, shape index: {}]
  %s6 = inlined_call_operand.hbm [shape: bf16[32,32], index: 6, kind: input, shape index: {}]
  %s7 = inlined_call_operand.hbm [shape: f32[1,32], index: 7, kind: input, shape index: {}]
  %s8 = inlined_call_operand.hbm [shape: bf16[32,32], index: 8, kind: input, shape index: {}]
  %s9 = inlined_call_operand.hbm [shape: f32[1,32], index: 9, kind: input, shape index: {}]
  %s10 = inlined_call_operand.hbm [shape: f32[1,32], index: 10, kind: input, shape index: {}]
  %s11 = inlined_call_operand.hbm [shape: f32[1,32], index: 11, kind: input, shape index: {}]
  %s12 = inlined_call_operand.hbm [shape: f32[2,8,32], index: 12, kind: output, shape index: {}]
  %s13 = sld [smem:[#allocation0]]
  $region129: #{transformer_decoder_forward.7} parent=0
    _
  %s15 = ssub.s32 1, %s13
  %s16 = scalar_select 0, %s15, %s13
  $region1: #{transformer_decoder_forward.7} parent=0
    #allocation2 [shape = 'u8[8192]{0}', space=vmem, size = 0x2000, scoped, tag = 'input window, operand 0']
    #allocation3 [shape = 's32[2]{0}', space=sflag, size = 0x8, scoped, tag = 'scoped memory for transformer_decoder_forward.7']
    #allocation4 [shape = 's32[2]{0}', space=sflag, size = 0x8, scoped, tag = 'scoped memory for transformer_decoder_forward.7']
    #allocation5 [shape = 'u8[16384]{0}', space=vmem, size = 0x4000, scoped, tag = 'input window, operand 1']
    #allocation6 [shape = 's32[2]{0}', space=sflag, size = 0x8, scoped, tag = 'scoped memory for transformer_decoder_forward.7']
    #allocation7 [shape = 'u8[8192]{0}', space=vmem, size = 0x2000, scoped, tag = 'input window, operand 2, single buffered']
    #allocation8 [shape = 'u8[512]{0}', space=vmem, size = 0x400, scoped, tag = 'input window, operand 3, single buffered']
    #allocation9 [shape = 's32[1]{0}', space=sflag, size = 0x4, scoped, tag = 'scoped memory for transformer_decoder_forward.7']
    #allocation10 [shape = 'u8[8192]{0}', space=vmem, size = 0x2000, scoped, tag = 'input window, operand 4, single buffered']
    #allocation11 [shape = 'u8[512]{0}', space=vmem, size = 0x400, scoped, tag = 'input window, operand 5, single buffered']
    #allocation12 [shape = 's32[1]{0}', space=sflag, size = 0x4, scoped, tag = 'scoped memory for transformer_decoder_forward.7']
    #allocation13 [shape = 'u8[8192]{0}', space=vmem, size = 0x2000, scoped, tag = 'input window, operand 6, single buffered']
    #allocation14 [shape = 'u8[512]{0}', space=vmem, size = 0x400, scoped, tag = 'input window, operand 7, single buffered']
    #allocation15 [shape = 's32[1]{0}', space=sflag, size = 0x4, scoped, tag = 'scoped memory for transformer_decoder_forward.7']
    #allocation16 [shape = 'u8[8192]{0}', space=vmem, size = 0x2000, scoped, tag = 'input window, operand 8, single buffered']
    #allocation17 [shape = 'u8[512]{0}', space=vmem, size = 0x400, scoped, tag = 'input window, operand 9, single buffered']
    #allocation18 [shape = 's32[1]{0}', space=sflag, size = 0x4, scoped, tag = 'scoped memory for transformer_decoder_forward.7']
    #allocation19 [shape = 'u8[512]{0}', space=vmem, size = 0x400, scoped, tag = 'input window, operand 10, single buffered']
    #allocation20 [shape = 'u8[512]{0}', space=vmem, size = 0x400, scoped, tag = 'input window, operand 11, single buffered']
    #allocation21 [shape = 's32[1]{0}', space=sflag, size = 0x4, scoped, tag = 'scoped memory for transformer_decoder_forward.7']
    #allocation22 [shape = 'u8[8192]{0}', space=vmem, size = 0x2000, scoped, tag = 'output window, operand 0']
    %17 = vsyncpa [#allocation3], 0
    %s18 = scalar_lea.sflag [#allocation3], 1
    %19 = vsyncpa %s18, 0
    %20 = vsyncpa [#allocation6], 0
    %s21 = scalar_lea.sflag [#allocation6], 1
    %22 = vsyncpa %s21, 0
    %23 = vsyncpa [#allocation9], 0
    %24 = vsyncpa [#allocation12], 0
    %25 = vsyncpa [#allocation15], 0
    %26 = vsyncpa [#allocation18], 0
    %27 = vsyncpa [#allocation21], 0
    %28 = vsyncpa [#allocation4], 0
    %s29 = scalar_lea.sflag [#allocation4], 1
    %30 = vsyncpa %s29, 0
    loop: start=0, step=1, limit=4
    $region2: #{transformer_decoder_forward.7} parent=1 // loop_pre_header
      _
    $region3: #{transformer_decoder_forward.7} parent=1 // loop_header
      %s32 = sphi 0, %s36
      %p33 = scmp.ge.s32.totalorder %s32, 4
      %s39 = sphi 0, %s51
      %s40 = sphi 0, %s47
      %s41 = sphi 0, %s39
      %s42 = sphi 0, %s40
      %s43 = sphi 0, %s41
      %s44 = sphi 0, %s42
      %s56 = sphi 0, %s58
      %s59 = sphi 0, %s56
      %s60 = sphi 0, %s59
      %s76 = sphi 0, %s60
      %s82 = sphi 0, %s84
      %s85 = sphi 0, %s82
      %s86 = sphi 0, %s85
      %s102 = sphi 0, %s86
      %s106 = sphi 0, %s106
      %s108 = sphi 0, %s106
      %s109 = sphi 0, %s108
      %s123 = sphi 0, %s109
      %s127 = sphi 0, %s127
      %s129 = sphi 0, %s127
      %s130 = sphi 0, %s129
      %s144 = sphi 0, %s130
      %s148 = sphi 0, %s148
      %s150 = sphi 0, %s148
      %s151 = sphi 0, %s150
      %s165 = sphi 0, %s151
      %s169 = sphi 0, %s169
      %s171 = sphi 0, %s169
      %s172 = sphi 0, %s171
      %s186 = sphi 0, %s172
      %s190 = sphi 0, %s190
      %s192 = sphi 0, %s190
      %s193 = sphi 0, %s192
      %s207 = sphi 0, %s193
      %s211 = sphi 0, %s211
      %s213 = sphi 0, %s211
      %s214 = sphi 0, %s213
      %s228 = sphi 0, %s214
      %s232 = sphi 0, %s232
      %s234 = sphi 0, %s232
      %s235 = sphi 0, %s234
      %s249 = sphi 0, %s235
      %s253 = sphi 0, %s253
      %s255 = sphi 0, %s253
      %s256 = sphi 0, %s255
      %s270 = sphi 0, %s256
      %s274 = sphi 0, %s274
      %s276 = sphi 0, %s274
      %s277 = sphi 0, %s276
      %s291 = sphi 0, %s277
      %s295 = sphi 0, %s295
      %s297 = sphi 0, %s295
      %s298 = sphi 0, %s297
      %s312 = sphi 0, %s298
      %s320 = sphi 0, %s322
      %s323 = sphi 0, %s320
      %s324 = sphi 0, %s323
      %s340 = sphi 0, %s324
    $region4: #{transformer_decoder_forward.7} parent=1 // loop_header_branch
      %35 = sbr.rel (%p33) target = $region8
    $region5: #{transformer_decoder_forward.7} parent=1 // loop_body
      %s37 = ssub.s32 %s32, 1
      %s38 = ssub.s32 %s32, 2
      %s45 = sadd.s32 1, %s40
      %p46 = scmp.ge.s32.totalorder %s45, 1
      %s47 = scalar_select %p46, 0, %s45
      %s48 = sadd.s32 1, %s39
      %s49 = scalar_select %p46, %s48, %s39
      %p50 = scmp.ge.s32.totalorder %s49, 2
      %s51 = scalar_select %p50, 0, %s49
      %s52 = ssub.s32 %s39, %s51
      %s53 = ssub.s32 %s40, %s47
      %s54 = sor.u32 %s52, %s53
      %p55 = scmp.eq.s32.totalorder %s54, 0
      %s57 = sadd.s32 %s56, 1
      %s58 = scalar_select %p55, %s56, %s57
      %p61 = pneg %p55
      %p62 = scmp.eq.s32.totalorder %s32, 1
      %p63 = por %p61, %p62
      %p64 = scmp.ne.s32.totalorder %s56, %s59
      %p65 = scmp.eq.s32.totalorder %s32, 0
      %p66 = por %p64, %p65
      %p67 = scmp.ne.s32.totalorder %s56, %s59
      %p68 = scmp.eq.s32.totalorder %s37, 1
      %p69 = por %p67, %p68
      %p70 = scmp.ne.s32.totalorder %s59, %s60
      %p71 = scmp.eq.s32.totalorder %s37, 0
      %p72 = por %p70, %p71
      %p73 = scmp.ne.s32.totalorder %s59, %s60
      %p74 = scmp.eq.s32.totalorder %s38, 1
      %p75 = por %p73, %p74
      %p77 = scmp.ne.s32.totalorder %s60, %s76
      %p78 = scmp.eq.s32.totalorder %s38, 0
      %p79 = por %p77, %p78
      %s80 = ssub.s32 %s39, %s51
      %p81 = scmp.eq.s32.totalorder %s80, 0
      %s83 = sadd.s32 %s82, 1
      %s84 = scalar_select %p81, %s82, %s83
      %p87 = pneg %p81
      %p88 = scmp.eq.s32.totalorder %s32, 1
      %p89 = por %p87, %p88
      %p90 = scmp.ne.s32.totalorder %s82, %s85
      %p91 = scmp.eq.s32.totalorder %s32, 0
      %p92 = por %p90, %p91
      %p93 = scmp.ne.s32.totalorder %s82, %s85
      %p94 = scmp.eq.s32.totalorder %s37, 1
      %p95 = por %p93, %p94
      %p96 = scmp.ne.s32.totalorder %s85, %s86
      %p97 = scmp.eq.s32.totalorder %s37, 0
      %p98 = por %p96, %p97
      %p99 = scmp.ne.s32.totalorder %s85, %s86
      %p100 = scmp.eq.s32.totalorder %s38, 1
      %p101 = por %p99, %p100
      %p103 = scmp.ne.s32.totalorder %s86, %s102
      %p104 = scmp.eq.s32.totalorder %s38, 0
      %p105 = por %p103, %p104
      %s107 = sadd.s32 %s106, 1
      %p110 = scmp.eq.s32.totalorder %s32, 1
      %p111 = scmp.ne.s32.totalorder %s106, %s108
      %p112 = scmp.eq.s32.totalorder %s32, 0
      %p113 = por %p111, %p112
      %p114 = scmp.ne.s32.totalorder %s106, %s108
      %p115 = scmp.eq.s32.totalorder %s37, 1
      %p116 = por %p114, %p115
      %p117 = scmp.ne.s32.totalorder %s108, %s109
      %p118 = scmp.eq.s32.totalorder %s37, 0
      %p119 = por %p117, %p118
      %p120 = scmp.ne.s32.totalorder %s108, %s109
      %p121 = scmp.eq.s32.totalorder %s38, 1
      %p122 = por %p120, %p121
      %p124 = scmp.ne.s32.totalorder %s109, %s123
      %p125 = scmp.eq.s32.totalorder %s38, 0
      %p126 = por %p124, %p125
      %s128 = sadd.s32 %s127, 1
      %p131 = scmp.eq.s32.totalorder %s32, 1
      %p132 = scmp.ne.s32.totalorder %s127, %s129
      %p133 = scmp.eq.s32.totalorder %s32, 0
      %p134 = por %p132, %p133
      %p135 = scmp.ne.s32.totalorder %s127, %s129
      %p136 = scmp.eq.s32.totalorder %s37, 1
      %p137 = por %p135, %p136
      %p138 = scmp.ne.s32.totalorder %s129, %s130
      %p139 = scmp.eq.s32.totalorder %s37, 0
      %p140 = por %p138, %p139
      %p141 = scmp.ne.s32.totalorder %s129, %s130
      %p142 = scmp.eq.s32.totalorder %s38, 1
      %p143 = por %p141, %p142
      %p145 = scmp.ne.s32.totalorder %s130, %s144
      %p146 = scmp.eq.s32.totalorder %s38, 0
      %p147 = por %p145, %p146
      %s149 = sadd.s32 %s148, 1
      %p152 = scmp.eq.s32.totalorder %s32, 1
      %p153 = scmp.ne.s32.totalorder %s148, %s150
      %p154 = scmp.eq.s32.totalorder %s32, 0
      %p155 = por %p153, %p154
      %p156 = scmp.ne.s32.totalorder %s148, %s150
      %p157 = scmp.eq.s32.totalorder %s37, 1
      %p158 = por %p156, %p157
      %p159 = scmp.ne.s32.totalorder %s150, %s151
      %p160 = scmp.eq.s32.totalorder %s37, 0
      %p161 = por %p159, %p160
      %p162 = scmp.ne.s32.totalorder %s150, %s151
      %p163 = scmp.eq.s32.totalorder %s38, 1
      %p164 = por %p162, %p163
      %p166 = scmp.ne.s32.totalorder %s151, %s165
      %p167 = scmp.eq.s32.totalorder %s38, 0
      %p168 = por %p166, %p167
      %s170 = sadd.s32 %s169, 1
      %p173 = scmp.eq.s32.totalorder %s32, 1
      %p174 = scmp.ne.s32.totalorder %s169, %s171
      %p175 = scmp.eq.s32.totalorder %s32, 0
      %p176 = por %p174, %p175
      %p177 = scmp.ne.s32.totalorder %s169, %s171
      %p178 = scmp.eq.s32.totalorder %s37, 1
      %p179 = por %p177, %p178
      %p180 = scmp.ne.s32.totalorder %s171, %s172
      %p181 = scmp.eq.s32.totalorder %s37, 0
      %p182 = por %p180, %p181
      %p183 = scmp.ne.s32.totalorder %s171, %s172
      %p184 = scmp.eq.s32.totalorder %s38, 1
      %p185 = por %p183, %p184
      %p187 = scmp.ne.s32.totalorder %s172, %s186
      %p188 = scmp.eq.s32.totalorder %s38, 0
      %p189 = por %p187, %p188
      %s191 = sadd.s32 %s190, 1
      %p194 = scmp.eq.s32.totalorder %s32, 1
      %p195 = scmp.ne.s32.totalorder %s190, %s192
      %p196 = scmp.eq.s32.totalorder %s32, 0
      %p197 = por %p195, %p196
      %p198 = scmp.ne.s32.totalorder %s190, %s192
      %p199 = scmp.eq.s32.totalorder %s37, 1
      %p200 = por %p198, %p199
      %p201 = scmp.ne.s32.totalorder %s192, %s193
      %p202 = scmp.eq.s32.totalorder %s37, 0
      %p203 = por %p201, %p202
      %p204 = scmp.ne.s32.totalorder %s192, %s193
      %p205 = scmp.eq.s32.totalorder %s38, 1
      %p206 = por %p204, %p205
      %p208 = scmp.ne.s32.totalorder %s193, %s207
      %p209 = scmp.eq.s32.totalorder %s38, 0
      %p210 = por %p208, %p209
      %s212 = sadd.s32 %s211, 1
      %p215 = scmp.eq.s32.totalorder %s32, 1
      %p216 = scmp.ne.s32.totalorder %s211, %s213
      %p217 = scmp.eq.s32.totalorder %s32, 0
      %p218 = por %p216, %p217
      %p219 = scmp.ne.s32.totalorder %s211, %s213
      %p220 = scmp.eq.s32.totalorder %s37, 1
      %p221 = por %p219, %p220
      %p222 = scmp.ne.s32.totalorder %s213, %s214
      %p223 = scmp.eq.s32.totalorder %s37, 0
      %p224 = por %p222, %p223
      %p225 = scmp.ne.s32.totalorder %s213, %s214
      %p226 = scmp.eq.s32.totalorder %s38, 1
      %p227 = por %p225, %p226
      %p229 = scmp.ne.s32.totalorder %s214, %s228
      %p230 = scmp.eq.s32.totalorder %s38, 0
      %p231 = por %p229, %p230
      %s233 = sadd.s32 %s232, 1
      %p236 = scmp.eq.s32.totalorder %s32, 1
      %p237 = scmp.ne.s32.totalorder %s232, %s234
      %p238 = scmp.eq.s32.totalorder %s32, 0
      %p239 = por %p237, %p238
      %p240 = scmp.ne.s32.totalorder %s232, %s234
      %p241 = scmp.eq.s32.totalorder %s37, 1
      %p242 = por %p240, %p241
      %p243 = scmp.ne.s32.totalorder %s234, %s235
      %p244 = scmp.eq.s32.totalorder %s37, 0
      %p245 = por %p243, %p244
      %p246 = scmp.ne.s32.totalorder %s234, %s235
      %p247 = scmp.eq.s32.totalorder %s38, 1
      %p248 = por %p246, %p247
      %p250 = scmp.ne.s32.totalorder %s235, %s249
      %p251 = scmp.eq.s32.totalorder %s38, 0
      %p252 = por %p250, %p251
      %s254 = sadd.s32 %s253, 1
      %p257 = scmp.eq.s32.totalorder %s32, 1
      %p258 = scmp.ne.s32.totalorder %s253, %s255
      %p259 = scmp.eq.s32.totalorder %s32, 0
      %p260 = por %p258, %p259
      %p261 = scmp.ne.s32.totalorder %s253, %s255
      %p262 = scmp.eq.s32.totalorder %s37, 1
      %p263 = por %p261, %p262
      %p264 = scmp.ne.s32.totalorder %s255, %s256
      %p265 = scmp.eq.s32.totalorder %s37, 0
      %p266 = por %p264, %p265
      %p267 = scmp.ne.s32.totalorder %s255, %s256
      %p268 = scmp.eq.s32.totalorder %s38, 1
      %p269 = por %p267, %p268
      %p271 = scmp.ne.s32.totalorder %s256, %s270
      %p272 = scmp.eq.s32.totalorder %s38, 0
      %p273 = por %p271, %p272
      %s275 = sadd.s32 %s274, 1
      %p278 = scmp.eq.s32.totalorder %s32, 1
      %p279 = scmp.ne.s32.totalorder %s274, %s276
      %p280 = scmp.eq.s32.totalorder %s32, 0
      %p281 = por %p279, %p280
      %p282 = scmp.ne.s32.totalorder %s274, %s276
      %p283 = scmp.eq.s32.totalorder %s37, 1
      %p284 = por %p282, %p283
      %p285 = scmp.ne.s32.totalorder %s276, %s277
      %p286 = scmp.eq.s32.totalorder %s37, 0
      %p287 = por %p285, %p286
      %p288 = scmp.ne.s32.totalorder %s276, %s277
      %p289 = scmp.eq.s32.totalorder %s38, 1
      %p290 = por %p288, %p289
      %p292 = scmp.ne.s32.totalorder %s277, %s291
      %p293 = scmp.eq.s32.totalorder %s38, 0
      %p294 = por %p292, %p293
      %s296 = sadd.s32 %s295, 1
      %p299 = scmp.eq.s32.totalorder %s32, 1
      %p300 = scmp.ne.s32.totalorder %s295, %s297
      %p301 = scmp.eq.s32.totalorder %s32, 0
      %p302 = por %p300, %p301
      %p303 = scmp.ne.s32.totalorder %s295, %s297
      %p304 = scmp.eq.s32.totalorder %s37, 1
      %p305 = por %p303, %p304
      %p306 = scmp.ne.s32.totalorder %s297, %s298
      %p307 = scmp.eq.s32.totalorder %s37, 0
      %p308 = por %p306, %p307
      %p309 = scmp.ne.s32.totalorder %s297, %s298
      %p310 = scmp.eq.s32.totalorder %s38, 1
      %p311 = por %p309, %p310
      %p313 = scmp.ne.s32.totalorder %s298, %s312
      %p314 = scmp.eq.s32.totalorder %s38, 0
      %p315 = por %p313, %p314
      %s316 = ssub.s32 %s39, %s51
      %s317 = ssub.s32 %s40, %s47
      %s318 = sor.u32 %s316, %s317
      %p319 = scmp.eq.s32.totalorder %s318, 0
      %s321 = sadd.s32 %s320, 1
      %s322 = scalar_select %p319, %s320, %s321
      %p325 = pneg %p319
      %p326 = scmp.eq.s32.totalorder %s32, 1
      %p327 = por %p325, %p326
      %p328 = scmp.ne.s32.totalorder %s320, %s323
      %p329 = scmp.eq.s32.totalorder %s32, 0
      %p330 = por %p328, %p329
      %p331 = scmp.ne.s32.totalorder %s320, %s323
      %p332 = scmp.eq.s32.totalorder %s37, 1
      %p333 = por %p331, %p332
      %p334 = scmp.ne.s32.totalorder %s323, %s324
      %p335 = scmp.eq.s32.totalorder %s37, 0
      %p336 = por %p334, %p335
      %p337 = scmp.ne.s32.totalorder %s323, %s324
      %p338 = scmp.eq.s32.totalorder %s38, 1
      %p339 = por %p337, %p338
      %p341 = scmp.ne.s32.totalorder %s324, %s340
      %p342 = scmp.eq.s32.totalorder %s38, 0
      %p343 = por %p341, %p342
      %p344 = scmp.le.s32.totalorder 1, %s32
      %p345 = scmp.lt.s32.totalorder %s32, 3
      %p346 = pnand %p344, %p345
      %p347 = pneg %p346
      // Predicated region
      $region9: #{transformer_decoder_forward.7} parent=5 // pred_check
        _
      $region10: #{transformer_decoder_forward.7} parent=5 // pred_check_branch
        %349 = sbr.rel (%p346) target = $region12
      $region11: #{transformer_decoder_forward.7} parent=5 // pred_region
        %s350 = ssub.s32 %s32, 1
        // Predicated region
        $region13: #{transformer_decoder_forward.7} parent=11 // pred_check
          %p351 = pneg %p119
        $region14: #{transformer_decoder_forward.7} parent=11 // pred_check_branch
          %353 = sbr.rel (%p351) target = $region16
        $region15: #{transformer_decoder_forward.7} parent=11 // pred_region
          %s355 = ssub.s32 256, 256
          %356 = vsyncadd [#allocation6], %s355
          %s357 = sshll.u32 [#allocation7], 4
          %s358 = int_to_ptr.vmem [resolvable:$true] %s357
          %363 = dma.hbm_to_vmem [thread:$0]  %s2, 256, %s358, [#allocation6], 64, 64, 4
        $region16: #{transformer_decoder_forward.7} parent=11 // pred_fallthru
          _
        // Predicated region
        $region17: #{transformer_decoder_forward.7} parent=11 // pred_check
          %p364 = pneg %p140
        $region18: #{transformer_decoder_forward.7} parent=11 // pred_check_branch
          %366 = sbr.rel (%p364) target = $region20
        $region19: #{transformer_decoder_forward.7} parent=11 // pred_region
          %s368 = ssub.s32 16, 16
          %369 = vsyncadd [#allocation9], %s368
          %s371 = sshll.u32 [#allocation8], 4
          %s372 = int_to_ptr.vmem [resolvable:$true] %s371
          %374 = dma.hbm_to_vmem [thread:$0]  %s3, 16, %s372, [#allocation9]
        $region20: #{transformer_decoder_forward.7} parent=11 // pred_fallthru
          _
        // Predicated region
        $region21: #{transformer_decoder_forward.7} parent=11 // pred_check
          %p375 = pneg %p161
        $region22: #{transformer_decoder_forward.7} parent=11 // pred_check_branch
          %377 = sbr.rel (%p375) target = $region24
        $region23: #{transformer_decoder_forward.7} parent=11 // pred_region
          %s379 = ssub.s32 256, 256
          %380 = vsyncadd [#allocation9], %s379
          %s381 = sshll.u32 [#allocation10], 4
          %s382 = int_to_ptr.vmem [resolvable:$true] %s381
          %387 = dma.hbm_to_vmem [thread:$0]  %s4, 256, %s382, [#allocation9], 64, 64, 4
        $region24: #{transformer_decoder_forward.7} parent=11 // pred_fallthru
          _
        // Predicated region
        $region25: #{transformer_decoder_forward.7} parent=11 // pred_check
          %p388 = pneg %p182
        $region26: #{transformer_decoder_forward.7} parent=11 // pred_check_branch
          %390 = sbr.rel (%p388) target = $region28
        $region27: #{transformer_decoder_forward.7} parent=11 // pred_region
          %s392 = ssub.s32 16, 16
          %393 = vsyncadd [#allocation12], %s392
          %s395 = sshll.u32 [#allocation11], 4
          %s396 = int_to_ptr.vmem [resolvable:$true] %s395
          %398 = dma.hbm_to_vmem [thread:$0]  %s5, 16, %s396, [#allocation12]
        $region28: #{transformer_decoder_forward.7} parent=11 // pred_fallthru
          _
        // Predicated region
        $region29: #{transformer_decoder_forward.7} parent=11 // pred_check
          %p399 = pneg %p203
        $region30: #{transformer_decoder_forward.7} parent=11 // pred_check_branch
          %401 = sbr.rel (%p399) target = $region32
        $region31: #{transformer_decoder_forward.7} parent=11 // pred_region
          %s403 = ssub.s32 256, 256
          %404 = vsyncadd [#allocation12], %s403
          %s405 = sshll.u32 [#allocation13], 4
          %s406 = int_to_ptr.vmem [resolvable:$true] %s405
          %411 = dma.hbm_to_vmem [thread:$0]  %s6, 256, %s406, [#allocation12], 64, 64, 4
        $region32: #{transformer_decoder_forward.7} parent=11 // pred_fallthru
          _
        // Predicated region
        $region33: #{transformer_decoder_forward.7} parent=11 // pred_check
          %p412 = pneg %p224
        $region34: #{transformer_decoder_forward.7} parent=11 // pred_check_branch
          %414 = sbr.rel (%p412) target = $region36
        $region35: #{transformer_decoder_forward.7} parent=11 // pred_region
          %s416 = ssub.s32 16, 16
          %417 = vsyncadd [#allocation15], %s416
          %s419 = sshll.u32 [#allocation14], 4
          %s420 = int_to_ptr.vmem [resolvable:$true] %s419
          %422 = dma.hbm_to_vmem [thread:$0]  %s7, 16, %s420, [#allocation15]
        $region36: #{transformer_decoder_forward.7} parent=11 // pred_fallthru
          _
        // Predicated region
        $region37: #{transformer_decoder_forward.7} parent=11 // pred_check
          %p423 = pneg %p245
        $region38: #{transformer_decoder_forward.7} parent=11 // pred_check_branch
          %425 = sbr.rel (%p423) target = $region40
        $region39: #{transformer_decoder_forward.7} parent=11 // pred_region
          %s427 = ssub.s32 256, 256
          %428 = vsyncadd [#allocation15], %s427
          %s429 = sshll.u32 [#allocation16], 4
          %s430 = int_to_ptr.vmem [resolvable:$true] %s429
          %435 = dma.hbm_to_vmem [thread:$0]  %s8, 256, %s430, [#allocation15], 64, 64, 4
        $region40: #{transformer_decoder_forward.7} parent=11 // pred_fallthru
          _
        // Predicated region
        $region41: #{transformer_decoder_forward.7} parent=11 // pred_check
          %p436 = pneg %p266
        $region42: #{transformer_decoder_forward.7} parent=11 // pred_check_branch
          %438 = sbr.rel (%p436) target = $region44
        $region43: #{transformer_decoder_forward.7} parent=11 // pred_region
          %s440 = ssub.s32 16, 16
          %441 = vsyncadd [#allocation18], %s440
          %s443 = sshll.u32 [#allocation17], 4
          %s444 = int_to_ptr.vmem [resolvable:$true] %s443
          %446 = dma.hbm_to_vmem [thread:$0]  %s9, 16, %s444, [#allocation18]
        $region44: #{transformer_decoder_forward.7} parent=11 // pred_fallthru
          _
        // Predicated region
        $region45: #{transformer_decoder_forward.7} parent=11 // pred_check
          %p447 = pneg %p287
        $region46: #{transformer_decoder_forward.7} parent=11 // pred_check_branch
          %449 = sbr.rel (%p447) target = $region48
        $region47: #{transformer_decoder_forward.7} parent=11 // pred_region
          %s451 = ssub.s32 16, 16
          %452 = vsyncadd [#allocation18], %s451
          %s454 = sshll.u32 [#allocation19], 4
          %s455 = int_to_ptr.vmem [resolvable:$true] %s454
          %457 = dma.hbm_to_vmem [thread:$0]  %s10, 16, %s455, [#allocation18]
        $region48: #{transformer_decoder_forward.7} parent=11 // pred_fallthru
          _
        // Predicated region
        $region49: #{transformer_decoder_forward.7} parent=11 // pred_check
          %p458 = pneg %p308
        $region50: #{transformer_decoder_forward.7} parent=11 // pred_check_branch
          %460 = sbr.rel (%p458) target = $region52
        $region51: #{transformer_decoder_forward.7} parent=11 // pred_region
          %s462 = ssub.s32 16, 16
          %463 = vsyncadd [#allocation21], %s462
          %s465 = sshll.u32 [#allocation20], 4
          %s466 = int_to_ptr.vmem [resolvable:$true] %s465
          %468 = dma.hbm_to_vmem [thread:$0]  %s11, 16, %s466, [#allocation21]
        $region52: #{transformer_decoder_forward.7} parent=11 // pred_fallthru
          _
      $region12: #{transformer_decoder_forward.7} parent=5 // pred_fallthru
        _
      %p469 = scmp.lt.s32.totalorder %s32, 2
      // Predicated region
      $region53: #{transformer_decoder_forward.7} parent=5 // pred_check
        %p470 = pneg %p469
      $region54: #{transformer_decoder_forward.7} parent=5 // pred_check_branch
        %472 = sbr.rel (%p470) target = $region56
      $region55: #{transformer_decoder_forward.7} parent=5 // pred_region
        // Predicated region
        $region57: #{transformer_decoder_forward.7} parent=55 // pred_check
          %p473 = pneg %p66
        $region58: #{transformer_decoder_forward.7} parent=55 // pred_check_branch
          %475 = sbr.rel (%p473) target = $region60
        $region59: #{transformer_decoder_forward.7} parent=55 // pred_region
          %s476 = sand.u32 %s56, 1
          %s477 = scalar_lea.sflag [#allocation3], %s476
          %s478 = sand.u32 %s56, 1
          %s479 = smul.addr %s478, 8
          %s480 = scalar_lea.vmem [#allocation2], %s479
          %s482 = ssub.s32 128, 128
          %483 = vsyncadd %s477, %s482
          %s484 = sadd.s32 %s40, %s39
          %s485 = smul.addr %s484, 128
          %s486 = scalar_lea.hbm %s0, %s485
          %s488 = sshll.u32 %s480, 4
          %s489 = int_to_ptr.vmem [resolvable:$true] %s488
          %491 = dma.hbm_to_vmem [thread:$0]  %s486, 128, %s489, %s477
        $region60: #{transformer_decoder_forward.7} parent=55 // pred_fallthru
          _
        // Predicated region
        $region61: #{transformer_decoder_forward.7} parent=55 // pred_check
          %p492 = pneg %p92
        $region62: #{transformer_decoder_forward.7} parent=55 // pred_check_branch
          %494 = sbr.rel (%p492) target = $region64
        $region63: #{transformer_decoder_forward.7} parent=55 // pred_region
          %s495 = sand.u32 %s32, 1
          %s496 = scalar_lea.sflag [#allocation6], %s495
          %s497 = sand.u32 %s82, 1
          %s498 = smul.addr %s497, 16
          %s499 = scalar_lea.vmem [#allocation5], %s498
          %s501 = ssub.s32 256, 256
          %502 = vsyncadd %s496, %s501
          %s503 = smul.addr %s39, 2
          %s504 = smul.addr %s503, 128
          %s505 = scalar_lea.hbm %s1, %s504
          %s506 = sshll.u32 %s499, 4
          %s507 = int_to_ptr.vmem [resolvable:$true] %s506
          %512 = dma.hbm_to_vmem [thread:$0]  %s505, 256, %s507, %s496, 128, 128, 8
        $region64: #{transformer_decoder_forward.7} parent=55 // pred_fallthru
          _
      $region56: #{transformer_decoder_forward.7} parent=5 // pred_fallthru
        _
      %p513 = scmp.le.s32.totalorder 1, %s32
      %p514 = scmp.lt.s32.totalorder %s32, 3
      %p515 = pnand %p513, %p514
      %p516 = pneg %p515
      // Predicated region
      $region65: #{transformer_decoder_forward.7} parent=5 // pred_check
        _
      $region66: #{transformer_decoder_forward.7} parent=5 // pred_check_branch
        %518 = sbr.rel (%p515) target = $region68
      $region67: #{transformer_decoder_forward.7} parent=5 // pred_region
        %s519 = ssub.s32 %s32, 1
        %s520 = sand.u32 %s59, 1
        %s521 = scalar_lea.sflag [#allocation3], %s520
        %s522 = sand.u32 %s59, 1
        %s523 = smul.addr %s522, 8
        %s524 = scalar_lea.vmem [#allocation2], %s523
        // Predicated region
        $region69: #{transformer_decoder_forward.7} parent=67 // pred_check
          %p525 = pneg %p72
        $region70: #{transformer_decoder_forward.7} parent=67 // pred_check_branch
          %527 = sbr.rel (%p525) target = $region72
        $region71: #{transformer_decoder_forward.7} parent=67 // pred_region
          %528 = dma.done %s521, 128
        $region72: #{transformer_decoder_forward.7} parent=67 // pred_fallthru
          _
        %s529 = sand.u32 %s37, 1
        %s530 = scalar_lea.sflag [#allocation6], %s529
        %s531 = sand.u32 %s85, 1
        %s532 = smul.addr %s531, 16
        %s533 = scalar_lea.vmem [#allocation5], %s532
        // Predicated region
        $region73: #{transformer_decoder_forward.7} parent=67 // pred_check
          %p534 = pneg %p98
        $region74: #{transformer_decoder_forward.7} parent=67 // pred_check_branch
          %536 = sbr.rel (%p534) target = $region76
        $region75: #{transformer_decoder_forward.7} parent=67 // pred_region
          %537 = dma.done %s530, 256
        $region76: #{transformer_decoder_forward.7} parent=67 // pred_fallthru
          _
        // Predicated region
        $region77: #{transformer_decoder_forward.7} parent=67 // pred_check
          %p538 = pneg %p119
        $region78: #{transformer_decoder_forward.7} parent=67 // pred_check_branch
          %540 = sbr.rel (%p538) target = $region80
        $region79: #{transformer_decoder_forward.7} parent=67 // pred_region
          %541 = dma.done [#allocation6], 256
        $region80: #{transformer_decoder_forward.7} parent=67 // pred_fallthru
          _
        // Predicated region
        $region81: #{transformer_decoder_forward.7} parent=67 // pred_check
          %p542 = pneg %p140
        $region82: #{transformer_decoder_forward.7} parent=67 // pred_check_branch
          %544 = sbr.rel (%p542) target = $region84
        $region83: #{transformer_decoder_forward.7} parent=67 // pred_region
          %545 = dma.done [#allocation9], 16
        $region84: #{transformer_decoder_forward.7} parent=67 // pred_fallthru
          _
        // Predicated region
        $region85: #{transformer_decoder_forward.7} parent=67 // pred_check
          %p546 = pneg %p161
        $region86: #{transformer_decoder_forward.7} parent=67 // pred_check_branch
          %548 = sbr.rel (%p546) target = $region88
        $region87: #{transformer_decoder_forward.7} parent=67 // pred_region
          %549 = dma.done [#allocation9], 256
        $region88: #{transformer_decoder_forward.7} parent=67 // pred_fallthru
          _
        // Predicated region
        $region89: #{transformer_decoder_forward.7} parent=67 // pred_check
          %p550 = pneg %p182
        $region90: #{transformer_decoder_forward.7} parent=67 // pred_check_branch
          %552 = sbr.rel (%p550) target = $region92
        $region91: #{transformer_decoder_forward.7} parent=67 // pred_region
          %553 = dma.done [#allocation12], 16
        $region92: #{transformer_decoder_forward.7} parent=67 // pred_fallthru
          _
        // Predicated region
        $region93: #{transformer_decoder_forward.7} parent=67 // pred_check
          %p554 = pneg %p203
        $region94: #{transformer_decoder_forward.7} parent=67 // pred_check_branch
          %556 = sbr.rel (%p554) target = $region96
        $region95: #{transformer_decoder_forward.7} parent=67 // pred_region
          %557 = dma.done [#allocation12], 256
        $region96: #{transformer_decoder_forward.7} parent=67 // pred_fallthru
          _
        // Predicated region
        $region97: #{transformer_decoder_forward.7} parent=67 // pred_check
          %p558 = pneg %p224
        $region98: #{transformer_decoder_forward.7} parent=67 // pred_check_branch
          %560 = sbr.rel (%p558) target = $region100
        $region99: #{transformer_decoder_forward.7} parent=67 // pred_region
          %561 = dma.done [#allocation15], 16
        $region100: #{transformer_decoder_forward.7} parent=67 // pred_fallthru
          _
        // Predicated region
        $region101: #{transformer_decoder_forward.7} parent=67 // pred_check
          %p562 = pneg %p245
        $region102: #{transformer_decoder_forward.7} parent=67 // pred_check_branch
          %564 = sbr.rel (%p562) target = $region104
        $region103: #{transformer_decoder_forward.7} parent=67 // pred_region
          %565 = dma.done [#allocation15], 256
        $region104: #{transformer_decoder_forward.7} parent=67 // pred_fallthru
          _
        // Predicated region
        $region105: #{transformer_decoder_forward.7} parent=67 // pred_check
          %p566 = pneg %p266
        $region106: #{transformer_decoder_forward.7} parent=67 // pred_check_branch
          %568 = sbr.rel (%p566) target = $region108
        $region107: #{transformer_decoder_forward.7} parent=67 // pred_region
          %569 = dma.done [#allocation18], 16
        $region108: #{transformer_decoder_forward.7} parent=67 // pred_fallthru
          _
        // Predicated region
        $region109: #{transformer_decoder_forward.7} parent=67 // pred_check
          %p570 = pneg %p287
        $region110: #{transformer_decoder_forward.7} parent=67 // pred_check_branch
          %572 = sbr.rel (%p570) target = $region112
        $region111: #{transformer_decoder_forward.7} parent=67 // pred_region
          %573 = dma.done [#allocation18], 16
        $region112: #{transformer_decoder_forward.7} parent=67 // pred_fallthru
          _
        // Predicated region
        $region113: #{transformer_decoder_forward.7} parent=67 // pred_check
          %p574 = pneg %p308
        $region114: #{transformer_decoder_forward.7} parent=67 // pred_check_branch
          %576 = sbr.rel (%p574) target = $region116
        $region115: #{transformer_decoder_forward.7} parent=67 // pred_region
          %577 = dma.done [#allocation21], 16
        $region116: #{transformer_decoder_forward.7} parent=67 // pred_fallthru
          _
        %s578 = sand.u32 %s59, 1
        %s579 = scalar_lea.sflag [#allocation3], %s578
        %s580 = sand.u32 %s59, 1
        %s581 = smul.addr %s580, 8
        %s582 = scalar_lea.vmem [#allocation2], %s581
        %p583 = pneg %p72
        %p584 = pneg %p69
        %s585 = sand.u32 %s37, 1
        %s586 = scalar_lea.sflag [#allocation6], %s585
        %s587 = sand.u32 %s85, 1
        %s588 = smul.addr %s587, 16
        %s589 = scalar_lea.vmem [#allocation5], %s588
        %p590 = pneg %p98
        %p591 = pneg %p95
        %p592 = pneg %p119
        %p593 = pneg %p116
        %p594 = pneg %p140
        %p595 = pneg %p137
        %p596 = pneg %p161
        %p597 = pneg %p158
        %p598 = pneg %p182
        %p599 = pneg %p179
        %p600 = pneg %p203
        %p601 = pneg %p200
        %p602 = pneg %p224
        %p603 = pneg %p221
        %p604 = pneg %p245
        %p605 = pneg %p242
        %p606 = pneg %p266
        %p607 = pneg %p263
        %p608 = pneg %p287
        %p609 = pneg %p284
        %p610 = pneg %p308
        %p611 = pneg %p305
        %p612 = pneg %p336
        %p613 = pneg %p333
        %s614 = sand.u32 %s323, 1
        %s615 = scalar_lea.sflag [#allocation4], %s614
        %s616 = sand.u32 %s323, 1
        %s617 = smul.addr %s616, 8
        %s618 = scalar_lea.vmem [#allocation22], %s617
        %v620 = vld [vmem:[%s524] sm:$0xff]
        %v621 = vld [vmem:[%s533] sm:$0xff]
        %v622 = vld [vmem:[%s533 + $0x8] sm:$0xff]
        %v623 = vpack.c.bf16 %v620, %v620
        %v624 = vpack.c.bf16 %v622, %v621
        %v625 = vld [vmem:[#allocation7] sm:$0xf]
        %v626 = vld [vmem:[#allocation7 + $0x4] sm:$0xf]
        %v627 = vld [vmem:[#allocation7 + $0x8] sm:$0xf]
        %v628 = vld [vmem:[#allocation7 + $0xc] sm:$0xf]
        %v629 = vld [vmem:[#allocation8] sm:$0x1]
        %v631 = vlaneseq
        %v632 = vshrl.u32 %v631, 7
        %v633 = vsub.s32 0, %v632
        %v634 = vrot.slane %v629, %v633
        %v640 = vunpack.c.l.b16 %v625
        %v641 = vunpack.c.l.b16 %v626
        %v642 = vunpack.c.l.b16 %v627
        %v643 = vunpack.c.l.b16 %v628
        %v644 = vpack.c.b16 %v641, %v640
        %v645 = vpack.c.b16 %v643, %v642
        %vm648 = vcmask 261120
        %v650 = vsel %vm648, %v623, 0
        %652 = vmatprep.subr.bf16.mxu0 0
        %653 = vmatpush1.bf16.msra.mxu0 %v644
        %654 = vmatprep.subr.bf16.mxu0 0
        %655 = vmatpush1.bf16.msra.mxu0 %v645
        %656 = vmatprep.subr.bf16.mxu0 0
        %657 = vmatpush1.bf16.msra.mxu0 0
        %658 = vmatprep.subr.bf16.mxu0 0
        %659 = vmatpush1.bf16.msra.mxu0 0
        %660 = vmatprep.subr.bf16.mxu0 0
        %661 = vmatpush1.bf16.msra.mxu0 0
        %662 = vmatprep.subr.bf16.mxu0 0
        %663 = vmatpush1.bf16.msra.mxu0 0
        %664 = vmatprep.subr.bf16.mxu0 0
        %665 = vmatpush1.bf16.msra.mxu0 0
        %666 = vmatprep.subr.bf16.mxu0 0
        %667 = vmatpush1.bf16.msra.mxu0 0
        %668 = vmatprep.subr.bf16.mxu0 0
        %669 = vmatpush1.bf16.msra.mxu0 0
        %670 = vmatprep.subr.bf16.mxu0 0
        %671 = vmatpush1.bf16.msra.mxu0 0
        %672 = vmatprep.subr.bf16.mxu0 0
        %673 = vmatpush1.bf16.msra.mxu0 0
        %674 = vmatprep.subr.bf16.mxu0 0
        %675 = vmatpush1.bf16.msra.mxu0 0
        %676 = vmatprep.subr.bf16.mxu0 0
        %677 = vmatpush1.bf16.msra.mxu0 0
        %678 = vmatprep.subr.bf16.mxu0 0
        %679 = vmatpush1.bf16.msra.mxu0 0
        %680 = vmatprep.subr.bf16.mxu0 0
        %681 = vmatpush1.bf16.msra.mxu0 0
        %682 = vmatprep.subr.bf16.mxu0 0
        %683 = vmatpush1.bf16.msra.mxu0 0
        %684 = vmatprep.mubr.bf16.mxu0 0
        %685 = vmatmul.mubr.bf16.gmra.mrb[0].mxu0 %v650
        %v686 = vpop.f32.mrb[0].mxu0
        %v687 = vadd.f32 %v634, %v686
        %v688 = vpop.f32.mrb[0].mxu0
        %v689 = vpop.f32.mrb[0].mxu0
        %v690 = vpop.f32.mrb[0].mxu0
        %691 = vdwg.mxu0
        %v692 = vld [vmem:[#allocation10] sm:$0xf]
        %v693 = vld [vmem:[#allocation10 + $0x4] sm:$0xf]
        %v694 = vld [vmem:[#allocation10 + $0x8] sm:$0xf]
        %v695 = vld [vmem:[#allocation10 + $0xc] sm:$0xf]
        %v696 = vld [vmem:[#allocation11] sm:$0x1]
        %v698 = vlaneseq
        %v699 = vshrl.u32 %v698, 7
        %v700 = vsub.s32 0, %v699
        %v701 = vrot.slane %v696, %v700
        %v707 = vunpack.c.l.b16 %v692
        %v708 = vunpack.c.l.b16 %v693
        %v709 = vunpack.c.l.b16 %v694
        %v710 = vunpack.c.l.b16 %v695
        %v711 = vpack.c.b16 %v708, %v707
        %v712 = vpack.c.b16 %v710, %v709
        %v716 = vsel %vm648, %v624, 0
        %718 = vmatprep.subr.bf16.mxu0 0
        %719 = vmatpush1.bf16.msra.mxu0 %v711
        %720 = vmatprep.subr.bf16.mxu0 0
        %721 = vmatpush1.bf16.msra.mxu0 %v712
        %722 = vmatprep.subr.bf16.mxu0 0
        %723 = vmatpush1.bf16.msra.mxu0 0
        %724 = vmatprep.subr.bf16.mxu0 0
        %725 = vmatpush1.bf16.msra.mxu0 0
        %726 = vmatprep.subr.bf16.mxu0 0
        %727 = vmatpush1.bf16.msra.mxu0 0
        %728 = vmatprep.subr.bf16.mxu0 0
        %729 = vmatpush1.bf16.msra.mxu0 0
        %730 = vmatprep.subr.bf16.mxu0 0
        %731 = vmatpush1.bf16.msra.mxu0 0
        %732 = vmatprep.subr.bf16.mxu0 0
        %733 = vmatpush1.bf16.msra.mxu0 0
        %734 = vmatprep.subr.bf16.mxu0 0
        %735 = vmatpush1.bf16.msra.mxu0 0
        %736 = vmatprep.subr.bf16.mxu0 0
        %737 = vmatpush1.bf16.msra.mxu0 0
        %738 = vmatprep.subr.bf16.mxu0 0
        %739 = vmatpush1.bf16.msra.mxu0 0
        %740 = vmatprep.subr.bf16.mxu0 0
        %741 = vmatpush1.bf16.msra.mxu0 0
        %742 = vmatprep.subr.bf16.mxu0 0
        %743 = vmatpush1.bf16.msra.mxu0 0
        %744 = vmatprep.subr.bf16.mxu0 0
        %745 = vmatpush1.bf16.msra.mxu0 0
        %746 = vmatprep.subr.bf16.mxu0 0
        %747 = vmatpush1.bf16.msra.mxu0 0
        %748 = vmatprep.subr.bf16.mxu0 0
        %749 = vmatpush1.bf16.msra.mxu0 0
        %750 = vmatprep.mubr.bf16.mxu0 0
        %751 = vmatmul.mubr.bf16.gmra.mrb[0].mxu0 %v716
        %v752 = vpop.f32.mrb[0].mxu0
        %v753 = vadd.f32 %v701, %v752
        %v754 = vpop.f32.mrb[0].mxu0
        %v755 = vpop.f32.mrb[0].mxu0
        %v756 = vadd.f32 %v701, %v755
        %v757 = vpop.f32.mrb[0].mxu0
        %758 = vdwg.mxu0
        %v759 = vld [vmem:[#allocation13] sm:$0xf]
        %v760 = vld [vmem:[#allocation13 + $0x4] sm:$0xf]
        %v761 = vld [vmem:[#allocation13 + $0x8] sm:$0xf]
        %v762 = vld [vmem:[#allocation13 + $0xc] sm:$0xf]
        %v763 = vld [vmem:[#allocation14] sm:$0x1]
        %v765 = vlaneseq
        %v766 = vshrl.u32 %v765, 7
        %v767 = vsub.s32 0, %v766
        %v768 = vrot.slane %v763, %v767
        %v774 = vunpack.c.l.b16 %v759
        %v775 = vunpack.c.l.b16 %v760
        %v776 = vunpack.c.l.b16 %v761
        %v777 = vunpack.c.l.b16 %v762
        %v778 = vpack.c.b16 %v775, %v774
        %v779 = vpack.c.b16 %v777, %v776
        %782 = vmatprep.subr.bf16.mxu0 0
        %783 = vmatpush1.bf16.msra.mxu0 %v778
        %784 = vmatprep.subr.bf16.mxu0 0
        %785 = vmatpush1.bf16.msra.mxu0 %v779
        %786 = vmatprep.subr.bf16.mxu0 0
        %787 = vmatpush1.bf16.msra.mxu0 0
        %788 = vmatprep.subr.bf16.mxu0 0
        %789 = vmatpush1.bf16.msra.mxu0 0
        %790 = vmatprep.subr.bf16.mxu0 0
        %791 = vmatpush1.bf16.msra.mxu0 0
        %792 = vmatprep.subr.bf16.mxu0 0
        %793 = vmatpush1.bf16.msra.mxu0 0
        %794 = vmatprep.subr.bf16.mxu0 0
        %795 = vmatpush1.bf16.msra.mxu0 0
        %796 = vmatprep.subr.bf16.mxu0 0
        %797 = vmatpush1.bf16.msra.mxu0 0
        %798 = vmatprep.subr.bf16.mxu0 0
        %799 = vmatpush1.bf16.msra.mxu0 0
        %800 = vmatprep.subr.bf16.mxu0 0
        %801 = vmatpush1.bf16.msra.mxu0 0
        %802 = vmatprep.subr.bf16.mxu0 0
        %803 = vmatpush1.bf16.msra.mxu0 0
        %804 = vmatprep.subr.bf16.mxu0 0
        %805 = vmatpush1.bf16.msra.mxu0 0
        %806 = vmatprep.subr.bf16.mxu0 0
        %807 = vmatpush1.bf16.msra.mxu0 0
        %808 = vmatprep.subr.bf16.mxu0 0
        %809 = vmatpush1.bf16.msra.mxu0 0
        %810 = vmatprep.subr.bf16.mxu0 0
        %811 = vmatpush1.bf16.msra.mxu0 0
        %812 = vmatprep.subr.bf16.mxu0 0
        %813 = vmatpush1.bf16.msra.mxu0 0
        %814 = vmatprep.mubr.bf16.mxu0 0
        %815 = vmatmul.mubr.bf16.gmra.mrb[0].mxu0 %v716
        %v816 = vpop.f32.mrb[0].mxu0
        %v817 = vadd.f32 %v768, %v816
        %v818 = vpop.f32.mrb[0].mxu0
        %v819 = vpop.f32.mrb[0].mxu0
        %v820 = vadd.f32 %v768, %v819
        %v821 = vpop.f32.mrb[0].mxu0
        %822 = vdwg.mxu0
        %v823 = vmul.f32 %v687, 0.35355338
        %v824 = vpack.c.bf16 %v823, %v823
        %v825 = vpack.c.bf16 %v756, %v753
        %v826 = vpack.c.bf16 %v820, %v817
        %v827 = vld [vmem:[#allocation16] sm:$0xf]
        %v828 = vld [vmem:[#allocation16 + $0x4] sm:$0xf]
        %v829 = vld [vmem:[#allocation16 + $0x8] sm:$0xf]
        %v830 = vld [vmem:[#allocation16 + $0xc] sm:$0xf]
        %vm831 = vcmask 64512
        %v833 = vsel %vm831, %v824, 0
        %v836 = vsel %vm831, %v825, 0
        %838 = vmatprep.subr.bf16.mxu0 0
        %839 = vmatpush1.bf16.xpose.msra.mxu0 %v836
        %840 = vmatprep.subr.bf16.mxu0 0
        %841 = vmatpush1.bf16.xpose.msra.mxu0 0
        %842 = vmatprep.subr.bf16.mxu0 0
        %843 = vmatpush1.bf16.xpose.msra.mxu0 0
        %844 = vmatprep.subr.bf16.mxu0 0
        %845 = vmatpush1.bf16.xpose.msra.mxu0 0
        %846 = vmatprep.subr.bf16.mxu0 0
        %847 = vmatpush1.bf16.xpose.msra.mxu0 0
        %848 = vmatprep.subr.bf16.mxu0 0
        %849 = vmatpush1.bf16.xpose.msra.mxu0 0
        %850 = vmatprep.subr.bf16.mxu0 0
        %851 = vmatpush1.bf16.xpose.msra.mxu0 0
        %852 = vmatprep.subr.bf16.mxu0 0
        %853 = vmatpush1.bf16.xpose.msra.mxu0 0
        %854 = vmatprep.subr.bf16.mxu0 0
        %855 = vmatpush1.bf16.xpose.msra.mxu0 0
        %856 = vmatprep.subr.bf16.mxu0 0
        %857 = vmatpush1.bf16.xpose.msra.mxu0 0
        %858 = vmatprep.subr.bf16.mxu0 0
        %859 = vmatpush1.bf16.xpose.msra.mxu0 0
        %860 = vmatprep.subr.bf16.mxu0 0
        %861 = vmatpush1.bf16.xpose.msra.mxu0 0
        %862 = vmatprep.subr.bf16.mxu0 0
        %863 = vmatpush1.bf16.xpose.msra.mxu0 0
        %864 = vmatprep.subr.bf16.mxu0 0
        %865 = vmatpush1.bf16.xpose.msra.mxu0 0
        %866 = vmatprep.subr.bf16.mxu0 0
        %867 = vmatpush1.bf16.xpose.msra.mxu0 0
        %868 = vmatprep.subr.bf16.mxu0 0
        %869 = vmatpush1.bf16.xpose.msra.mxu0 0
        %870 = vmatprep.mubr.bf16.mxu0 0
        %871 = vmatmul.mubr.bf16.gmra.mrb[0].mxu0 %v833
        %v872 = vpop.f32.mrb[0].mxu0
        %v873 = vadd.f32 0.0, %v872
        %v874 = vpop.f32.mrb[0].mxu0
        %v875 = vpop.f32.mrb[0].mxu0
        %v876 = vpop.f32.mrb[0].mxu0
        %877 = vdwg.mxu0
        %vm878 = vcmask 130048
        %v879 = vsel %vm878, %v873, -inf
        %880 = vmax.xlane.f32.xlu0 %v879
        %v881 = vpop.xlane.xlu0 %880
        %v882 = vsub.f32 %v873, %v881
        %v883 = vmul.f32 %v882, 1.442695
        %v884 = vpow.pop %v883
        %v885 = vsel %vm878, %v884, 0.0
        %886 = vadd.xlane.f32.xlu0 %v885
        %v887 = vpop.xlane.xlu0 %886
        %v888 = vrcp.pop %v887
        %v889 = vpack.c.bf16 %v884, %v884
        %v891 = vsel %vm878, %v889, 0
        %893 = vmatprep.subr.bf16.mxu0 0
        %894 = vmatpush1.bf16.msra.mxu0 %v826
        %895 = vmatprep.subr.bf16.mxu0 0
        %896 = vmatpush1.bf16.msra.mxu0 0
        %897 = vmatprep.subr.bf16.mxu0 0
        %898 = vmatpush1.bf16.msra.mxu0 0
        %899 = vmatprep.subr.bf16.mxu0 0
        %900 = vmatpush1.bf16.msra.mxu0 0
        %901 = vmatprep.subr.bf16.mxu0 0
        %902 = vmatpush1.bf16.msra.mxu0 0
        %903 = vmatprep.subr.bf16.mxu0 0
        %904 = vmatpush1.bf16.msra.mxu0 0
        %905 = vmatprep.subr.bf16.mxu0 0
        %906 = vmatpush1.bf16.msra.mxu0 0
        %907 = vmatprep.subr.bf16.mxu0 0
        %908 = vmatpush1.bf16.msra.mxu0 0
        %909 = vmatprep.subr.bf16.mxu0 0
        %910 = vmatpush1.bf16.msra.mxu0 0
        %911 = vmatprep.subr.bf16.mxu0 0
        %912 = vmatpush1.bf16.msra.mxu0 0
        %913 = vmatprep.subr.bf16.mxu0 0
        %914 = vmatpush1.bf16.msra.mxu0 0
        %915 = vmatprep.subr.bf16.mxu0 0
        %916 = vmatpush1.bf16.msra.mxu0 0
        %917 = vmatprep.subr.bf16.mxu0 0
        %918 = vmatpush1.bf16.msra.mxu0 0
        %919 = vmatprep.subr.bf16.mxu0 0
        %920 = vmatpush1.bf16.msra.mxu0 0
        %921 = vmatprep.subr.bf16.mxu0 0
        %922 = vmatpush1.bf16.msra.mxu0 0
        %923 = vmatprep.subr.bf16.mxu0 0
        %924 = vmatpush1.bf16.msra.mxu0 0
        %925 = vmatprep.mubr.bf16.mxu0 0
        %926 = vmatmul.mubr.bf16.gmra.mrb[0].mxu0 %v891
        %v927 = vpop.f32.mrb[0].mxu0
        %v928 = vadd.f32 0.0, %v927
        %v929 = vpop.f32.mrb[0].mxu0
        %v930 = vpop.f32.mrb[0].mxu0
        %v931 = vpop.f32.mrb[0].mxu0
        %932 = vdwg.mxu0
        %v933 = vmul.f32 %v928, %v888
        %v934 = vpack.c.bf16 %v933, %v933
        %936 = vrot.lane.b32.xlu0 %v824, 120
        %v937 = vpop.permute.xlu0 %936
        %939 = vrot.lane.b32.xlu0 %v825, 120
        %v940 = vpop.permute.xlu0 %939
        %v942 = vsel %vm831, %v937, 0
        %v945 = vsel %vm831, %v940, 0
        %947 = vmatprep.subr.bf16.mxu0 0
        %948 = vmatpush1.bf16.xpose.msra.mxu0 %v945
        %949 = vmatprep.subr.bf16.mxu0 0
        %950 = vmatpush1.bf16.xpose.msra.mxu0 0
        %951 = vmatprep.subr.bf16.mxu0 0
        %952 = vmatpush1.bf16.xpose.msra.mxu0 0
        %953 = vmatprep.subr.bf16.mxu0 0
        %954 = vmatpush1.bf16.xpose.msra.mxu0 0
        %955 = vmatprep.subr.bf16.mxu0 0
        %956 = vmatpush1.bf16.xpose.msra.mxu0 0
        %957 = vmatprep.subr.bf16.mxu0 0
        %958 = vmatpush1.bf16.xpose.msra.mxu0 0
        %959 = vmatprep.subr.bf16.mxu0 0
        %960 = vmatpush1.bf16.xpose.msra.mxu0 0
        %961 = vmatprep.subr.bf16.mxu0 0
        %962 = vmatpush1.bf16.xpose.msra.mxu0 0
        %963 = vmatprep.subr.bf16.mxu0 0
        %964 = vmatpush1.bf16.xpose.msra.mxu0 0
        %965 = vmatprep.subr.bf16.mxu0 0
        %966 = vmatpush1.bf16.xpose.msra.mxu0 0
        %967 = vmatprep.subr.bf16.mxu0 0
        %968 = vmatpush1.bf16.xpose.msra.mxu0 0
        %969 = vmatprep.subr.bf16.mxu0 0
        %970 = vmatpush1.bf16.xpose.msra.mxu0 0
        %971 = vmatprep.subr.bf16.mxu0 0
        %972 = vmatpush1.bf16.xpose.msra.mxu0 0
        %973 = vmatprep.subr.bf16.mxu0 0
        %974 = vmatpush1.bf16.xpose.msra.mxu0 0
        %975 = vmatprep.subr.bf16.mxu0 0
        %976 = vmatpush1.bf16.xpose.msra.mxu0 0
        %977 = vmatprep.subr.bf16.mxu0 0
        %978 = vmatpush1.bf16.xpose.msra.mxu0 0
        %979 = vmatprep.mubr.bf16.mxu0 0
        %980 = vmatmul.mubr.bf16.gmra.mrb[0].mxu0 %v942
        %v981 = vpop.f32.mrb[0].mxu0
        %v982 = vadd.f32 0.0, %v981
        %v983 = vpop.f32.mrb[0].mxu0
        %v984 = vpop.f32.mrb[0].mxu0
        %v985 = vpop.f32.mrb[0].mxu0
        %986 = vdwg.mxu0
        %v987 = vsel %vm878, %v982, -inf
        %988 = vmax.xlane.f32.xlu0 %v987
        %v989 = vpop.xlane.xlu0 %988
        %v990 = vsub.f32 %v982, %v989
        %v991 = vmul.f32 %v990, 1.442695
        %v992 = vpow.pop %v991
        %v993 = vsel %vm878, %v992, 0.0
        %994 = vadd.xlane.f32.xlu0 %v993
        %v995 = vpop.xlane.xlu0 %994
        %v996 = vrcp.pop %v995
        %v997 = vpack.c.bf16 %v992, %v992
        %999 = vrot.lane.b32.xlu0 %v826, 120
        %v1000 = vpop.permute.xlu0 %999
        %v1003 = vsel %vm878, %v997, 0
        %1005 = vmatprep.subr.bf16.mxu0 0
        %1006 = vmatpush1.bf16.msra.mxu0 %v1000
        %1007 = vmatprep.subr.bf16.mxu0 0
        %1008 = vmatpush1.bf16.msra.mxu0 0
        %1009 = vmatprep.subr.bf16.mxu0 0
        %1010 = vmatpush1.bf16.msra.mxu0 0
        %1011 = vmatprep.subr.bf16.mxu0 0
        %1012 = vmatpush1.bf16.msra.mxu0 0
        %1013 = vmatprep.subr.bf16.mxu0 0
        %1014 = vmatpush1.bf16.msra.mxu0 0
        %1015 = vmatprep.subr.bf16.mxu0 0
        %1016 = vmatpush1.bf16.msra.mxu0 0
        %1017 = vmatprep.subr.bf16.mxu0 0
        %1018 = vmatpush1.bf16.msra.mxu0 0
        %1019 = vmatprep.subr.bf16.mxu0 0
        %1020 = vmatpush1.bf16.msra.mxu0 0
        %1021 = vmatprep.subr.bf16.mxu0 0
        %1022 = vmatpush1.bf16.msra.mxu0 0
        %1023 = vmatprep.subr.bf16.mxu0 0
        %1024 = vmatpush1.bf16.msra.mxu0 0
        %1025 = vmatprep.subr.bf16.mxu0 0
        %1026 = vmatpush1.bf16.msra.mxu0 0
        %1027 = vmatprep.subr.bf16.mxu0 0
        %1028 = vmatpush1.bf16.msra.mxu0 0
        %1029 = vmatprep.subr.bf16.mxu0 0
        %1030 = vmatpush1.bf16.msra.mxu0 0
        %1031 = vmatprep.subr.bf16.mxu0 0
        %1032 = vmatpush1.bf16.msra.mxu0 0
        %1033 = vmatprep.subr.bf16.mxu0 0
        %1034 = vmatpush1.bf16.msra.mxu0 0
        %1035 = vmatprep.subr.bf16.mxu0 0
        %1036 = vmatpush1.bf16.msra.mxu0 0
        %1037 = vmatprep.mubr.bf16.mxu0 0
        %1038 = vmatmul.mubr.bf16.gmra.mrb[0].mxu0 %v1003
        %v1039 = vpop.f32.mrb[0].mxu0
        %v1040 = vadd.f32 0.0, %v1039
        %v1041 = vpop.f32.mrb[0].mxu0
        %v1042 = vpop.f32.mrb[0].mxu0
        %v1043 = vpop.f32.mrb[0].mxu0
        %1044 = vdwg.mxu0
        %v1045 = vmul.f32 %v1040, %v996
        %v1046 = vpack.c.bf16 %v1045, %v1045
        %v1048 = vsel %vm831, %v1046, 0
        %vm1050 = vcmask 1043456
        %v1052 = vsel %vm1050, %v828, 0
        %1054 = vmatprep.subr.bf16.mxu0 0
        %1055 = vmatpush1.bf16.msra.mxu0 %v1052
        %1056 = vmatprep.subr.bf16.mxu0 0
        %1057 = vmatpush1.bf16.msra.mxu0 0
        %1058 = vmatprep.subr.bf16.mxu0 0
        %1059 = vmatpush1.bf16.msra.mxu0 0
        %1060 = vmatprep.subr.bf16.mxu0 0
        %1061 = vmatpush1.bf16.msra.mxu0 0
        %1062 = vmatprep.subr.bf16.mxu0 0
        %1063 = vmatpush1.bf16.msra.mxu0 0
        %1064 = vmatprep.subr.bf16.mxu0 0
        %1065 = vmatpush1.bf16.msra.mxu0 0
        %1066 = vmatprep.subr.bf16.mxu0 0
        %1067 = vmatpush1.bf16.msra.mxu0 0
        %1068 = vmatprep.subr.bf16.mxu0 0
        %1069 = vmatpush1.bf16.msra.mxu0 0
        %1070 = vmatprep.subr.bf16.mxu0 0
        %1071 = vmatpush1.bf16.msra.mxu0 0
        %1072 = vmatprep.subr.bf16.mxu0 0
        %1073 = vmatpush1.bf16.msra.mxu0 0
        %1074 = vmatprep.subr.bf16.mxu0 0
        %1075 = vmatpush1.bf16.msra.mxu0 0
        %1076 = vmatprep.subr.bf16.mxu0 0
        %1077 = vmatpush1.bf16.msra.mxu0 0
        %1078 = vmatprep.subr.bf16.mxu0 0
        %1079 = vmatpush1.bf16.msra.mxu0 0
        %1080 = vmatprep.subr.bf16.mxu0 0
        %1081 = vmatpush1.bf16.msra.mxu0 0
        %1082 = vmatprep.subr.bf16.mxu0 0
        %1083 = vmatpush1.bf16.msra.mxu0 0
        %1084 = vmatprep.subr.bf16.mxu0 0
        %1085 = vmatpush1.bf16.msra.mxu0 0
        %1086 = vmatprep.mubr.bf16.mxu0 0
        %1087 = vmatmul.mubr.bf16.gmra.mrb[0].mxu0 %v1048
        %v1088 = vpop.f32.mrb[0].mxu0
        %v1089 = vadd.f32 0.0, %v1088
        %v1090 = vpop.f32.mrb[0].mxu0
        %v1091 = vpop.f32.mrb[0].mxu0
        %v1092 = vpop.f32.mrb[0].mxu0
        %1093 = vdwg.mxu0
        %v1095 = vsel %vm831, %v934, 0
        %v1098 = vsel %vm1050, %v827, 0
        %1100 = vmatprep.subr.bf16.mxu0 0
        %1101 = vmatpush1.bf16.msra.mxu0 %v1098
        %1102 = vmatprep.subr.bf16.mxu0 0
        %1103 = vmatpush1.bf16.msra.mxu0 0
        %1104 = vmatprep.subr.bf16.mxu0 0
        %1105 = vmatpush1.bf16.msra.mxu0 0
        %1106 = vmatprep.subr.bf16.mxu0 0
        %1107 = vmatpush1.bf16.msra.mxu0 0
        %1108 = vmatprep.subr.bf16.mxu0 0
        %1109 = vmatpush1.bf16.msra.mxu0 0
        %1110 = vmatprep.subr.bf16.mxu0 0
        %1111 = vmatpush1.bf16.msra.mxu0 0
        %1112 = vmatprep.subr.bf16.mxu0 0
        %1113 = vmatpush1.bf16.msra.mxu0 0
        %1114 = vmatprep.subr.bf16.mxu0 0
        %1115 = vmatpush1.bf16.msra.mxu0 0
        %1116 = vmatprep.subr.bf16.mxu0 0
        %1117 = vmatpush1.bf16.msra.mxu0 0
        %1118 = vmatprep.subr.bf16.mxu0 0
        %1119 = vmatpush1.bf16.msra.mxu0 0
        %1120 = vmatprep.subr.bf16.mxu0 0
        %1121 = vmatpush1.bf16.msra.mxu0 0
        %1122 = vmatprep.subr.bf16.mxu0 0
        %1123 = vmatpush1.bf16.msra.mxu0 0
        %1124 = vmatprep.subr.bf16.mxu0 0
        %1125 = vmatpush1.bf16.msra.mxu0 0
        %1126 = vmatprep.subr.bf16.mxu0 0
        %1127 = vmatpush1.bf16.msra.mxu0 0
        %1128 = vmatprep.subr.bf16.mxu0 0
        %1129 = vmatpush1.bf16.msra.mxu0 0
        %1130 = vmatprep.subr.bf16.mxu0 0
        %1131 = vmatpush1.bf16.msra.mxu0 0
        %1132 = vmatprep.mubr.bf16.mxu0 0
        %1133 = vmatmul.mubr.bf16.gmra.mrb[0].mxu0 %v1095
        %v1134 = vpop.f32.mrb[0].mxu0
        %v1135 = vadd.f32 %v1089, %v1134
        %v1136 = vpop.f32.mrb[0].mxu0
        %v1137 = vpop.f32.mrb[0].mxu0
        %v1138 = vpop.f32.mrb[0].mxu0
        %1139 = vdwg.mxu0
        %1140 = vrot.lane.b32.xlu0 %v824, 112
        %v1141 = vpop.permute.xlu0 %1140
        %1142 = vrot.lane.b32.xlu0 %v825, 112
        %v1143 = vpop.permute.xlu0 %1142
        %v1145 = vsel %vm831, %v1141, 0
        %v1148 = vsel %vm831, %v1143, 0
        %1150 = vmatprep.subr.bf16.mxu0 0
        %1151 = vmatpush1.bf16.xpose.msra.mxu0 %v1148
        %1152 = vmatprep.subr.bf16.mxu0 0
        %1153 = vmatpush1.bf16.xpose.msra.mxu0 0
        %1154 = vmatprep.subr.bf16.mxu0 0
        %1155 = vmatpush1.bf16.xpose.msra.mxu0 0
        %1156 = vmatprep.subr.bf16.mxu0 0
        %1157 = vmatpush1.bf16.xpose.msra.mxu0 0
        %1158 = vmatprep.subr.bf16.mxu0 0
        %1159 = vmatpush1.bf16.xpose.msra.mxu0 0
        %1160 = vmatprep.subr.bf16.mxu0 0
        %1161 = vmatpush1.bf16.xpose.msra.mxu0 0
        %1162 = vmatprep.subr.bf16.mxu0 0
        %1163 = vmatpush1.bf16.xpose.msra.mxu0 0
        %1164 = vmatprep.subr.bf16.mxu0 0
        %1165 = vmatpush1.bf16.xpose.msra.mxu0 0
        %1166 = vmatprep.subr.bf16.mxu0 0
        %1167 = vmatpush1.bf16.xpose.msra.mxu0 0
        %1168 = vmatprep.subr.bf16.mxu0 0
        %1169 = vmatpush1.bf16.xpose.msra.mxu0 0
        %1170 = vmatprep.subr.bf16.mxu0 0
        %1171 = vmatpush1.bf16.xpose.msra.mxu0 0
        %1172 = vmatprep.subr.bf16.mxu0 0
        %1173 = vmatpush1.bf16.xpose.msra.mxu0 0
        %1174 = vmatprep.subr.bf16.mxu0 0
        %1175 = vmatpush1.bf16.xpose.msra.mxu0 0
        %1176 = vmatprep.subr.bf16.mxu0 0
        %1177 = vmatpush1.bf16.xpose.msra.mxu0 0
        %1178 = vmatprep.subr.bf16.mxu0 0
        %1179 = vmatpush1.bf16.xpose.msra.mxu0 0
        %1180 = vmatprep.subr.bf16.mxu0 0
        %1181 = vmatpush1.bf16.xpose.msra.mxu0 0
        %1182 = vmatprep.mubr.bf16.mxu0 0
        %1183 = vmatmul.mubr.bf16.gmra.mrb[0].mxu0 %v1145
        %v1184 = vpop.f32.mrb[0].mxu0
        %v1185 = vadd.f32 0.0, %v1184
        %v1186 = vpop.f32.mrb[0].mxu0
        %v1187 = vpop.f32.mrb[0].mxu0
        %v1188 = vpop.f32.mrb[0].mxu0
        %1189 = vdwg.mxu0
        %v1190 = vsel %vm878, %v1185, -inf
        %1191 = vmax.xlane.f32.xlu0 %v1190
        %v1192 = vpop.xlane.xlu0 %1191
        %v1193 = vsub.f32 %v1185, %v1192
        %v1194 = vmul.f32 %v1193, 1.442695
        %v1195 = vpow.pop %v1194
        %v1196 = vsel %vm878, %v1195, 0.0
        %1197 = vadd.xlane.f32.xlu0 %v1196
        %v1198 = vpop.xlane.xlu0 %1197
        %v1199 = vrcp.pop %v1198
        %v1200 = vpack.c.bf16 %v1195, %v1195
        %1201 = vrot.lane.b32.xlu0 %v826, 112
        %v1202 = vpop.permute.xlu0 %1201
        %v1205 = vsel %vm878, %v1200, 0
        %1207 = vmatprep.subr.bf16.mxu0 0
        %1208 = vmatpush1.bf16.msra.mxu0 %v1202
        %1209 = vmatprep.subr.bf16.mxu0 0
        %1210 = vmatpush1.bf16.msra.mxu0 0
        %1211 = vmatprep.subr.bf16.mxu0 0
        %1212 = vmatpush1.bf16.msra.mxu0 0
        %1213 = vmatprep.subr.bf16.mxu0 0
        %1214 = vmatpush1.bf16.msra.mxu0 0
        %1215 = vmatprep.subr.bf16.mxu0 0
        %1216 = vmatpush1.bf16.msra.mxu0 0
        %1217 = vmatprep.subr.bf16.mxu0 0
        %1218 = vmatpush1.bf16.msra.mxu0 0
        %1219 = vmatprep.subr.bf16.mxu0 0
        %1220 = vmatpush1.bf16.msra.mxu0 0
        %1221 = vmatprep.subr.bf16.mxu0 0
        %1222 = vmatpush1.bf16.msra.mxu0 0
        %1223 = vmatprep.subr.bf16.mxu0 0
        %1224 = vmatpush1.bf16.msra.mxu0 0
        %1225 = vmatprep.subr.bf16.mxu0 0
        %1226 = vmatpush1.bf16.msra.mxu0 0
        %1227 = vmatprep.subr.bf16.mxu0 0
        %1228 = vmatpush1.bf16.msra.mxu0 0
        %1229 = vmatprep.subr.bf16.mxu0 0
        %1230 = vmatpush1.bf16.msra.mxu0 0
        %1231 = vmatprep.subr.bf16.mxu0 0
        %1232 = vmatpush1.bf16.msra.mxu0 0
        %1233 = vmatprep.subr.bf16.mxu0 0
        %1234 = vmatpush1.bf16.msra.mxu0 0
        %1235 = vmatprep.subr.bf16.mxu0 0
        %1236 = vmatpush1.bf16.msra.mxu0 0
        %1237 = vmatprep.subr.bf16.mxu0 0
        %1238 = vmatpush1.bf16.msra.mxu0 0
        %1239 = vmatprep.mubr.bf16.mxu0 0
        %1240 = vmatmul.mubr.bf16.gmra.mrb[0].mxu0 %v1205
        %v1241 = vpop.f32.mrb[0].mxu0
        %v1242 = vadd.f32 0.0, %v1241
        %v1243 = vpop.f32.mrb[0].mxu0
        %v1244 = vpop.f32.mrb[0].mxu0
        %v1245 = vpop.f32.mrb[0].mxu0
        %1246 = vdwg.mxu0
        %v1247 = vmul.f32 %v1242, %v1199
        %v1248 = vpack.c.bf16 %v1247, %v1247
        %v1250 = vsel %vm831, %v1248, 0
        %v1253 = vsel %vm1050, %v829, 0
        %1255 = vmatprep.subr.bf16.mxu0 0
        %1256 = vmatpush1.bf16.msra.mxu0 %v1253
        %1257 = vmatprep.subr.bf16.mxu0 0
        %1258 = vmatpush1.bf16.msra.mxu0 0
        %1259 = vmatprep.subr.bf16.mxu0 0
        %1260 = vmatpush1.bf16.msra.mxu0 0
        %1261 = vmatprep.subr.bf16.mxu0 0
        %1262 = vmatpush1.bf16.msra.mxu0 0
        %1263 = vmatprep.subr.bf16.mxu0 0
        %1264 = vmatpush1.bf16.msra.mxu0 0
        %1265 = vmatprep.subr.bf16.mxu0 0
        %1266 = vmatpush1.bf16.msra.mxu0 0
        %1267 = vmatprep.subr.bf16.mxu0 0
        %1268 = vmatpush1.bf16.msra.mxu0 0
        %1269 = vmatprep.subr.bf16.mxu0 0
        %1270 = vmatpush1.bf16.msra.mxu0 0
        %1271 = vmatprep.subr.bf16.mxu0 0
        %1272 = vmatpush1.bf16.msra.mxu0 0
        %1273 = vmatprep.subr.bf16.mxu0 0
        %1274 = vmatpush1.bf16.msra.mxu0 0
        %1275 = vmatprep.subr.bf16.mxu0 0
        %1276 = vmatpush1.bf16.msra.mxu0 0
        %1277 = vmatprep.subr.bf16.mxu0 0
        %1278 = vmatpush1.bf16.msra.mxu0 0
        %1279 = vmatprep.subr.bf16.mxu0 0
        %1280 = vmatpush1.bf16.msra.mxu0 0
        %1281 = vmatprep.subr.bf16.mxu0 0
        %1282 = vmatpush1.bf16.msra.mxu0 0
        %1283 = vmatprep.subr.bf16.mxu0 0
        %1284 = vmatpush1.bf16.msra.mxu0 0
        %1285 = vmatprep.subr.bf16.mxu0 0
        %1286 = vmatpush1.bf16.msra.mxu0 0
        %1287 = vmatprep.mubr.bf16.mxu0 0
        %1288 = vmatmul.mubr.bf16.gmra.mrb[0].mxu0 %v1250
        %v1289 = vpop.f32.mrb[0].mxu0
        %v1290 = vadd.f32 0.0, %v1289
        %v1291 = vpop.f32.mrb[0].mxu0
        %v1292 = vpop.f32.mrb[0].mxu0
        %v1293 = vpop.f32.mrb[0].mxu0
        %1294 = vdwg.mxu0
        %v1295 = vadd.f32 %v1135, %v1290
        %1296 = vrot.lane.b32.xlu0 %v824, 104
        %v1297 = vpop.permute.xlu0 %1296
        %1298 = vrot.lane.b32.xlu0 %v825, 104
        %v1299 = vpop.permute.xlu0 %1298
        %v1301 = vsel %vm831, %v1297, 0
        %v1304 = vsel %vm831, %v1299, 0
        %1306 = vmatprep.subr.bf16.mxu0 0
        %1307 = vmatpush1.bf16.xpose.msra.mxu0 %v1304
        %1308 = vmatprep.subr.bf16.mxu0 0
        %1309 = vmatpush1.bf16.xpose.msra.mxu0 0
        %1310 = vmatprep.subr.bf16.mxu0 0
        %1311 = vmatpush1.bf16.xpose.msra.mxu0 0
        %1312 = vmatprep.subr.bf16.mxu0 0
        %1313 = vmatpush1.bf16.xpose.msra.mxu0 0
        %1314 = vmatprep.subr.bf16.mxu0 0
        %1315 = vmatpush1.bf16.xpose.msra.mxu0 0
        %1316 = vmatprep.subr.bf16.mxu0 0
        %1317 = vmatpush1.bf16.xpose.msra.mxu0 0
        %1318 = vmatprep.subr.bf16.mxu0 0
        %1319 = vmatpush1.bf16.xpose.msra.mxu0 0
        %1320 = vmatprep.subr.bf16.mxu0 0
        %1321 = vmatpush1.bf16.xpose.msra.mxu0 0
        %1322 = vmatprep.subr.bf16.mxu0 0
        %1323 = vmatpush1.bf16.xpose.msra.mxu0 0
        %1324 = vmatprep.subr.bf16.mxu0 0
        %1325 = vmatpush1.bf16.xpose.msra.mxu0 0
        %1326 = vmatprep.subr.bf16.mxu0 0
        %1327 = vmatpush1.bf16.xpose.msra.mxu0 0
        %1328 = vmatprep.subr.bf16.mxu0 0
        %1329 = vmatpush1.bf16.xpose.msra.mxu0 0
        %1330 = vmatprep.subr.bf16.mxu0 0
        %1331 = vmatpush1.bf16.xpose.msra.mxu0 0
        %1332 = vmatprep.subr.bf16.mxu0 0
        %1333 = vmatpush1.bf16.xpose.msra.mxu0 0
        %1334 = vmatprep.subr.bf16.mxu0 0
        %1335 = vmatpush1.bf16.xpose.msra.mxu0 0
        %1336 = vmatprep.subr.bf16.mxu0 0
        %1337 = vmatpush1.bf16.xpose.msra.mxu0 0
        %1338 = vmatprep.mubr.bf16.mxu0 0
        %1339 = vmatmul.mubr.bf16.gmra.mrb[0].mxu0 %v1301
        %v1340 = vpop.f32.mrb[0].mxu0
        %v1341 = vadd.f32 0.0, %v1340
        %v1342 = vpop.f32.mrb[0].mxu0
        %v1343 = vpop.f32.mrb[0].mxu0
        %v1344 = vpop.f32.mrb[0].mxu0
        %1345 = vdwg.mxu0
        %v1346 = vsel %vm878, %v1341, -inf
        %1347 = vmax.xlane.f32.xlu0 %v1346
        %v1348 = vpop.xlane.xlu0 %1347
        %v1349 = vsub.f32 %v1341, %v1348
        %v1350 = vmul.f32 %v1349, 1.442695
        %v1351 = vpow.pop %v1350
        %v1352 = vsel %vm878, %v1351, 0.0
        %1353 = vadd.xlane.f32.xlu0 %v1352
        %v1354 = vpop.xlane.xlu0 %1353
        %v1355 = vrcp.pop %v1354
        %v1356 = vpack.c.bf16 %v1351, %v1351
        %1357 = vrot.lane.b32.xlu0 %v826, 104
        %v1358 = vpop.permute.xlu0 %1357
        %v1361 = vsel %vm878, %v1356, 0
        %1363 = vmatprep.subr.bf16.mxu0 0
        %1364 = vmatpush1.bf16.msra.mxu0 %v1358
        %1365 = vmatprep.subr.bf16.mxu0 0
        %1366 = vmatpush1.bf16.msra.mxu0 0
        %1367 = vmatprep.subr.bf16.mxu0 0
        %1368 = vmatpush1.bf16.msra.mxu0 0
        %1369 = vmatprep.subr.bf16.mxu0 0
        %1370 = vmatpush1.bf16.msra.mxu0 0
        %1371 = vmatprep.subr.bf16.mxu0 0
        %1372 = vmatpush1.bf16.msra.mxu0 0
        %1373 = vmatprep.subr.bf16.mxu0 0
        %1374 = vmatpush1.bf16.msra.mxu0 0
        %1375 = vmatprep.subr.bf16.mxu0 0
        %1376 = vmatpush1.bf16.msra.mxu0 0
        %1377 = vmatprep.subr.bf16.mxu0 0
        %1378 = vmatpush1.bf16.msra.mxu0 0
        %1379 = vmatprep.subr.bf16.mxu0 0
        %1380 = vmatpush1.bf16.msra.mxu0 0
        %1381 = vmatprep.subr.bf16.mxu0 0
        %1382 = vmatpush1.bf16.msra.mxu0 0
        %1383 = vmatprep.subr.bf16.mxu0 0
        %1384 = vmatpush1.bf16.msra.mxu0 0
        %1385 = vmatprep.subr.bf16.mxu0 0
        %1386 = vmatpush1.bf16.msra.mxu0 0
        %1387 = vmatprep.subr.bf16.mxu0 0
        %1388 = vmatpush1.bf16.msra.mxu0 0
        %1389 = vmatprep.subr.bf16.mxu0 0
        %1390 = vmatpush1.bf16.msra.mxu0 0
        %1391 = vmatprep.subr.bf16.mxu0 0
        %1392 = vmatpush1.bf16.msra.mxu0 0
        %1393 = vmatprep.subr.bf16.mxu0 0
        %1394 = vmatpush1.bf16.msra.mxu0 0
        %1395 = vmatprep.mubr.bf16.mxu0 0
        %1396 = vmatmul.mubr.bf16.gmra.mrb[0].mxu0 %v1361
        %v1397 = vpop.f32.mrb[0].mxu0
        %v1398 = vadd.f32 0.0, %v1397
        %v1399 = vpop.f32.mrb[0].mxu0
        %v1400 = vpop.f32.mrb[0].mxu0
        %v1401 = vpop.f32.mrb[0].mxu0
        %1402 = vdwg.mxu0
        %v1403 = vmul.f32 %v1398, %v1355
        %v1404 = vpack.c.bf16 %v1403, %v1403
        %v1406 = vsel %vm831, %v1404, 0
        %v1409 = vsel %vm1050, %v830, 0
        %1411 = vmatprep.subr.bf16.mxu0 0
        %1412 = vmatpush1.bf16.msra.mxu0 %v1409
        %1413 = vmatprep.subr.bf16.mxu0 0
        %1414 = vmatpush1.bf16.msra.mxu0 0
        %1415 = vmatprep.subr.bf16.mxu0 0
        %1416 = vmatpush1.bf16.msra.mxu0 0
        %1417 = vmatprep.subr.bf16.mxu0 0
        %1418 = vmatpush1.bf16.msra.mxu0 0
        %1419 = vmatprep.subr.bf16.mxu0 0
        %1420 = vmatpush1.bf16.msra.mxu0 0
        %1421 = vmatprep.subr.bf16.mxu0 0
        %1422 = vmatpush1.bf16.msra.mxu0 0
        %1423 = vmatprep.subr.bf16.mxu0 0
        %1424 = vmatpush1.bf16.msra.mxu0 0
        %1425 = vmatprep.subr.bf16.mxu0 0
        %1426 = vmatpush1.bf16.msra.mxu0 0
        %1427 = vmatprep.subr.bf16.mxu0 0
        %1428 = vmatpush1.bf16.msra.mxu0 0
        %1429 = vmatprep.subr.bf16.mxu0 0
        %1430 = vmatpush1.bf16.msra.mxu0 0
        %1431 = vmatprep.subr.bf16.mxu0 0
        %1432 = vmatpush1.bf16.msra.mxu0 0
        %1433 = vmatprep.subr.bf16.mxu0 0
        %1434 = vmatpush1.bf16.msra.mxu0 0
        %1435 = vmatprep.subr.bf16.mxu0 0
        %1436 = vmatpush1.bf16.msra.mxu0 0
        %1437 = vmatprep.subr.bf16.mxu0 0
        %1438 = vmatpush1.bf16.msra.mxu0 0
        %1439 = vmatprep.subr.bf16.mxu0 0
        %1440 = vmatpush1.bf16.msra.mxu0 0
        %1441 = vmatprep.subr.bf16.mxu0 0
        %1442 = vmatpush1.bf16.msra.mxu0 0
        %1443 = vmatprep.mubr.bf16.mxu0 0
        %1444 = vmatmul.mubr.bf16.gmra.mrb[0].mxu0 %v1406
        %v1445 = vpop.f32.mrb[0].mxu0
        %v1446 = vadd.f32 0.0, %v1445
        %v1447 = vpop.f32.mrb[0].mxu0
        %v1448 = vpop.f32.mrb[0].mxu0
        %v1449 = vpop.f32.mrb[0].mxu0
        %1450 = vdwg.mxu0
        %v1451 = vadd.f32 %v1295, %v1446
        %v1452 = vadd.f32 %v620, %v1451
        %v1453 = vld [vmem:[#allocation17] sm:$0x1]
        %v1455 = vlaneseq
        %v1456 = vshrl.u32 %v1455, 7
        %v1457 = vsub.s32 0, %v1456
        %v1458 = vrot.slane %v1453, %v1457
        %v1460 = vadd.f32 %v1452, %v1458
        %v1461 = vsel %vm648, %v1460, 0.0
        %1462 = vadd.xlane.f32.xlu0 %v1461
        %v1463 = vpop.xlane.xlu0 %1462
        %v1464 = vrcp.pop 32.0
        %v1465 = vmul.f32 %v1463, %v1464
        %v1466 = vsub.f32 %v1460, %v1465
        %v1467 = vmul.f32 %v1466, %v1466
        %v1468 = vsel %vm648, %v1467, 0.0
        %1469 = vadd.xlane.f32.xlu0 %v1468
        %v1470 = vpop.xlane.xlu0 %1469
        %v1471 = vmul.f32 %v1470, %v1464
        %v1472 = vadd.f32 %v1471, 1e-05
        %v1473 = vrsqrt.pop %v1472
        %v1474 = vmul.f32 %v1466, %v1473
        %v1475 = vld [vmem:[#allocation19] sm:$0x1]
        %v1477 = vlaneseq
        %v1478 = vshrl.u32 %v1477, 7
        %v1479 = vsub.s32 0, %v1478
        %v1480 = vrot.slane %v1475, %v1479
        %v1482 = vmul.f32 %v1474, %v1480
        %v1483 = vld [vmem:[#allocation20] sm:$0x1]
        %v1485 = vlaneseq
        %v1486 = vshrl.u32 %v1485, 7
        %v1487 = vsub.s32 0, %v1486
        %v1488 = vrot.slane %v1483, %v1487
        %v1490 = vadd.f32 %v1482, %v1488
        %1491 = vst.msk [vmem:[%s618] sm:$0xff] %vm648, %v1490
        %s1492 = sand.u32 %s323, 1
        %s1493 = scalar_lea.sflag [#allocation4], %s1492
        %s1494 = sand.u32 %s323, 1
        %s1495 = smul.addr %s1494, 8
        %s1496 = scalar_lea.vmem [#allocation22], %s1495
        // Predicated region
        $region117: #{transformer_decoder_forward.7} parent=67 // pred_check
          %p1497 = pneg %p333
        $region118: #{transformer_decoder_forward.7} parent=67 // pred_check_branch
          %1499 = sbr.rel (%p1497) target = $region120
        $region119: #{transformer_decoder_forward.7} parent=67 // pred_region
          %s1501 = ssub.s32 128, 128
          %1502 = vsyncadd %s1493, %s1501
          %s1503 = sadd.s32 %s42, %s41
          %s1504 = smul.addr %s1503, 128
          %s1505 = scalar_lea.hbm %s12, %s1504
          %s1507 = sshll.u32 %s1496, 4
          %s1508 = int_to_ptr.vmem [resolvable:$true] %s1507
          %1510 = dma.vmem_to_hbm [thread:$0]  %s1508, 128, %s1505, %s1493
        $region120: #{transformer_decoder_forward.7} parent=67 // pred_fallthru
          _
      $region68: #{transformer_decoder_forward.7} parent=5 // pred_fallthru
        _
      %p1511 = scmp.le.s32.totalorder 2, %s32
      // Predicated region
      $region121: #{transformer_decoder_forward.7} parent=5 // pred_check
        %p1512 = pneg %p1511
      $region122: #{transformer_decoder_forward.7} parent=5 // pred_check_branch
        %1514 = sbr.rel (%p1512) target = $region124
      $region123: #{transformer_decoder_forward.7} parent=5 // pred_region
        %s1515 = ssub.s32 %s32, 2
        // Predicated region
        $region125: #{transformer_decoder_forward.7} parent=123 // pred_check
          %p1516 = pneg %p339
        $region126: #{transformer_decoder_forward.7} parent=123 // pred_check_branch
          %1518 = sbr.rel (%p1516) target = $region128
        $region127: #{transformer_decoder_forward.7} parent=123 // pred_region
          %s1519 = sand.u32 %s324, 1
          %s1520 = scalar_lea.sflag [#allocation4], %s1519
          %s1521 = sand.u32 %s324, 1
          %s1522 = smul.addr %s1521, 8
          %s1523 = scalar_lea.vmem [#allocation22], %s1522
          %1524 = dma.done %s1520, 128
        $region128: #{transformer_decoder_forward.7} parent=123 // pred_fallthru
          _
      $region124: #{transformer_decoder_forward.7} parent=5 // pred_fallthru
        _
    $region6: #{transformer_decoder_forward.7} parent=1 // loop_footer
      %s36 = sadd.s32 1, %s32
    $region7: #{transformer_decoder_forward.7} parent=1 // loop_footer_branch
      %31 = sbr.rel target = $region3
    $region8: #{transformer_decoder_forward.7} parent=1 // loop_exit
      _
    %1525 = vsyncpa [#allocation3], 1
    %s1526 = scalar_lea.sflag [#allocation3], 1
    %1527 = vsyncpa %s1526, 1
    %1528 = vsyncpa [#allocation6], 1
    %s1529 = scalar_lea.sflag [#allocation6], 1
    %1530 = vsyncpa %s1529, 1
    %1531 = vsyncpa [#allocation9], 1
    %1532 = vsyncpa [#allocation12], 1
    %1533 = vsyncpa [#allocation15], 1
    %1534 = vsyncpa [#allocation18], 1
    %1535 = vsyncpa [#allocation21], 1
    %1536 = vsyncpa [#allocation4], 1
    %s1537 = scalar_lea.sflag [#allocation4], 1
    %1538 = vsyncpa %s1537, 1

</llo_original>
